<compile_context>
chip_gen: v5e
topology: v5e:2x2
jax: 0.10.0
libtpu: 0.0.40
codegen_flags: <defaults>
</compile_context>

<pallas_src>
import functools
import math

import jax
import jax.numpy as jnp
from jax import lax
from jax.experimental import pallas as pl
from jax.experimental.pallas import tpu as pltpu

_PAD_ID = 2
# Large negative instead of -inf: exp() underflows to exactly 0, matching PyTorch's
# masked_fill(-inf) softmax result while avoiding inf arithmetic edge cases.
_MASK_VALUE = -1e30


def _layernorm(v, gamma, beta, eps=1e-5):
    mu = jnp.mean(v, axis=-1, keepdims=True)
    c = v - mu
    var = jnp.mean(c * c, axis=-1, keepdims=True)
    return c * lax.rsqrt(var + eps) * gamma + beta


def _skew(p_rel, row_shift, seq_len):
    """bias[q, k] = p_rel[q, k - q + S - 1] for p_rel of shape (S, 2S-1).

    Row q must be left-shifted by (S-1-q); implemented as a log2(S)-step barrel shifter
    built only from static lane slices, concats and selects.
    """
    S = seq_len
    if S <= 1:
        return p_rel[:, :S]
    x = p_rel
    for t in range((S - 1).bit_length()):
        bit = 1 << t
        shifted = jnp.concatenate(
            [x[:, bit:], jnp.zeros((S, bit), x.dtype)], axis=1)
        x = jnp.where(((row_shift >> t) & 1) == 1, shifted, x)
    return x[:, :S]


def encoder_stack_kernel(x_ref, mask_ref,
                         ln1g_ref, ln1b_ref, wqkv_ref, bqkv_ref, posT_ref,
                         wo_ref, bo_ref, ln2g_ref, ln2b_ref,
                         w1_ref, b1_ref, w2_ref, b2_ref,
                         lnfg_ref, lnfb_ref,
                         out_ref, ctx_ref, *, num_heads, bblk, seq_len):
    """One grid step = (one batch block, one encoder layer)."""
    layer = pl.program_id(1)
    num_layers = pl.num_programs(1)
    S = seq_len
    _, H = out_ref.shape                 # block is (bblk * S, H)
    dh = H // num_heads

    # First layer for this batch block: seed the resident residual stream.
    @pl.when(layer == 0)
    def _():
        out_ref[...] = x_ref[...]

    x = out_ref[...]                     # (R, H) f32 residual stream, resident over layers

    # ---- pre-LN + fused QKV projection (one bf16 MXU GEMM; query scale pre-folded) ----
    xn = _layernorm(x, ln1g_ref[0], ln1b_ref[0])
    qkv = jnp.dot(xn.astype(jnp.bfloat16), wqkv_ref[0],
                  preferred_element_type=jnp.float32) + bqkv_ref[0]     # (R, 3H) f32

    posT = posT_ref[0]                   # (dh, 2S-1) bf16 relative-position table^T
    row_shift = (S - 1) - lax.broadcasted_iota(jnp.int32, (S, 1), 0)    # hoisted once

    # ---- multi-head self-attention with relative positional bias ----
    for b in range(bblk):
        rs = slice(b * S, (b + 1) * S)
        kmask = mask_ref[b]              # (1, S) additive key mask (0 / -1e30)
        for h in range(num_heads):
            qh = qkv[rs, h * dh:(h + 1) * dh].astype(jnp.bfloat16)      # already scaled
            kh = qkv[rs, H + h * dh:H + (h + 1) * dh].astype(jnp.bfloat16)
            vh = qkv[rs, 2 * H + h * dh:2 * H + (h + 1) * dh].astype(jnp.bfloat16)
            # content scores: qh @ kh^T on the MXU
            scores = lax.dot_general(qh, kh, (((1,), (1,)), ((), ())),
                                     preferred_element_type=jnp.float32)   # (S, S)
            # relative-position bias: single GEMM against the raw table, then skew
            p_rel = jnp.dot(qh, posT, preferred_element_type=jnp.float32)  # (S, 2S-1)
            att = scores + _skew(p_rel, row_shift, S) + kmask
            att = att - jnp.max(att, axis=-1, keepdims=True)
            e = jnp.exp(att)
            p = e * pl.reciprocal(jnp.sum(e, axis=-1, keepdims=True), approx=True)
            # per-head slice store into the context slab (no lane-shuffling concat)
            ctx_ref[rs, h * dh:(h + 1) * dh] = jnp.dot(
                p.astype(jnp.bfloat16), vh,
                preferred_element_type=jnp.float32).astype(jnp.bfloat16)

    attn_out = jnp.dot(ctx_ref[...], wo_ref[0],
                       preferred_element_type=jnp.float32) + bo_ref[0]
    x1 = attn_out + x                    # residual 1

    # ---- pre-LN feed-forward ----
    xn2 = _layernorm(x1, ln2g_ref[0], ln2b_ref[0])
    hid = jnp.maximum(
        jnp.dot(xn2.astype(jnp.bfloat16), w1_ref[0],
                preferred_element_type=jnp.float32) + b1_ref[0], 0.0)
    ff = jnp.dot(hid.astype(jnp.bfloat16), w2_ref[0],
                 preferred_element_type=jnp.float32) + b2_ref[0]
    y = ff + x1                          # residual 2

    @pl.when(layer < num_layers - 1)
    def _():
        out_ref[...] = y

    @pl.when(layer == num_layers - 1)    # fuse the final LayerNorm into the last layer
    def _():
        out_ref[...] = _layernorm(y, lnfg_ref[...], lnfb_ref[...])


def _pick_batch_block(batch, seq_len):
    """Largest divisor of batch with roughly bblk*seq_len >= 256 GEMM rows (capped at 8)."""
    target = max(1, min(8, -(-256 // max(seq_len, 1))))
    best = 1
    for cand in range(1, batch + 1):
        if batch % cand == 0 and cand <= target:
            best = cand
    return best


def _vmem_limit_bytes():
    try:
        cap = int(pltpu.get_tpu_info().vmem_capacity_bytes)
    except Exception:
        cap = 128 * 1024 * 1024
    return int(min(cap * 0.8, 100 * 1024 * 1024))


def transformer_encoder_forward(token_ids, params, *, num_heads):
    """Mirrors TransformerEncoder.forward. token_ids: (B, S) int32. Returns (out, 0)."""
    emb_table = params["embedding"]
    H = emb_table.shape[1]
    B, S = token_ids.shape
    layers = params["layers"]
    L = len(layers)
    dh = H // num_heads
    scale = 1.0 / math.sqrt(dh)

    # ---- plain-JAX glue (gathers / weight packing; everything heavy is in the kernel) ----
    x = jnp.take(emb_table, token_ids, axis=0).astype(jnp.float32) * math.sqrt(float(H))
    x2d = x.reshape(B * S, H)
    key_mask = jnp.where(token_ids == _PAD_ID, _MASK_VALUE, 0.0).astype(jnp.float32)
    key_mask = key_mask[:, None, :]                                   # (B, 1, S)

    def stack(fn):
        return jnp.stack([fn(p) for p in layers], axis=0)

    # bf16 weights (MXU-native, halves weight DMA); f32 biases / LN params.
    wqkv = stack(lambda p: jnp.concatenate(
        [p["wq"].T * scale, p["wk"].T, p["wv"].T], axis=1)).astype(jnp.bfloat16)
    bqkv = stack(lambda p: jnp.concatenate(
        [p["bq"] * scale, p["bk"], p["bv"]])[None, :])
    posT = stack(lambda p: p["pos_emb"].T).astype(jnp.bfloat16)       # (L, dh, 2S-1)
    wo = stack(lambda p: p["wo"].T).astype(jnp.bfloat16)
    bo = stack(lambda p: p["bo"][None, :])
    ln1_g = stack(lambda p: p["ln1_g"][None, :])
    ln1_b = stack(lambda p: p["ln1_b"][None, :])
    ln2_g = stack(lambda p: p["ln2_g"][None, :])
    ln2_b = stack(lambda p: p["ln2_b"][None, :])
    w1 = stack(lambda p: p["w1"].T).astype(jnp.bfloat16)              # (L, H, FF)
    b1 = stack(lambda p: p["b1"][None, :])
    w2 = stack(lambda p: p["w2"].T).astype(jnp.bfloat16)              # (L, FF, H)
    b2 = stack(lambda p: p["b2"][None, :])
    lnf_g = params["lnf_g"][None, :]                                  # (1, H)
    lnf_b = params["lnf_b"][None, :]
    FF = w1.shape[-1]
    W = 2 * S - 1

    bblk = _pick_batch_block(B, S)
    rblk = bblk * S

    bmap2 = lambda bb, l: (bb, 0)        # per-batch-block residual stream (resident over l)
    bmap3 = lambda bb, l: (bb, 0, 0)
    lmap3 = lambda bb, l: (l, 0, 0)      # per-layer weights, streamed by the pipeline
    cmap2 = lambda bb, l: (0, 0)         # shared final-LN params

    in_specs = [
        pl.BlockSpec((rblk, H), bmap2),          # embeddings, flattened to GEMM rows
        pl.BlockSpec((bblk, 1, S), bmap3),       # additive key padding mask
        pl.BlockSpec((1, 1, H), lmap3),          # ln1 gamma
        pl.BlockSpec((1, 1, H), lmap3),          # ln1 beta
        pl.BlockSpec((1, H, 3 * H), lmap3),      # fused Wqkv^T (query-scaled, bf16)
        pl.BlockSpec((1, 1, 3 * H), lmap3),      # fused bqkv
        pl.BlockSpec((1, dh, W), lmap3),         # relative-position table^T (bf16)
        pl.BlockSpec((1, H, H), lmap3),          # Wo^T (bf16)
        pl.BlockSpec((1, 1, H), lmap3),          # bo
        pl.BlockSpec((1, 1, H), lmap3),          # ln2 gamma
        pl.BlockSpec((1, 1, H), lmap3),          # ln2 beta
        pl.BlockSpec((1, H, FF), lmap3),         # W1^T (bf16)
        pl.BlockSpec((1, 1, FF), lmap3),         # b1
        pl.BlockSpec((1, FF, H), lmap3),         # W2^T (bf16)
        pl.BlockSpec((1, 1, H), lmap3),          # b2
        pl.BlockSpec((1, H), cmap2),             # final LN gamma
        pl.BlockSpec((1, H), cmap2),             # final LN beta
    ]
    out_spec = pl.BlockSpec((rblk, H), bmap2)

    out2d = pl.pallas_call(
        functools.partial(encoder_stack_kernel, num_heads=num_heads,
                          bblk=bblk, seq_len=S),
        out_shape=jax.ShapeDtypeStruct((B * S, H), jnp.float32),
        grid=(B // bblk, L),
        in_specs=in_specs,
        out_specs=out_spec,
        scratch_shapes=[pltpu.VMEM((rblk, H), jnp.bfloat16)],
        compiler_params=pltpu.CompilerParams(
            dimension_semantics=("parallel", "arbitrary"),
            vmem_limit_bytes=_vmem_limit_bytes(),
        ),
    )(x2d, key_mask, ln1_g, ln1_b, wqkv, bqkv, posT, wo, bo,
      ln2_g, ln2_b, w1, b1, w2, b2, lnf_g, lnf_b)

    return out2d.reshape(B, S, H), 0


# ----------------------------- pure-JAX f32 reference -----------------------------------
def _reference(token_ids, params, *, num_heads):
    emb = params["embedding"]
    H = emb.shape[1]
    B, S = token_ids.shape
    dh = H // num_heads
    x = jnp.take(emb, token_ids, axis=0).astype(jnp.float32) * math.sqrt(float(H))
    mask = jnp.where(token_ids == _PAD_ID, _MASK_VALUE, 0.0)[:, None, None, :]
    pos = jnp.arange(S)
    rel_idx = jnp.clip(pos[None, :] - pos[:, None], -(S - 1), S - 1) + (S - 1)

    def ln(v, g, b):
        mu = jnp.mean(v, -1, keepdims=True)
        var = jnp.mean((v - mu) ** 2, -1, keepdims=True)
        return (v - mu) / jnp.sqrt(var + 1e-5) * g + b

    for p in params["layers"]:
        xn = ln(x, p["ln1_g"], p["ln1_b"])
        q = xn @ p["wq"].T + p["bq"]
        k = xn @ p["wk"].T + p["bk"]
        v = xn @ p["wv"].T + p["bv"]
        split = lambda t: t.reshape(B, S, num_heads, dh).transpose(0, 2, 1, 3)
        qh, kh, vh = split(q), split(k), split(v)
        qh = qh / math.sqrt(dh)
        att = jnp.einsum('bhid,bhjd->bhij', qh, kh)
        rel = p["pos_emb"][rel_idx]
        att = att + jnp.einsum('bhqd,qkd->bhqk', qh, rel)
        att = att + mask
        att = jax.nn.softmax(att, axis=-1)
        ctx = jnp.einsum('bhqk,bhkd->bhqd', att, vh)
        ctx = ctx.transpose(0, 2, 1, 3).reshape(B, S, H)
        attn_out = ctx @ p["wo"].T + p["bo"]
        x1 = attn_out + x
        xn2 = ln(x1, p["ln2_g"], p["ln2_b"])
        hid = jax.nn.relu(xn2 @ p["w1"].T + p["b1"])
        x = (hid @ p["w2"].T + p["b2"]) + x1
    return ln(x, params["lnf_g"], params["lnf_b"])


# ----------------------------- parameter construction -----------------------------------
def make_params(key, vocab_size, hidden_size, heads, num_layers, src_seq_len,
                linear_hidden_ratio=4):
    dh = hidden_size // heads
    ff = linear_hidden_ratio * hidden_size
    rel_num = 2 * (src_seq_len - 1) + 1

    def xavier(k, shape):
        fan_out, fan_in = shape
        bound = math.sqrt(6.0 / (fan_in + fan_out))
        return jax.random.uniform(k, shape, jnp.float32, -bound, bound)

    def lin_bias(k, fan_in, n):
        bound = 1.0 / math.sqrt(fan_in)
        return jax.random.uniform(k, (n,), jnp.float32, -bound, bound)

    k_emb, k_layers = jax.random.split(key)
    layer_keys = jax.random.split(k_layers, num_layers)
    layers = []
    for lk in layer_keys:
        ks = jax.random.split(lk, 13)
        layers.append(dict(
            ln1_g=jnp.ones((hidden_size,), jnp.float32),
            ln1_b=jnp.zeros((hidden_size,), jnp.float32),
            wq=xavier(ks[0], (hidden_size, hidden_size)),
            bq=lin_bias(ks[1], hidden_size, hidden_size),
            wk=xavier(ks[2], (hidden_size, hidden_size)),
            bk=lin_bias(ks[3], hidden_size, hidden_size),
            wv=xavier(ks[4], (hidden_size, hidden_size)),
            bv=lin_bias(ks[5], hidden_size, hidden_size),
            wo=xavier(ks[6], (hidden_size, hidden_size)),
            bo=lin_bias(ks[7], hidden_size, hidden_size),
            pos_emb=xavier(ks[8], (rel_num, dh)),
            ln2_g=jnp.ones((hidden_size,), jnp.float32),
            ln2_b=jnp.zeros((hidden_size,), jnp.float32),
            w1=xavier(ks[9], (ff, hidden_size)),
            b1=lin_bias(ks[10], hidden_size, ff),
            w2=xavier(ks[11], (hidden_size, ff)),
            b2=lin_bias(ks[12], ff, hidden_size),
        ))
    return dict(
        embedding=xavier(k_emb, (vocab_size, hidden_size)),
        layers=layers,
        lnf_g=jnp.ones((hidden_size,), jnp.float32),
        lnf_b=jnp.zeros((hidden_size,), jnp.float32),
    )


if __name__ == "__main__":
    VOCAB, HIDDEN, HEADS, SEQ, LAYERS = 16, 32, 8, 8, 2
    B = 2

    key = jax.random.PRNGKey(0)
    k_tok, k_par = jax.random.split(key)
    token_ids = jax.random.randint(k_tok, (B, SEQ), 0, VOCAB, dtype=jnp.int32)
    token_ids = token_ids.at[:, 0].set(1)          # guarantee a non-pad token
    token_ids = token_ids.at[:, -1].set(_PAD_ID)   # guarantee the padding-mask path runs

    params = make_params(k_par, VOCAB, HIDDEN, HEADS, LAYERS, SEQ)

    fwd = jax.jit(functools.partial(transformer_encoder_forward, num_heads=HEADS))
    out, aux = fwd(token_ids, params)
    jax.block_until_ready(out)

    assert out.shape == (B, SEQ, HIDDEN)
    assert int(aux) == 0

    ref = _reference(token_ids, params, num_heads=HEADS)
    # bf16 matmul operands (f32 accumulate / softmax / LayerNorm) -> relaxed tolerance.
    assert jnp.allclose(out, ref, atol=5e-2, rtol=5e-2), \
        float(jnp.max(jnp.abs(out - ref)))

    print("KERNEL_OK")
</pallas_src>

<mosaic_0001>
module attributes {stable_mosaic.version = 11 : i64} {
  func.func @encoder_stack_kernel(%arg0: i32, %arg1: i32, %arg2: memref<16x32xf32, #tpu.memory_space<vmem>>, %arg3: memref<2x1x8xf32, #tpu.memory_space<vmem>>, %arg4: memref<1x1x32xf32, #tpu.memory_space<vmem>>, %arg5: memref<1x1x32xf32, #tpu.memory_space<vmem>>, %arg6: memref<1x32x96xbf16, #tpu.memory_space<vmem>>, %arg7: memref<1x1x96xf32, #tpu.memory_space<vmem>>, %arg8: memref<1x4x15xbf16, #tpu.memory_space<vmem>>, %arg9: memref<1x32x32xbf16, #tpu.memory_space<vmem>>, %arg10: memref<1x1x32xf32, #tpu.memory_space<vmem>>, %arg11: memref<1x1x32xf32, #tpu.memory_space<vmem>>, %arg12: memref<1x1x32xf32, #tpu.memory_space<vmem>>, %arg13: memref<1x32x128xbf16, #tpu.memory_space<vmem>>, %arg14: memref<1x1x128xf32, #tpu.memory_space<vmem>>, %arg15: memref<1x128x32xbf16, #tpu.memory_space<vmem>>, %arg16: memref<1x1x32xf32, #tpu.memory_space<vmem>>, %arg17: memref<1x32xf32, #tpu.memory_space<vmem>>, %arg18: memref<1x32xf32, #tpu.memory_space<vmem>>, %arg19: memref<16x32xf32, #tpu.memory_space<vmem>>, %arg20: memref<16x32xbf16, #tpu.memory_space<vmem>>) attributes {dimension_semantics = [#tpu.dimension_semantics<parallel>, #tpu.dimension_semantics<arbitrary>], iteration_bounds = array<i64: 1, 2>, scalar_prefetch = 0 : i64, scratch_operands = 1 : i64, tpu.core_type = #tpu.core_type<tc>, window_params = [{transform_indices = @transform_0, window_bounds = array<i64: 16, 32>}, {transform_indices = @transform_1, window_bounds = array<i64: 2, 1, 8>}, {transform_indices = @transform_2, window_bounds = array<i64: 1, 1, 32>}, {transform_indices = @transform_3, window_bounds = array<i64: 1, 1, 32>}, {transform_indices = @transform_4, window_bounds = array<i64: 1, 32, 96>}, {transform_indices = @transform_5, window_bounds = array<i64: 1, 1, 96>}, {transform_indices = @transform_6, window_bounds = array<i64: 1, 4, 15>}, {transform_indices = @transform_7, window_bounds = array<i64: 1, 32, 32>}, {transform_indices = @transform_8, window_bounds = array<i64: 1, 1, 32>}, {transform_indices = @transform_9, window_bounds = array<i64: 1, 1, 32>}, {transform_indices = @transform_10, window_bounds = array<i64: 1, 1, 32>}, {transform_indices = @transform_11, window_bounds = array<i64: 1, 32, 128>}, {transform_indices = @transform_12, window_bounds = array<i64: 1, 1, 128>}, {transform_indices = @transform_13, window_bounds = array<i64: 1, 128, 32>}, {transform_indices = @transform_14, window_bounds = array<i64: 1, 1, 32>}, {pipeline_mode = #tpu.pipeline_mode<synchronous>, transform_indices = @transform_15, window_bounds = array<i64: 1, 32>}, {pipeline_mode = #tpu.pipeline_mode<synchronous>, transform_indices = @transform_16, window_bounds = array<i64: 1, 32>}, {transform_indices = @transform_17, window_bounds = array<i64: 16, 32>}]} {
    %c0_i32 = arith.constant 0 : i32
    %0 = arith.cmpi eq, %arg1, %c0_i32 : i32
    %1 = arith.extui %0 : i1 to i32
    %c0_i32_0 = arith.constant 0 : i32
    %2 = arith.cmpi ne, %1, %c0_i32_0 : i32
    scf.if %2 {
      %c0_361 = arith.constant 0 : index
      %c0_362 = arith.constant 0 : index
      %1095 = vector.load %arg2[%c0_361, %c0_362] : memref<16x32xf32, #tpu.memory_space<vmem>>, vector<16x32xf32>
      %c0_363 = arith.constant 0 : index
      %c0_364 = arith.constant 0 : index
      %1096 = vector.load %arg19[%c0_363, %c0_364] : memref<16x32xf32, #tpu.memory_space<vmem>>, vector<16x32xf32>
      tpu.vector_store %arg19[%c0_363, %c0_364], %1095 {strides = array<i32>} : memref<16x32xf32, #tpu.memory_space<vmem>>, vector<16x32xf32>,
    } else {
    }
    %c0 = arith.constant 0 : index
    %c0_1 = arith.constant 0 : index
    %3 = vector.load %arg19[%c0, %c0_1] : memref<16x32xf32, #tpu.memory_space<vmem>>, vector<16x32xf32>
    %c0_2 = arith.constant 0 : index
    %c0_3 = arith.constant 0 : index
    %c0_4 = arith.constant 0 : index
    %4 = vector.load %arg4[%c0_2, %c0_3, %c0_4] : memref<1x1x32xf32, #tpu.memory_space<vmem>>, vector<1x1x32xf32>
    %5 = vector.shape_cast %4 : vector<1x1x32xf32> to vector<1x32xf32>
    %c0_5 = arith.constant 0 : index
    %c0_6 = arith.constant 0 : index
    %c0_7 = arith.constant 0 : index
    %6 = vector.load %arg5[%c0_5, %c0_6, %c0_7] : memref<1x1x32xf32, #tpu.memory_space<vmem>>, vector<1x1x32xf32>
    %7 = vector.shape_cast %6 : vector<1x1x32xf32> to vector<1x32xf32>
    %cst = arith.constant dense<0.000000e+00> : vector<16xf32>
    %8 = vector.multi_reduction <add>, %3, %cst [1] : vector<16x32xf32> to vector<16xf32>
    %9 = vector.shape_cast %8 : vector<16xf32> to vector<16x1xf32>
    %cst_8 = arith.constant 3.200000e+01 : f32
    %10 = vector.broadcast %cst_8 : f32 to vector<16x1xf32>
    %11 = arith.divf %9, %10 : vector<16x1xf32>
    %12 = vector.broadcast %11 : vector<16x1xf32> to vector<16x32xf32>
    %13 = arith.subf %3, %12 : vector<16x32xf32>
    %14 = arith.mulf %13, %13 : vector<16x32xf32>
    %cst_9 = arith.constant dense<0.000000e+00> : vector<16xf32>
    %15 = vector.multi_reduction <add>, %14, %cst_9 [1] : vector<16x32xf32> to vector<16xf32>
    %16 = vector.shape_cast %15 : vector<16xf32> to vector<16x1xf32>
    %cst_10 = arith.constant 3.200000e+01 : f32
    %17 = vector.broadcast %cst_10 : f32 to vector<16x1xf32>
    %18 = arith.divf %16, %17 : vector<16x1xf32>
    %cst_11 = arith.constant 9.99999974E-6 : f32
    %19 = vector.broadcast %cst_11 : f32 to vector<16x1xf32>
    %20 = arith.addf %18, %19 : vector<16x1xf32>
    %21 = math.rsqrt %20 : vector<16x1xf32>
    %22 = vector.broadcast %21 : vector<16x1xf32> to vector<16x32xf32>
    %23 = arith.mulf %13, %22 : vector<16x32xf32>
    %24 = vector.broadcast %5 : vector<1x32xf32> to vector<16x32xf32>
    %25 = arith.mulf %23, %24 : vector<16x32xf32>
    %26 = vector.broadcast %7 : vector<1x32xf32> to vector<16x32xf32>
    %27 = arith.addf %25, %26 : vector<16x32xf32>
    %28 = arith.truncf %27 : vector<16x32xf32> to vector<16x32xbf16>
    %c0_12 = arith.constant 0 : index
    %c0_13 = arith.constant 0 : index
    %c0_14 = arith.constant 0 : index
    %29 = vector.load %arg6[%c0_12, %c0_13, %c0_14] : memref<1x32x96xbf16, #tpu.memory_space<vmem>>, vector<1x32x96xbf16>
    %30 = vector.shape_cast %29 : vector<1x32x96xbf16> to vector<32x96xbf16>
    %cst_15 = arith.constant dense<0.000000e+00> : vector<16x96xf32>
    %31 = tpu.matmul %28, %30, %cst_15 {dimension_numbers = #tpu.dot_dimension_numbers<[1], [0], [0], [1], [0, 0, 1, 1], [], []>} : vector<16x32xbf16>, vector<32x96xbf16>, vector<16x96xf32> -> vector<16x96xf32>
    %c0_16 = arith.constant 0 : index
    %c0_17 = arith.constant 0 : index
    %c0_18 = arith.constant 0 : index
    %32 = vector.load %arg7[%c0_16, %c0_17, %c0_18] : memref<1x1x96xf32, #tpu.memory_space<vmem>>, vector<1x1x96xf32>
    %33 = vector.shape_cast %32 : vector<1x1x96xf32> to vector<1x96xf32>
    %34 = vector.broadcast %33 : vector<1x96xf32> to vector<16x96xf32>
    %35 = arith.addf %31, %34 : vector<16x96xf32>
    %c0_19 = arith.constant 0 : index
    %c0_20 = arith.constant 0 : index
    %c0_21 = arith.constant 0 : index
    %36 = vector.load %arg8[%c0_19, %c0_20, %c0_21] : memref<1x4x15xbf16, #tpu.memory_space<vmem>>, vector<1x4x15xbf16>
    %37 = vector.shape_cast %36 : vector<1x4x15xbf16> to vector<4x15xbf16>
    %38 = tpu.iota {dimensions = array<i32: 0>} : vector<8x1xi32>
    %c7_i32 = arith.constant 7 : i32
    %39 = vector.broadcast %c7_i32 : i32 to vector<8x1xi32>
    %40 = arith.subi %39, %38 : vector<8x1xi32>
    %c0_22 = arith.constant 0 : index
    %c0_23 = arith.constant 0 : index
    %c0_24 = arith.constant 0 : index
    %41 = vector.load %arg3[%c0_22, %c0_23, %c0_24] : memref<2x1x8xf32, #tpu.memory_space<vmem>>, vector<1x1x8xf32>
    %42 = vector.shape_cast %41 : vector<1x1x8xf32> to vector<1x8xf32>
    %43 = vector.extract_strided_slice %35 {offsets = [0, 0], sizes = [8, 4], strides = [1, 1]} : vector<16x96xf32> to vector<8x4xf32>
    %44 = arith.truncf %43 : vector<8x4xf32> to vector<8x4xbf16>
    %45 = vector.extract_strided_slice %35 {offsets = [0, 32], sizes = [8, 4], strides = [1, 1]} : vector<16x96xf32> to vector<8x4xf32>
    %46 = arith.truncf %45 : vector<8x4xf32> to vector<8x4xbf16>
    %47 = vector.extract_strided_slice %35 {offsets = [0, 64], sizes = [8, 4], strides = [1, 1]} : vector<16x96xf32> to vector<8x4xf32>
    %48 = arith.truncf %47 : vector<8x4xf32> to vector<8x4xbf16>
    %cst_25 = arith.constant dense<0.000000e+00> : vector<8x8xf32>
    %49 = tpu.matmul %44, %46, %cst_25 {dimension_numbers = #tpu.dot_dimension_numbers<[1], [1], [0], [0], [0, 0, 1, 0], [], []>} : vector<8x4xbf16>, vector<8x4xbf16>, vector<8x8xf32> -> vector<8x8xf32>
    %cst_26 = arith.constant dense<0.000000e+00> : vector<8x15xf32>
    %50 = tpu.matmul %44, %37, %cst_26 {dimension_numbers = #tpu.dot_dimension_numbers<[1], [0], [0], [1], [0, 0, 1, 1], [], []>} : vector<8x4xbf16>, vector<4x15xbf16>, vector<8x15xf32> -> vector<8x15xf32>
    %51 = vector.extract_strided_slice %50 {offsets = [0, 1], sizes = [8, 14], strides = [1, 1]} : vector<8x15xf32> to vector<8x14xf32>
    %cst_27 = arith.constant 0.000000e+00 : f32
    %52 = vector.broadcast %cst_27 : f32 to vector<8x1xf32>
    %53 = tpu.concatenate %51, %52 in 1 : vector<8x14xf32>, vector<8x1xf32> -> vector<8x15xf32>
    %c0_i32_28 = arith.constant 0 : i32
    %54 = vector.broadcast %c0_i32_28 : i32 to vector<8x1xi32>
    %55 = arith.shrsi %40, %54 : vector<8x1xi32>
    %c1_i32 = arith.constant 1 : i32
    %56 = vector.broadcast %c1_i32 : i32 to vector<8x1xi32>
    %57 = arith.andi %55, %56 : vector<8x1xi32>
    %c1_i32_29 = arith.constant 1 : i32
    %58 = vector.broadcast %c1_i32_29 : i32 to vector<8x1xi32>
    %59 = arith.cmpi eq, %57, %58 : vector<8x1xi32>
    %60 = vector.shape_cast %59 : vector<8x1xi1> to vector<8x1xi1>
    %61 = vector.broadcast %60 : vector<8x1xi1> to vector<8x15xi1>
    %62 = arith.select %61, %53, %50 : vector<8x15xi1>, vector<8x15xf32>
    %63 = vector.extract_strided_slice %62 {offsets = [0, 2], sizes = [8, 13], strides = [1, 1]} : vector<8x15xf32> to vector<8x13xf32>
    %cst_30 = arith.constant 0.000000e+00 : f32
    %64 = vector.broadcast %cst_30 : f32 to vector<8x2xf32>
    %65 = tpu.concatenate %63, %64 in 1 : vector<8x13xf32>, vector<8x2xf32> -> vector<8x15xf32>
    %c1_i32_31 = arith.constant 1 : i32
    %66 = vector.broadcast %c1_i32_31 : i32 to vector<8x1xi32>
    %67 = arith.shrsi %40, %66 : vector<8x1xi32>
    %c1_i32_32 = arith.constant 1 : i32
    %68 = vector.broadcast %c1_i32_32 : i32 to vector<8x1xi32>
    %69 = arith.andi %67, %68 : vector<8x1xi32>
    %c1_i32_33 = arith.constant 1 : i32
    %70 = vector.broadcast %c1_i32_33 : i32 to vector<8x1xi32>
    %71 = arith.cmpi eq, %69, %70 : vector<8x1xi32>
    %72 = vector.shape_cast %71 : vector<8x1xi1> to vector<8x1xi1>
    %73 = vector.broadcast %72 : vector<8x1xi1> to vector<8x15xi1>
    %74 = arith.select %73, %65, %62 : vector<8x15xi1>, vector<8x15xf32>
    %75 = vector.extract_strided_slice %74 {offsets = [0, 4], sizes = [8, 11], strides = [1, 1]} : vector<8x15xf32> to vector<8x11xf32>
    %cst_34 = arith.constant 0.000000e+00 : f32
    %76 = vector.broadcast %cst_34 : f32 to vector<8x4xf32>
    %77 = tpu.concatenate %75, %76 in 1 : vector<8x11xf32>, vector<8x4xf32> -> vector<8x15xf32>
    %c2_i32 = arith.constant 2 : i32
    %78 = vector.broadcast %c2_i32 : i32 to vector<8x1xi32>
    %79 = arith.shrsi %40, %78 : vector<8x1xi32>
    %c1_i32_35 = arith.constant 1 : i32
    %80 = vector.broadcast %c1_i32_35 : i32 to vector<8x1xi32>
    %81 = arith.andi %79, %80 : vector<8x1xi32>
    %c1_i32_36 = arith.constant 1 : i32
    %82 = vector.broadcast %c1_i32_36 : i32 to vector<8x1xi32>
    %83 = arith.cmpi eq, %81, %82 : vector<8x1xi32>
    %84 = vector.shape_cast %83 : vector<8x1xi1> to vector<8x1xi1>
    %85 = vector.broadcast %84 : vector<8x1xi1> to vector<8x15xi1>
    %86 = arith.select %85, %77, %74 : vector<8x15xi1>, vector<8x15xf32>
    %87 = vector.extract_strided_slice %86 {offsets = [0, 0], sizes = [8, 8], strides = [1, 1]} : vector<8x15xf32> to vector<8x8xf32>
    %88 = arith.addf %49, %87 : vector<8x8xf32>
    %89 = vector.broadcast %42 : vector<1x8xf32> to vector<8x8xf32>
    %90 = arith.addf %88, %89 : vector<8x8xf32>
    %cst_37 = arith.constant dense<0xFF800000> : vector<8xf32>
    %91 = vector.multi_reduction <maximumf>, %90, %cst_37 [1] : vector<8x8xf32> to vector<8xf32>
    %92 = vector.shape_cast %91 : vector<8xf32> to vector<8x1xf32>
    %93 = vector.broadcast %92 : vector<8x1xf32> to vector<8x8xf32>
    %94 = arith.subf %90, %93 : vector<8x8xf32>
    %95 = math.exp %94 : vector<8x8xf32>
    %cst_38 = arith.constant dense<0.000000e+00> : vector<8xf32>
    %96 = vector.multi_reduction <add>, %95, %cst_38 [1] : vector<8x8xf32> to vector<8xf32>
    %97 = vector.shape_cast %96 : vector<8xf32> to vector<8x1xf32>
    %98 = tpu.reciprocal %97 {approx = true} : vector<8x1xf32> -> vector<8x1xf32>
    %99 = vector.broadcast %98 : vector<8x1xf32> to vector<8x8xf32>
    %100 = arith.mulf %95, %99 : vector<8x8xf32>
    %101 = arith.truncf %100 : vector<8x8xf32> to vector<8x8xbf16>
    %cst_39 = arith.constant dense<0.000000e+00> : vector<8x4xf32>
    %102 = tpu.matmul %101, %48, %cst_39 {dimension_numbers = #tpu.dot_dimension_numbers<[1], [0], [0], [1], [0, 0, 1, 1], [], []>} : vector<8x8xbf16>, vector<8x4xbf16>, vector<8x4xf32> -> vector<8x4xf32>
    %103 = arith.truncf %102 : vector<8x4xf32> to vector<8x4xbf16>
    %c0_40 = arith.constant 0 : index
    %c0_41 = arith.constant 0 : index
    %104 = vector.load %arg20[%c0_40, %c0_41] : memref<16x32xbf16, #tpu.memory_space<vmem>>, vector<8x4xbf16>
    tpu.vector_store %arg20[%c0_40, %c0_41], %103 {strides = array<i32>} : memref<16x32xbf16, #tpu.memory_space<vmem>>, vector<8x4xbf16>,
    %105 = vector.extract_strided_slice %35 {offsets = [0, 4], sizes = [8, 4], strides = [1, 1]} : vector<16x96xf32> to vector<8x4xf32>
    %106 = arith.truncf %105 : vector<8x4xf32> to vector<8x4xbf16>
    %107 = vector.extract_strided_slice %35 {offsets = [0, 36], sizes = [8, 4], strides = [1, 1]} : vector<16x96xf32> to vector<8x4xf32>
    %108 = arith.truncf %107 : vector<8x4xf32> to vector<8x4xbf16>
    %109 = vector.extract_strided_slice %35 {offsets = [0, 68], sizes = [8, 4], strides = [1, 1]} : vector<16x96xf32> to vector<8x4xf32>
    %110 = arith.truncf %109 : vector<8x4xf32> to vector<8x4xbf16>
    %cst_42 = arith.constant dense<0.000000e+00> : vector<8x8xf32>
    %111 = tpu.matmul %106, %108, %cst_42 {dimension_numbers = #tpu.dot_dimension_numbers<[1], [1], [0], [0], [0, 0, 1, 0], [], []>} : vector<8x4xbf16>, vector<8x4xbf16>, vector<8x8xf32> -> vector<8x8xf32>
    %cst_43 = arith.constant dense<0.000000e+00> : vector<8x15xf32>
    %112 = tpu.matmul %106, %37, %cst_43 {dimension_numbers = #tpu.dot_dimension_numbers<[1], [0], [0], [1], [0, 0, 1, 1], [], []>} : vector<8x4xbf16>, vector<4x15xbf16>, vector<8x15xf32> -> vector<8x15xf32>
    %113 = vector.extract_strided_slice %112 {offsets = [0, 1], sizes = [8, 14], strides = [1, 1]} : vector<8x15xf32> to vector<8x14xf32>
    %cst_44 = arith.constant 0.000000e+00 : f32
    %114 = vector.broadcast %cst_44 : f32 to vector<8x1xf32>
    %115 = tpu.concatenate %113, %114 in 1 : vector<8x14xf32>, vector<8x1xf32> -> vector<8x15xf32>
    %c0_i32_45 = arith.constant 0 : i32
    %116 = vector.broadcast %c0_i32_45 : i32 to vector<8x1xi32>
    %117 = arith.shrsi %40, %116 : vector<8x1xi32>
    %c1_i32_46 = arith.constant 1 : i32
    %118 = vector.broadcast %c1_i32_46 : i32 to vector<8x1xi32>
    %119 = arith.andi %117, %118 : vector<8x1xi32>
    %c1_i32_47 = arith.constant 1 : i32
    %120 = vector.broadcast %c1_i32_47 : i32 to vector<8x1xi32>
    %121 = arith.cmpi eq, %119, %120 : vector<8x1xi32>
    %122 = vector.shape_cast %121 : vector<8x1xi1> to vector<8x1xi1>
    %123 = vector.broadcast %122 : vector<8x1xi1> to vector<8x15xi1>
    %124 = arith.select %123, %115, %112 : vector<8x15xi1>, vector<8x15xf32>
    %125 = vector.extract_strided_slice %124 {offsets = [0, 2], sizes = [8, 13], strides = [1, 1]} : vector<8x15xf32> to vector<8x13xf32>
    %cst_48 = arith.constant 0.000000e+00 : f32
    %126 = vector.broadcast %cst_48 : f32 to vector<8x2xf32>
    %127 = tpu.concatenate %125, %126 in 1 : vector<8x13xf32>, vector<8x2xf32> -> vector<8x15xf32>
    %c1_i32_49 = arith.constant 1 : i32
    %128 = vector.broadcast %c1_i32_49 : i32 to vector<8x1xi32>
    %129 = arith.shrsi %40, %128 : vector<8x1xi32>
    %c1_i32_50 = arith.constant 1 : i32
    %130 = vector.broadcast %c1_i32_50 : i32 to vector<8x1xi32>
    %131 = arith.andi %129, %130 : vector<8x1xi32>
    %c1_i32_51 = arith.constant 1 : i32
    %132 = vector.broadcast %c1_i32_51 : i32 to vector<8x1xi32>
    %133 = arith.cmpi eq, %131, %132 : vector<8x1xi32>
    %134 = vector.shape_cast %133 : vector<8x1xi1> to vector<8x1xi1>
    %135 = vector.broadcast %134 : vector<8x1xi1> to vector<8x15xi1>
    %136 = arith.select %135, %127, %124 : vector<8x15xi1>, vector<8x15xf32>
    %137 = vector.extract_strided_slice %136 {offsets = [0, 4], sizes = [8, 11], strides = [1, 1]} : vector<8x15xf32> to vector<8x11xf32>
    %cst_52 = arith.constant 0.000000e+00 : f32
    %138 = vector.broadcast %cst_52 : f32 to vector<8x4xf32>
    %139 = tpu.concatenate %137, %138 in 1 : vector<8x11xf32>, vector<8x4xf32> -> vector<8x15xf32>
    %c2_i32_53 = arith.constant 2 : i32
    %140 = vector.broadcast %c2_i32_53 : i32 to vector<8x1xi32>
    %141 = arith.shrsi %40, %140 : vector<8x1xi32>
    %c1_i32_54 = arith.constant 1 : i32
    %142 = vector.broadcast %c1_i32_54 : i32 to vector<8x1xi32>
    %143 = arith.andi %141, %142 : vector<8x1xi32>
    %c1_i32_55 = arith.constant 1 : i32
    %144 = vector.broadcast %c1_i32_55 : i32 to vector<8x1xi32>
    %145 = arith.cmpi eq, %143, %144 : vector<8x1xi32>
    %146 = vector.shape_cast %145 : vector<8x1xi1> to vector<8x1xi1>
    %147 = vector.broadcast %146 : vector<8x1xi1> to vector<8x15xi1>
    %148 = arith.select %147, %139, %136 : vector<8x15xi1>, vector<8x15xf32>
    %149 = vector.extract_strided_slice %148 {offsets = [0, 0], sizes = [8, 8], strides = [1, 1]} : vector<8x15xf32> to vector<8x8xf32>
    %150 = arith.addf %111, %149 : vector<8x8xf32>
    %151 = vector.broadcast %42 : vector<1x8xf32> to vector<8x8xf32>
    %152 = arith.addf %150, %151 : vector<8x8xf32>
    %cst_56 = arith.constant dense<0xFF800000> : vector<8xf32>
    %153 = vector.multi_reduction <maximumf>, %152, %cst_56 [1] : vector<8x8xf32> to vector<8xf32>
    %154 = vector.shape_cast %153 : vector<8xf32> to vector<8x1xf32>
    %155 = vector.broadcast %154 : vector<8x1xf32> to vector<8x8xf32>
    %156 = arith.subf %152, %155 : vector<8x8xf32>
    %157 = math.exp %156 : vector<8x8xf32>
    %cst_57 = arith.constant dense<0.000000e+00> : vector<8xf32>
    %158 = vector.multi_reduction <add>, %157, %cst_57 [1] : vector<8x8xf32> to vector<8xf32>
    %159 = vector.shape_cast %158 : vector<8xf32> to vector<8x1xf32>
    %160 = tpu.reciprocal %159 {approx = true} : vector<8x1xf32> -> vector<8x1xf32>
    %161 = vector.broadcast %160 : vector<8x1xf32> to vector<8x8xf32>
    %162 = arith.mulf %157, %161 : vector<8x8xf32>
    %163 = arith.truncf %162 : vector<8x8xf32> to vector<8x8xbf16>
    %cst_58 = arith.constant dense<0.000000e+00> : vector<8x4xf32>
    %164 = tpu.matmul %163, %110, %cst_58 {dimension_numbers = #tpu.dot_dimension_numbers<[1], [0], [0], [1], [0, 0, 1, 1], [], []>} : vector<8x8xbf16>, vector<8x4xbf16>, vector<8x4xf32> -> vector<8x4xf32>
    %165 = arith.truncf %164 : vector<8x4xf32> to vector<8x4xbf16>
    %c0_59 = arith.constant 0 : index
    %c4 = arith.constant 4 : index
    %166 = vector.load %arg20[%c0_59, %c4] : memref<16x32xbf16, #tpu.memory_space<vmem>>, vector<8x4xbf16>
    tpu.vector_store %arg20[%c0_59, %c4], %165 {strides = array<i32>} : memref<16x32xbf16, #tpu.memory_space<vmem>>, vector<8x4xbf16>,
    %167 = vector.extract_strided_slice %35 {offsets = [0, 8], sizes = [8, 4], strides = [1, 1]} : vector<16x96xf32> to vector<8x4xf32>
    %168 = arith.truncf %167 : vector<8x4xf32> to vector<8x4xbf16>
    %169 = vector.extract_strided_slice %35 {offsets = [0, 40], sizes = [8, 4], strides = [1, 1]} : vector<16x96xf32> to vector<8x4xf32>
    %170 = arith.truncf %169 : vector<8x4xf32> to vector<8x4xbf16>
    %171 = vector.extract_strided_slice %35 {offsets = [0, 72], sizes = [8, 4], strides = [1, 1]} : vector<16x96xf32> to vector<8x4xf32>
    %172 = arith.truncf %171 : vector<8x4xf32> to vector<8x4xbf16>
    %cst_60 = arith.constant dense<0.000000e+00> : vector<8x8xf32>
    %173 = tpu.matmul %168, %170, %cst_60 {dimension_numbers = #tpu.dot_dimension_numbers<[1], [1], [0], [0], [0, 0, 1, 0], [], []>} : vector<8x4xbf16>, vector<8x4xbf16>, vector<8x8xf32> -> vector<8x8xf32>
    %cst_61 = arith.constant dense<0.000000e+00> : vector<8x15xf32>
    %174 = tpu.matmul %168, %37, %cst_61 {dimension_numbers = #tpu.dot_dimension_numbers<[1], [0], [0], [1], [0, 0, 1, 1], [], []>} : vector<8x4xbf16>, vector<4x15xbf16>, vector<8x15xf32> -> vector<8x15xf32>
    %175 = vector.extract_strided_slice %174 {offsets = [0, 1], sizes = [8, 14], strides = [1, 1]} : vector<8x15xf32> to vector<8x14xf32>
    %cst_62 = arith.constant 0.000000e+00 : f32
    %176 = vector.broadcast %cst_62 : f32 to vector<8x1xf32>
    %177 = tpu.concatenate %175, %176 in 1 : vector<8x14xf32>, vector<8x1xf32> -> vector<8x15xf32>
    %c0_i32_63 = arith.constant 0 : i32
    %178 = vector.broadcast %c0_i32_63 : i32 to vector<8x1xi32>
    %179 = arith.shrsi %40, %178 : vector<8x1xi32>
    %c1_i32_64 = arith.constant 1 : i32
    %180 = vector.broadcast %c1_i32_64 : i32 to vector<8x1xi32>
    %181 = arith.andi %179, %180 : vector<8x1xi32>
    %c1_i32_65 = arith.constant 1 : i32
    %182 = vector.broadcast %c1_i32_65 : i32 to vector<8x1xi32>
    %183 = arith.cmpi eq, %181, %182 : vector<8x1xi32>
    %184 = vector.shape_cast %183 : vector<8x1xi1> to vector<8x1xi1>
    %185 = vector.broadcast %184 : vector<8x1xi1> to vector<8x15xi1>
    %186 = arith.select %185, %177, %174 : vector<8x15xi1>, vector<8x15xf32>
    %187 = vector.extract_strided_slice %186 {offsets = [0, 2], sizes = [8, 13], strides = [1, 1]} : vector<8x15xf32> to vector<8x13xf32>
    %cst_66 = arith.constant 0.000000e+00 : f32
    %188 = vector.broadcast %cst_66 : f32 to vector<8x2xf32>
    %189 = tpu.concatenate %187, %188 in 1 : vector<8x13xf32>, vector<8x2xf32> -> vector<8x15xf32>
    %c1_i32_67 = arith.constant 1 : i32
    %190 = vector.broadcast %c1_i32_67 : i32 to vector<8x1xi32>
    %191 = arith.shrsi %40, %190 : vector<8x1xi32>
    %c1_i32_68 = arith.constant 1 : i32
    %192 = vector.broadcast %c1_i32_68 : i32 to vector<8x1xi32>
    %193 = arith.andi %191, %192 : vector<8x1xi32>
    %c1_i32_69 = arith.constant 1 : i32
    %194 = vector.broadcast %c1_i32_69 : i32 to vector<8x1xi32>
    %195 = arith.cmpi eq, %193, %194 : vector<8x1xi32>
    %196 = vector.shape_cast %195 : vector<8x1xi1> to vector<8x1xi1>
    %197 = vector.broadcast %196 : vector<8x1xi1> to vector<8x15xi1>
    %198 = arith.select %197, %189, %186 : vector<8x15xi1>, vector<8x15xf32>
    %199 = vector.extract_strided_slice %198 {offsets = [0, 4], sizes = [8, 11], strides = [1, 1]} : vector<8x15xf32> to vector<8x11xf32>
    %cst_70 = arith.constant 0.000000e+00 : f32
    %200 = vector.broadcast %cst_70 : f32 to vector<8x4xf32>
    %201 = tpu.concatenate %199, %200 in 1 : vector<8x11xf32>, vector<8x4xf32> -> vector<8x15xf32>
    %c2_i32_71 = arith.constant 2 : i32
    %202 = vector.broadcast %c2_i32_71 : i32 to vector<8x1xi32>
    %203 = arith.shrsi %40, %202 : vector<8x1xi32>
    %c1_i32_72 = arith.constant 1 : i32
    %204 = vector.broadcast %c1_i32_72 : i32 to vector<8x1xi32>
    %205 = arith.andi %203, %204 : vector<8x1xi32>
    %c1_i32_73 = arith.constant 1 : i32
    %206 = vector.broadcast %c1_i32_73 : i32 to vector<8x1xi32>
    %207 = arith.cmpi eq, %205, %206 : vector<8x1xi32>
    %208 = vector.shape_cast %207 : vector<8x1xi1> to vector<8x1xi1>
    %209 = vector.broadcast %208 : vector<8x1xi1> to vector<8x15xi1>
    %210 = arith.select %209, %201, %198 : vector<8x15xi1>, vector<8x15xf32>
    %211 = vector.extract_strided_slice %210 {offsets = [0, 0], sizes = [8, 8], strides = [1, 1]} : vector<8x15xf32> to vector<8x8xf32>
    %212 = arith.addf %173, %211 : vector<8x8xf32>
    %213 = vector.broadcast %42 : vector<1x8xf32> to vector<8x8xf32>
    %214 = arith.addf %212, %213 : vector<8x8xf32>
    %cst_74 = arith.constant dense<0xFF800000> : vector<8xf32>
    %215 = vector.multi_reduction <maximumf>, %214, %cst_74 [1] : vector<8x8xf32> to vector<8xf32>
    %216 = vector.shape_cast %215 : vector<8xf32> to vector<8x1xf32>
    %217 = vector.broadcast %216 : vector<8x1xf32> to vector<8x8xf32>
    %218 = arith.subf %214, %217 : vector<8x8xf32>
    %219 = math.exp %218 : vector<8x8xf32>
    %cst_75 = arith.constant dense<0.000000e+00> : vector<8xf32>
    %220 = vector.multi_reduction <add>, %219, %cst_75 [1] : vector<8x8xf32> to vector<8xf32>
    %221 = vector.shape_cast %220 : vector<8xf32> to vector<8x1xf32>
    %222 = tpu.reciprocal %221 {approx = true} : vector<8x1xf32> -> vector<8x1xf32>
    %223 = vector.broadcast %222 : vector<8x1xf32> to vector<8x8xf32>
    %224 = arith.mulf %219, %223 : vector<8x8xf32>
    %225 = arith.truncf %224 : vector<8x8xf32> to vector<8x8xbf16>
    %cst_76 = arith.constant dense<0.000000e+00> : vector<8x4xf32>
    %226 = tpu.matmul %225, %172, %cst_76 {dimension_numbers = #tpu.dot_dimension_numbers<[1], [0], [0], [1], [0, 0, 1, 1], [], []>} : vector<8x8xbf16>, vector<8x4xbf16>, vector<8x4xf32> -> vector<8x4xf32>
    %227 = arith.truncf %226 : vector<8x4xf32> to vector<8x4xbf16>
    %c0_77 = arith.constant 0 : index
    %c8 = arith.constant 8 : index
    %228 = vector.load %arg20[%c0_77, %c8] : memref<16x32xbf16, #tpu.memory_space<vmem>>, vector<8x4xbf16>
    tpu.vector_store %arg20[%c0_77, %c8], %227 {strides = array<i32>} : memref<16x32xbf16, #tpu.memory_space<vmem>>, vector<8x4xbf16>,
    %229 = vector.extract_strided_slice %35 {offsets = [0, 12], sizes = [8, 4], strides = [1, 1]} : vector<16x96xf32> to vector<8x4xf32>
    %230 = arith.truncf %229 : vector<8x4xf32> to vector<8x4xbf16>
    %231 = vector.extract_strided_slice %35 {offsets = [0, 44], sizes = [8, 4], strides = [1, 1]} : vector<16x96xf32> to vector<8x4xf32>
    %232 = arith.truncf %231 : vector<8x4xf32> to vector<8x4xbf16>
    %233 = vector.extract_strided_slice %35 {offsets = [0, 76], sizes = [8, 4], strides = [1, 1]} : vector<16x96xf32> to vector<8x4xf32>
    %234 = arith.truncf %233 : vector<8x4xf32> to vector<8x4xbf16>
    %cst_78 = arith.constant dense<0.000000e+00> : vector<8x8xf32>
    %235 = tpu.matmul %230, %232, %cst_78 {dimension_numbers = #tpu.dot_dimension_numbers<[1], [1], [0], [0], [0, 0, 1, 0], [], []>} : vector<8x4xbf16>, vector<8x4xbf16>, vector<8x8xf32> -> vector<8x8xf32>
    %cst_79 = arith.constant dense<0.000000e+00> : vector<8x15xf32>
    %236 = tpu.matmul %230, %37, %cst_79 {dimension_numbers = #tpu.dot_dimension_numbers<[1], [0], [0], [1], [0, 0, 1, 1], [], []>} : vector<8x4xbf16>, vector<4x15xbf16>, vector<8x15xf32> -> vector<8x15xf32>
    %237 = vector.extract_strided_slice %236 {offsets = [0, 1], sizes = [8, 14], strides = [1, 1]} : vector<8x15xf32> to vector<8x14xf32>
    %cst_80 = arith.constant 0.000000e+00 : f32
    %238 = vector.broadcast %cst_80 : f32 to vector<8x1xf32>
    %239 = tpu.concatenate %237, %238 in 1 : vector<8x14xf32>, vector<8x1xf32> -> vector<8x15xf32>
    %c0_i32_81 = arith.constant 0 : i32
    %240 = vector.broadcast %c0_i32_81 : i32 to vector<8x1xi32>
    %241 = arith.shrsi %40, %240 : vector<8x1xi32>
    %c1_i32_82 = arith.constant 1 : i32
    %242 = vector.broadcast %c1_i32_82 : i32 to vector<8x1xi32>
    %243 = arith.andi %241, %242 : vector<8x1xi32>
    %c1_i32_83 = arith.constant 1 : i32
    %244 = vector.broadcast %c1_i32_83 : i32 to vector<8x1xi32>
    %245 = arith.cmpi eq, %243, %244 : vector<8x1xi32>
    %246 = vector.shape_cast %245 : vector<8x1xi1> to vector<8x1xi1>
    %247 = vector.broadcast %246 : vector<8x1xi1> to vector<8x15xi1>
    %248 = arith.select %247, %239, %236 : vector<8x15xi1>, vector<8x15xf32>
    %249 = vector.extract_strided_slice %248 {offsets = [0, 2], sizes = [8, 13], strides = [1, 1]} : vector<8x15xf32> to vector<8x13xf32>
    %cst_84 = arith.constant 0.000000e+00 : f32
    %250 = vector.broadcast %cst_84 : f32 to vector<8x2xf32>
    %251 = tpu.concatenate %249, %250 in 1 : vector<8x13xf32>, vector<8x2xf32> -> vector<8x15xf32>
    %c1_i32_85 = arith.constant 1 : i32
    %252 = vector.broadcast %c1_i32_85 : i32 to vector<8x1xi32>
    %253 = arith.shrsi %40, %252 : vector<8x1xi32>
    %c1_i32_86 = arith.constant 1 : i32
    %254 = vector.broadcast %c1_i32_86 : i32 to vector<8x1xi32>
    %255 = arith.andi %253, %254 : vector<8x1xi32>
    %c1_i32_87 = arith.constant 1 : i32
    %256 = vector.broadcast %c1_i32_87 : i32 to vector<8x1xi32>
    %257 = arith.cmpi eq, %255, %256 : vector<8x1xi32>
    %258 = vector.shape_cast %257 : vector<8x1xi1> to vector<8x1xi1>
    %259 = vector.broadcast %258 : vector<8x1xi1> to vector<8x15xi1>
    %260 = arith.select %259, %251, %248 : vector<8x15xi1>, vector<8x15xf32>
    %261 = vector.extract_strided_slice %260 {offsets = [0, 4], sizes = [8, 11], strides = [1, 1]} : vector<8x15xf32> to vector<8x11xf32>
    %cst_88 = arith.constant 0.000000e+00 : f32
    %262 = vector.broadcast %cst_88 : f32 to vector<8x4xf32>
    %263 = tpu.concatenate %261, %262 in 1 : vector<8x11xf32>, vector<8x4xf32> -> vector<8x15xf32>
    %c2_i32_89 = arith.constant 2 : i32
    %264 = vector.broadcast %c2_i32_89 : i32 to vector<8x1xi32>
    %265 = arith.shrsi %40, %264 : vector<8x1xi32>
    %c1_i32_90 = arith.constant 1 : i32
    %266 = vector.broadcast %c1_i32_90 : i32 to vector<8x1xi32>
    %267 = arith.andi %265, %266 : vector<8x1xi32>
    %c1_i32_91 = arith.constant 1 : i32
    %268 = vector.broadcast %c1_i32_91 : i32 to vector<8x1xi32>
    %269 = arith.cmpi eq, %267, %268 : vector<8x1xi32>
    %270 = vector.shape_cast %269 : vector<8x1xi1> to vector<8x1xi1>
    %271 = vector.broadcast %270 : vector<8x1xi1> to vector<8x15xi1>
    %272 = arith.select %271, %263, %260 : vector<8x15xi1>, vector<8x15xf32>
    %273 = vector.extract_strided_slice %272 {offsets = [0, 0], sizes = [8, 8], strides = [1, 1]} : vector<8x15xf32> to vector<8x8xf32>
    %274 = arith.addf %235, %273 : vector<8x8xf32>
    %275 = vector.broadcast %42 : vector<1x8xf32> to vector<8x8xf32>
    %276 = arith.addf %274, %275 : vector<8x8xf32>
    %cst_92 = arith.constant dense<0xFF800000> : vector<8xf32>
    %277 = vector.multi_reduction <maximumf>, %276, %cst_92 [1] : vector<8x8xf32> to vector<8xf32>
    %278 = vector.shape_cast %277 : vector<8xf32> to vector<8x1xf32>
    %279 = vector.broadcast %278 : vector<8x1xf32> to vector<8x8xf32>
    %280 = arith.subf %276, %279 : vector<8x8xf32>
    %281 = math.exp %280 : vector<8x8xf32>
    %cst_93 = arith.constant dense<0.000000e+00> : vector<8xf32>
    %282 = vector.multi_reduction <add>, %281, %cst_93 [1] : vector<8x8xf32> to vector<8xf32>
    %283 = vector.shape_cast %282 : vector<8xf32> to vector<8x1xf32>
    %284 = tpu.reciprocal %283 {approx = true} : vector<8x1xf32> -> vector<8x1xf32>
    %285 = vector.broadcast %284 : vector<8x1xf32> to vector<8x8xf32>
    %286 = arith.mulf %281, %285 : vector<8x8xf32>
    %287 = arith.truncf %286 : vector<8x8xf32> to vector<8x8xbf16>
    %cst_94 = arith.constant dense<0.000000e+00> : vector<8x4xf32>
    %288 = tpu.matmul %287, %234, %cst_94 {dimension_numbers = #tpu.dot_dimension_numbers<[1], [0], [0], [1], [0, 0, 1, 1], [], []>} : vector<8x8xbf16>, vector<8x4xbf16>, vector<8x4xf32> -> vector<8x4xf32>
    %289 = arith.truncf %288 : vector<8x4xf32> to vector<8x4xbf16>
    %c0_95 = arith.constant 0 : index
    %c12 = arith.constant 12 : index
    %290 = vector.load %arg20[%c0_95, %c12] : memref<16x32xbf16, #tpu.memory_space<vmem>>, vector<8x4xbf16>
    tpu.vector_store %arg20[%c0_95, %c12], %289 {strides = array<i32>} : memref<16x32xbf16, #tpu.memory_space<vmem>>, vector<8x4xbf16>,
    %291 = vector.extract_strided_slice %35 {offsets = [0, 16], sizes = [8, 4], strides = [1, 1]} : vector<16x96xf32> to vector<8x4xf32>
    %292 = arith.truncf %291 : vector<8x4xf32> to vector<8x4xbf16>
    %293 = vector.extract_strided_slice %35 {offsets = [0, 48], sizes = [8, 4], strides = [1, 1]} : vector<16x96xf32> to vector<8x4xf32>
    %294 = arith.truncf %293 : vector<8x4xf32> to vector<8x4xbf16>
    %295 = vector.extract_strided_slice %35 {offsets = [0, 80], sizes = [8, 4], strides = [1, 1]} : vector<16x96xf32> to vector<8x4xf32>
    %296 = arith.truncf %295 : vector<8x4xf32> to vector<8x4xbf16>
    %cst_96 = arith.constant dense<0.000000e+00> : vector<8x8xf32>
    %297 = tpu.matmul %292, %294, %cst_96 {dimension_numbers = #tpu.dot_dimension_numbers<[1], [1], [0], [0], [0, 0, 1, 0], [], []>} : vector<8x4xbf16>, vector<8x4xbf16>, vector<8x8xf32> -> vector<8x8xf32>
    %cst_97 = arith.constant dense<0.000000e+00> : vector<8x15xf32>
    %298 = tpu.matmul %292, %37, %cst_97 {dimension_numbers = #tpu.dot_dimension_numbers<[1], [0], [0], [1], [0, 0, 1, 1], [], []>} : vector<8x4xbf16>, vector<4x15xbf16>, vector<8x15xf32> -> vector<8x15xf32>
    %299 = vector.extract_strided_slice %298 {offsets = [0, 1], sizes = [8, 14], strides = [1, 1]} : vector<8x15xf32> to vector<8x14xf32>
    %cst_98 = arith.constant 0.000000e+00 : f32
    %300 = vector.broadcast %cst_98 : f32 to vector<8x1xf32>
    %301 = tpu.concatenate %299, %300 in 1 : vector<8x14xf32>, vector<8x1xf32> -> vector<8x15xf32>
    %c0_i32_99 = arith.constant 0 : i32
    %302 = vector.broadcast %c0_i32_99 : i32 to vector<8x1xi32>
    %303 = arith.shrsi %40, %302 : vector<8x1xi32>
    %c1_i32_100 = arith.constant 1 : i32
    %304 = vector.broadcast %c1_i32_100 : i32 to vector<8x1xi32>
    %305 = arith.andi %303, %304 : vector<8x1xi32>
    %c1_i32_101 = arith.constant 1 : i32
    %306 = vector.broadcast %c1_i32_101 : i32 to vector<8x1xi32>
    %307 = arith.cmpi eq, %305, %306 : vector<8x1xi32>
    %308 = vector.shape_cast %307 : vector<8x1xi1> to vector<8x1xi1>
    %309 = vector.broadcast %308 : vector<8x1xi1> to vector<8x15xi1>
    %310 = arith.select %309, %301, %298 : vector<8x15xi1>, vector<8x15xf32>
    %311 = vector.extract_strided_slice %310 {offsets = [0, 2], sizes = [8, 13], strides = [1, 1]} : vector<8x15xf32> to vector<8x13xf32>
    %cst_102 = arith.constant 0.000000e+00 : f32
    %312 = vector.broadcast %cst_102 : f32 to vector<8x2xf32>
    %313 = tpu.concatenate %311, %312 in 1 : vector<8x13xf32>, vector<8x2xf32> -> vector<8x15xf32>
    %c1_i32_103 = arith.constant 1 : i32
    %314 = vector.broadcast %c1_i32_103 : i32 to vector<8x1xi32>
    %315 = arith.shrsi %40, %314 : vector<8x1xi32>
    %c1_i32_104 = arith.constant 1 : i32
    %316 = vector.broadcast %c1_i32_104 : i32 to vector<8x1xi32>
    %317 = arith.andi %315, %316 : vector<8x1xi32>
    %c1_i32_105 = arith.constant 1 : i32
    %318 = vector.broadcast %c1_i32_105 : i32 to vector<8x1xi32>
    %319 = arith.cmpi eq, %317, %318 : vector<8x1xi32>
    %320 = vector.shape_cast %319 : vector<8x1xi1> to vector<8x1xi1>
    %321 = vector.broadcast %320 : vector<8x1xi1> to vector<8x15xi1>
    %322 = arith.select %321, %313, %310 : vector<8x15xi1>, vector<8x15xf32>
    %323 = vector.extract_strided_slice %322 {offsets = [0, 4], sizes = [8, 11], strides = [1, 1]} : vector<8x15xf32> to vector<8x11xf32>
    %cst_106 = arith.constant 0.000000e+00 : f32
    %324 = vector.broadcast %cst_106 : f32 to vector<8x4xf32>
    %325 = tpu.concatenate %323, %324 in 1 : vector<8x11xf32>, vector<8x4xf32> -> vector<8x15xf32>
    %c2_i32_107 = arith.constant 2 : i32
    %326 = vector.broadcast %c2_i32_107 : i32 to vector<8x1xi32>
    %327 = arith.shrsi %40, %326 : vector<8x1xi32>
    %c1_i32_108 = arith.constant 1 : i32
    %328 = vector.broadcast %c1_i32_108 : i32 to vector<8x1xi32>
    %329 = arith.andi %327, %328 : vector<8x1xi32>
    %c1_i32_109 = arith.constant 1 : i32
    %330 = vector.broadcast %c1_i32_109 : i32 to vector<8x1xi32>
    %331 = arith.cmpi eq, %329, %330 : vector<8x1xi32>
    %332 = vector.shape_cast %331 : vector<8x1xi1> to vector<8x1xi1>
    %333 = vector.broadcast %332 : vector<8x1xi1> to vector<8x15xi1>
    %334 = arith.select %333, %325, %322 : vector<8x15xi1>, vector<8x15xf32>
    %335 = vector.extract_strided_slice %334 {offsets = [0, 0], sizes = [8, 8], strides = [1, 1]} : vector<8x15xf32> to vector<8x8xf32>
    %336 = arith.addf %297, %335 : vector<8x8xf32>
    %337 = vector.broadcast %42 : vector<1x8xf32> to vector<8x8xf32>
    %338 = arith.addf %336, %337 : vector<8x8xf32>
    %cst_110 = arith.constant dense<0xFF800000> : vector<8xf32>
    %339 = vector.multi_reduction <maximumf>, %338, %cst_110 [1] : vector<8x8xf32> to vector<8xf32>
    %340 = vector.shape_cast %339 : vector<8xf32> to vector<8x1xf32>
    %341 = vector.broadcast %340 : vector<8x1xf32> to vector<8x8xf32>
    %342 = arith.subf %338, %341 : vector<8x8xf32>
    %343 = math.exp %342 : vector<8x8xf32>
    %cst_111 = arith.constant dense<0.000000e+00> : vector<8xf32>
    %344 = vector.multi_reduction <add>, %343, %cst_111 [1] : vector<8x8xf32> to vector<8xf32>
    %345 = vector.shape_cast %344 : vector<8xf32> to vector<8x1xf32>
    %346 = tpu.reciprocal %345 {approx = true} : vector<8x1xf32> -> vector<8x1xf32>
    %347 = vector.broadcast %346 : vector<8x1xf32> to vector<8x8xf32>
    %348 = arith.mulf %343, %347 : vector<8x8xf32>
    %349 = arith.truncf %348 : vector<8x8xf32> to vector<8x8xbf16>
    %cst_112 = arith.constant dense<0.000000e+00> : vector<8x4xf32>
    %350 = tpu.matmul %349, %296, %cst_112 {dimension_numbers = #tpu.dot_dimension_numbers<[1], [0], [0], [1], [0, 0, 1, 1], [], []>} : vector<8x8xbf16>, vector<8x4xbf16>, vector<8x4xf32> -> vector<8x4xf32>
    %351 = arith.truncf %350 : vector<8x4xf32> to vector<8x4xbf16>
    %c0_113 = arith.constant 0 : index
    %c16 = arith.constant 16 : index
    %352 = vector.load %arg20[%c0_113, %c16] : memref<16x32xbf16, #tpu.memory_space<vmem>>, vector<8x4xbf16>
    tpu.vector_store %arg20[%c0_113, %c16], %351 {strides = array<i32>} : memref<16x32xbf16, #tpu.memory_space<vmem>>, vector<8x4xbf16>,
    %353 = vector.extract_strided_slice %35 {offsets = [0, 20], sizes = [8, 4], strides = [1, 1]} : vector<16x96xf32> to vector<8x4xf32>
    %354 = arith.truncf %353 : vector<8x4xf32> to vector<8x4xbf16>
    %355 = vector.extract_strided_slice %35 {offsets = [0, 52], sizes = [8, 4], strides = [1, 1]} : vector<16x96xf32> to vector<8x4xf32>
    %356 = arith.truncf %355 : vector<8x4xf32> to vector<8x4xbf16>
    %357 = vector.extract_strided_slice %35 {offsets = [0, 84], sizes = [8, 4], strides = [1, 1]} : vector<16x96xf32> to vector<8x4xf32>
    %358 = arith.truncf %357 : vector<8x4xf32> to vector<8x4xbf16>
    %cst_114 = arith.constant dense<0.000000e+00> : vector<8x8xf32>
    %359 = tpu.matmul %354, %356, %cst_114 {dimension_numbers = #tpu.dot_dimension_numbers<[1], [1], [0], [0], [0, 0, 1, 0], [], []>} : vector<8x4xbf16>, vector<8x4xbf16>, vector<8x8xf32> -> vector<8x8xf32>
    %cst_115 = arith.constant dense<0.000000e+00> : vector<8x15xf32>
    %360 = tpu.matmul %354, %37, %cst_115 {dimension_numbers = #tpu.dot_dimension_numbers<[1], [0], [0], [1], [0, 0, 1, 1], [], []>} : vector<8x4xbf16>, vector<4x15xbf16>, vector<8x15xf32> -> vector<8x15xf32>
    %361 = vector.extract_strided_slice %360 {offsets = [0, 1], sizes = [8, 14], strides = [1, 1]} : vector<8x15xf32> to vector<8x14xf32>
    %cst_116 = arith.constant 0.000000e+00 : f32
    %362 = vector.broadcast %cst_116 : f32 to vector<8x1xf32>
    %363 = tpu.concatenate %361, %362 in 1 : vector<8x14xf32>, vector<8x1xf32> -> vector<8x15xf32>
    %c0_i32_117 = arith.constant 0 : i32
    %364 = vector.broadcast %c0_i32_117 : i32 to vector<8x1xi32>
    %365 = arith.shrsi %40, %364 : vector<8x1xi32>
    %c1_i32_118 = arith.constant 1 : i32
    %366 = vector.broadcast %c1_i32_118 : i32 to vector<8x1xi32>
    %367 = arith.andi %365, %366 : vector<8x1xi32>
    %c1_i32_119 = arith.constant 1 : i32
    %368 = vector.broadcast %c1_i32_119 : i32 to vector<8x1xi32>
    %369 = arith.cmpi eq, %367, %368 : vector<8x1xi32>
    %370 = vector.shape_cast %369 : vector<8x1xi1> to vector<8x1xi1>
    %371 = vector.broadcast %370 : vector<8x1xi1> to vector<8x15xi1>
    %372 = arith.select %371, %363, %360 : vector<8x15xi1>, vector<8x15xf32>
    %373 = vector.extract_strided_slice %372 {offsets = [0, 2], sizes = [8, 13], strides = [1, 1]} : vector<8x15xf32> to vector<8x13xf32>
    %cst_120 = arith.constant 0.000000e+00 : f32
    %374 = vector.broadcast %cst_120 : f32 to vector<8x2xf32>
    %375 = tpu.concatenate %373, %374 in 1 : vector<8x13xf32>, vector<8x2xf32> -> vector<8x15xf32>
    %c1_i32_121 = arith.constant 1 : i32
    %376 = vector.broadcast %c1_i32_121 : i32 to vector<8x1xi32>
    %377 = arith.shrsi %40, %376 : vector<8x1xi32>
    %c1_i32_122 = arith.constant 1 : i32
    %378 = vector.broadcast %c1_i32_122 : i32 to vector<8x1xi32>
    %379 = arith.andi %377, %378 : vector<8x1xi32>
    %c1_i32_123 = arith.constant 1 : i32
    %380 = vector.broadcast %c1_i32_123 : i32 to vector<8x1xi32>
    %381 = arith.cmpi eq, %379, %380 : vector<8x1xi32>
    %382 = vector.shape_cast %381 : vector<8x1xi1> to vector<8x1xi1>
    %383 = vector.broadcast %382 : vector<8x1xi1> to vector<8x15xi1>
    %384 = arith.select %383, %375, %372 : vector<8x15xi1>, vector<8x15xf32>
    %385 = vector.extract_strided_slice %384 {offsets = [0, 4], sizes = [8, 11], strides = [1, 1]} : vector<8x15xf32> to vector<8x11xf32>
    %cst_124 = arith.constant 0.000000e+00 : f32
    %386 = vector.broadcast %cst_124 : f32 to vector<8x4xf32>
    %387 = tpu.concatenate %385, %386 in 1 : vector<8x11xf32>, vector<8x4xf32> -> vector<8x15xf32>
    %c2_i32_125 = arith.constant 2 : i32
    %388 = vector.broadcast %c2_i32_125 : i32 to vector<8x1xi32>
    %389 = arith.shrsi %40, %388 : vector<8x1xi32>
    %c1_i32_126 = arith.constant 1 : i32
    %390 = vector.broadcast %c1_i32_126 : i32 to vector<8x1xi32>
    %391 = arith.andi %389, %390 : vector<8x1xi32>
    %c1_i32_127 = arith.constant 1 : i32
    %392 = vector.broadcast %c1_i32_127 : i32 to vector<8x1xi32>
    %393 = arith.cmpi eq, %391, %392 : vector<8x1xi32>
    %394 = vector.shape_cast %393 : vector<8x1xi1> to vector<8x1xi1>
    %395 = vector.broadcast %394 : vector<8x1xi1> to vector<8x15xi1>
    %396 = arith.select %395, %387, %384 : vector<8x15xi1>, vector<8x15xf32>
    %397 = vector.extract_strided_slice %396 {offsets = [0, 0], sizes = [8, 8], strides = [1, 1]} : vector<8x15xf32> to vector<8x8xf32>
    %398 = arith.addf %359, %397 : vector<8x8xf32>
    %399 = vector.broadcast %42 : vector<1x8xf32> to vector<8x8xf32>
    %400 = arith.addf %398, %399 : vector<8x8xf32>
    %cst_128 = arith.constant dense<0xFF800000> : vector<8xf32>
    %401 = vector.multi_reduction <maximumf>, %400, %cst_128 [1] : vector<8x8xf32> to vector<8xf32>
    %402 = vector.shape_cast %401 : vector<8xf32> to vector<8x1xf32>
    %403 = vector.broadcast %402 : vector<8x1xf32> to vector<8x8xf32>
    %404 = arith.subf %400, %403 : vector<8x8xf32>
    %405 = math.exp %404 : vector<8x8xf32>
    %cst_129 = arith.constant dense<0.000000e+00> : vector<8xf32>
    %406 = vector.multi_reduction <add>, %405, %cst_129 [1] : vector<8x8xf32> to vector<8xf32>
    %407 = vector.shape_cast %406 : vector<8xf32> to vector<8x1xf32>
    %408 = tpu.reciprocal %407 {approx = true} : vector<8x1xf32> -> vector<8x1xf32>
    %409 = vector.broadcast %408 : vector<8x1xf32> to vector<8x8xf32>
    %410 = arith.mulf %405, %409 : vector<8x8xf32>
    %411 = arith.truncf %410 : vector<8x8xf32> to vector<8x8xbf16>
    %cst_130 = arith.constant dense<0.000000e+00> : vector<8x4xf32>
    %412 = tpu.matmul %411, %358, %cst_130 {dimension_numbers = #tpu.dot_dimension_numbers<[1], [0], [0], [1], [0, 0, 1, 1], [], []>} : vector<8x8xbf16>, vector<8x4xbf16>, vector<8x4xf32> -> vector<8x4xf32>
    %413 = arith.truncf %412 : vector<8x4xf32> to vector<8x4xbf16>
    %c0_131 = arith.constant 0 : index
    %c20 = arith.constant 20 : index
    %414 = vector.load %arg20[%c0_131, %c20] : memref<16x32xbf16, #tpu.memory_space<vmem>>, vector<8x4xbf16>
    tpu.vector_store %arg20[%c0_131, %c20], %413 {strides = array<i32>} : memref<16x32xbf16, #tpu.memory_space<vmem>>, vector<8x4xbf16>,
    %415 = vector.extract_strided_slice %35 {offsets = [0, 24], sizes = [8, 4], strides = [1, 1]} : vector<16x96xf32> to vector<8x4xf32>
    %416 = arith.truncf %415 : vector<8x4xf32> to vector<8x4xbf16>
    %417 = vector.extract_strided_slice %35 {offsets = [0, 56], sizes = [8, 4], strides = [1, 1]} : vector<16x96xf32> to vector<8x4xf32>
    %418 = arith.truncf %417 : vector<8x4xf32> to vector<8x4xbf16>
    %419 = vector.extract_strided_slice %35 {offsets = [0, 88], sizes = [8, 4], strides = [1, 1]} : vector<16x96xf32> to vector<8x4xf32>
    %420 = arith.truncf %419 : vector<8x4xf32> to vector<8x4xbf16>
    %cst_132 = arith.constant dense<0.000000e+00> : vector<8x8xf32>
    %421 = tpu.matmul %416, %418, %cst_132 {dimension_numbers = #tpu.dot_dimension_numbers<[1], [1], [0], [0], [0, 0, 1, 0], [], []>} : vector<8x4xbf16>, vector<8x4xbf16>, vector<8x8xf32> -> vector<8x8xf32>
    %cst_133 = arith.constant dense<0.000000e+00> : vector<8x15xf32>
    %422 = tpu.matmul %416, %37, %cst_133 {dimension_numbers = #tpu.dot_dimension_numbers<[1], [0], [0], [1], [0, 0, 1, 1], [], []>} : vector<8x4xbf16>, vector<4x15xbf16>, vector<8x15xf32> -> vector<8x15xf32>
    %423 = vector.extract_strided_slice %422 {offsets = [0, 1], sizes = [8, 14], strides = [1, 1]} : vector<8x15xf32> to vector<8x14xf32>
    %cst_134 = arith.constant 0.000000e+00 : f32
    %424 = vector.broadcast %cst_134 : f32 to vector<8x1xf32>
    %425 = tpu.concatenate %423, %424 in 1 : vector<8x14xf32>, vector<8x1xf32> -> vector<8x15xf32>
    %c0_i32_135 = arith.constant 0 : i32
    %426 = vector.broadcast %c0_i32_135 : i32 to vector<8x1xi32>
    %427 = arith.shrsi %40, %426 : vector<8x1xi32>
    %c1_i32_136 = arith.constant 1 : i32
    %428 = vector.broadcast %c1_i32_136 : i32 to vector<8x1xi32>
    %429 = arith.andi %427, %428 : vector<8x1xi32>
    %c1_i32_137 = arith.constant 1 : i32
    %430 = vector.broadcast %c1_i32_137 : i32 to vector<8x1xi32>
    %431 = arith.cmpi eq, %429, %430 : vector<8x1xi32>
    %432 = vector.shape_cast %431 : vector<8x1xi1> to vector<8x1xi1>
    %433 = vector.broadcast %432 : vector<8x1xi1> to vector<8x15xi1>
    %434 = arith.select %433, %425, %422 : vector<8x15xi1>, vector<8x15xf32>
    %435 = vector.extract_strided_slice %434 {offsets = [0, 2], sizes = [8, 13], strides = [1, 1]} : vector<8x15xf32> to vector<8x13xf32>
    %cst_138 = arith.constant 0.000000e+00 : f32
    %436 = vector.broadcast %cst_138 : f32 to vector<8x2xf32>
    %437 = tpu.concatenate %435, %436 in 1 : vector<8x13xf32>, vector<8x2xf32> -> vector<8x15xf32>
    %c1_i32_139 = arith.constant 1 : i32
    %438 = vector.broadcast %c1_i32_139 : i32 to vector<8x1xi32>
    %439 = arith.shrsi %40, %438 : vector<8x1xi32>
    %c1_i32_140 = arith.constant 1 : i32
    %440 = vector.broadcast %c1_i32_140 : i32 to vector<8x1xi32>
    %441 = arith.andi %439, %440 : vector<8x1xi32>
    %c1_i32_141 = arith.constant 1 : i32
    %442 = vector.broadcast %c1_i32_141 : i32 to vector<8x1xi32>
    %443 = arith.cmpi eq, %441, %442 : vector<8x1xi32>
    %444 = vector.shape_cast %443 : vector<8x1xi1> to vector<8x1xi1>
    %445 = vector.broadcast %444 : vector<8x1xi1> to vector<8x15xi1>
    %446 = arith.select %445, %437, %434 : vector<8x15xi1>, vector<8x15xf32>
    %447 = vector.extract_strided_slice %446 {offsets = [0, 4], sizes = [8, 11], strides = [1, 1]} : vector<8x15xf32> to vector<8x11xf32>
    %cst_142 = arith.constant 0.000000e+00 : f32
    %448 = vector.broadcast %cst_142 : f32 to vector<8x4xf32>
    %449 = tpu.concatenate %447, %448 in 1 : vector<8x11xf32>, vector<8x4xf32> -> vector<8x15xf32>
    %c2_i32_143 = arith.constant 2 : i32
    %450 = vector.broadcast %c2_i32_143 : i32 to vector<8x1xi32>
    %451 = arith.shrsi %40, %450 : vector<8x1xi32>
    %c1_i32_144 = arith.constant 1 : i32
    %452 = vector.broadcast %c1_i32_144 : i32 to vector<8x1xi32>
    %453 = arith.andi %451, %452 : vector<8x1xi32>
    %c1_i32_145 = arith.constant 1 : i32
    %454 = vector.broadcast %c1_i32_145 : i32 to vector<8x1xi32>
    %455 = arith.cmpi eq, %453, %454 : vector<8x1xi32>
    %456 = vector.shape_cast %455 : vector<8x1xi1> to vector<8x1xi1>
    %457 = vector.broadcast %456 : vector<8x1xi1> to vector<8x15xi1>
    %458 = arith.select %457, %449, %446 : vector<8x15xi1>, vector<8x15xf32>
    %459 = vector.extract_strided_slice %458 {offsets = [0, 0], sizes = [8, 8], strides = [1, 1]} : vector<8x15xf32> to vector<8x8xf32>
    %460 = arith.addf %421, %459 : vector<8x8xf32>
    %461 = vector.broadcast %42 : vector<1x8xf32> to vector<8x8xf32>
    %462 = arith.addf %460, %461 : vector<8x8xf32>
    %cst_146 = arith.constant dense<0xFF800000> : vector<8xf32>
    %463 = vector.multi_reduction <maximumf>, %462, %cst_146 [1] : vector<8x8xf32> to vector<8xf32>
    %464 = vector.shape_cast %463 : vector<8xf32> to vector<8x1xf32>
    %465 = vector.broadcast %464 : vector<8x1xf32> to vector<8x8xf32>
    %466 = arith.subf %462, %465 : vector<8x8xf32>
    %467 = math.exp %466 : vector<8x8xf32>
    %cst_147 = arith.constant dense<0.000000e+00> : vector<8xf32>
    %468 = vector.multi_reduction <add>, %467, %cst_147 [1] : vector<8x8xf32> to vector<8xf32>
    %469 = vector.shape_cast %468 : vector<8xf32> to vector<8x1xf32>
    %470 = tpu.reciprocal %469 {approx = true} : vector<8x1xf32> -> vector<8x1xf32>
    %471 = vector.broadcast %470 : vector<8x1xf32> to vector<8x8xf32>
    %472 = arith.mulf %467, %471 : vector<8x8xf32>
    %473 = arith.truncf %472 : vector<8x8xf32> to vector<8x8xbf16>
    %cst_148 = arith.constant dense<0.000000e+00> : vector<8x4xf32>
    %474 = tpu.matmul %473, %420, %cst_148 {dimension_numbers = #tpu.dot_dimension_numbers<[1], [0], [0], [1], [0, 0, 1, 1], [], []>} : vector<8x8xbf16>, vector<8x4xbf16>, vector<8x4xf32> -> vector<8x4xf32>
    %475 = arith.truncf %474 : vector<8x4xf32> to vector<8x4xbf16>
    %c0_149 = arith.constant 0 : index
    %c24 = arith.constant 24 : index
    %476 = vector.load %arg20[%c0_149, %c24] : memref<16x32xbf16, #tpu.memory_space<vmem>>, vector<8x4xbf16>
    tpu.vector_store %arg20[%c0_149, %c24], %475 {strides = array<i32>} : memref<16x32xbf16, #tpu.memory_space<vmem>>, vector<8x4xbf16>,
    %477 = vector.extract_strided_slice %35 {offsets = [0, 28], sizes = [8, 4], strides = [1, 1]} : vector<16x96xf32> to vector<8x4xf32>
    %478 = arith.truncf %477 : vector<8x4xf32> to vector<8x4xbf16>
    %479 = vector.extract_strided_slice %35 {offsets = [0, 60], sizes = [8, 4], strides = [1, 1]} : vector<16x96xf32> to vector<8x4xf32>
    %480 = arith.truncf %479 : vector<8x4xf32> to vector<8x4xbf16>
    %481 = vector.extract_strided_slice %35 {offsets = [0, 92], sizes = [8, 4], strides = [1, 1]} : vector<16x96xf32> to vector<8x4xf32>
    %482 = arith.truncf %481 : vector<8x4xf32> to vector<8x4xbf16>
    %cst_150 = arith.constant dense<0.000000e+00> : vector<8x8xf32>
    %483 = tpu.matmul %478, %480, %cst_150 {dimension_numbers = #tpu.dot_dimension_numbers<[1], [1], [0], [0], [0, 0, 1, 0], [], []>} : vector<8x4xbf16>, vector<8x4xbf16>, vector<8x8xf32> -> vector<8x8xf32>
    %cst_151 = arith.constant dense<0.000000e+00> : vector<8x15xf32>
    %484 = tpu.matmul %478, %37, %cst_151 {dimension_numbers = #tpu.dot_dimension_numbers<[1], [0], [0], [1], [0, 0, 1, 1], [], []>} : vector<8x4xbf16>, vector<4x15xbf16>, vector<8x15xf32> -> vector<8x15xf32>
    %485 = vector.extract_strided_slice %484 {offsets = [0, 1], sizes = [8, 14], strides = [1, 1]} : vector<8x15xf32> to vector<8x14xf32>
    %cst_152 = arith.constant 0.000000e+00 : f32
    %486 = vector.broadcast %cst_152 : f32 to vector<8x1xf32>
    %487 = tpu.concatenate %485, %486 in 1 : vector<8x14xf32>, vector<8x1xf32> -> vector<8x15xf32>
    %c0_i32_153 = arith.constant 0 : i32
    %488 = vector.broadcast %c0_i32_153 : i32 to vector<8x1xi32>
    %489 = arith.shrsi %40, %488 : vector<8x1xi32>
    %c1_i32_154 = arith.constant 1 : i32
    %490 = vector.broadcast %c1_i32_154 : i32 to vector<8x1xi32>
    %491 = arith.andi %489, %490 : vector<8x1xi32>
    %c1_i32_155 = arith.constant 1 : i32
    %492 = vector.broadcast %c1_i32_155 : i32 to vector<8x1xi32>
    %493 = arith.cmpi eq, %491, %492 : vector<8x1xi32>
    %494 = vector.shape_cast %493 : vector<8x1xi1> to vector<8x1xi1>
    %495 = vector.broadcast %494 : vector<8x1xi1> to vector<8x15xi1>
    %496 = arith.select %495, %487, %484 : vector<8x15xi1>, vector<8x15xf32>
    %497 = vector.extract_strided_slice %496 {offsets = [0, 2], sizes = [8, 13], strides = [1, 1]} : vector<8x15xf32> to vector<8x13xf32>
    %cst_156 = arith.constant 0.000000e+00 : f32
    %498 = vector.broadcast %cst_156 : f32 to vector<8x2xf32>
    %499 = tpu.concatenate %497, %498 in 1 : vector<8x13xf32>, vector<8x2xf32> -> vector<8x15xf32>
    %c1_i32_157 = arith.constant 1 : i32
    %500 = vector.broadcast %c1_i32_157 : i32 to vector<8x1xi32>
    %501 = arith.shrsi %40, %500 : vector<8x1xi32>
    %c1_i32_158 = arith.constant 1 : i32
    %502 = vector.broadcast %c1_i32_158 : i32 to vector<8x1xi32>
    %503 = arith.andi %501, %502 : vector<8x1xi32>
    %c1_i32_159 = arith.constant 1 : i32
    %504 = vector.broadcast %c1_i32_159 : i32 to vector<8x1xi32>
    %505 = arith.cmpi eq, %503, %504 : vector<8x1xi32>
    %506 = vector.shape_cast %505 : vector<8x1xi1> to vector<8x1xi1>
    %507 = vector.broadcast %506 : vector<8x1xi1> to vector<8x15xi1>
    %508 = arith.select %507, %499, %496 : vector<8x15xi1>, vector<8x15xf32>
    %509 = vector.extract_strided_slice %508 {offsets = [0, 4], sizes = [8, 11], strides = [1, 1]} : vector<8x15xf32> to vector<8x11xf32>
    %cst_160 = arith.constant 0.000000e+00 : f32
    %510 = vector.broadcast %cst_160 : f32 to vector<8x4xf32>
    %511 = tpu.concatenate %509, %510 in 1 : vector<8x11xf32>, vector<8x4xf32> -> vector<8x15xf32>
    %c2_i32_161 = arith.constant 2 : i32
    %512 = vector.broadcast %c2_i32_161 : i32 to vector<8x1xi32>
    %513 = arith.shrsi %40, %512 : vector<8x1xi32>
    %c1_i32_162 = arith.constant 1 : i32
    %514 = vector.broadcast %c1_i32_162 : i32 to vector<8x1xi32>
    %515 = arith.andi %513, %514 : vector<8x1xi32>
    %c1_i32_163 = arith.constant 1 : i32
    %516 = vector.broadcast %c1_i32_163 : i32 to vector<8x1xi32>
    %517 = arith.cmpi eq, %515, %516 : vector<8x1xi32>
    %518 = vector.shape_cast %517 : vector<8x1xi1> to vector<8x1xi1>
    %519 = vector.broadcast %518 : vector<8x1xi1> to vector<8x15xi1>
    %520 = arith.select %519, %511, %508 : vector<8x15xi1>, vector<8x15xf32>
    %521 = vector.extract_strided_slice %520 {offsets = [0, 0], sizes = [8, 8], strides = [1, 1]} : vector<8x15xf32> to vector<8x8xf32>
    %522 = arith.addf %483, %521 : vector<8x8xf32>
    %523 = vector.broadcast %42 : vector<1x8xf32> to vector<8x8xf32>
    %524 = arith.addf %522, %523 : vector<8x8xf32>
    %cst_164 = arith.constant dense<0xFF800000> : vector<8xf32>
    %525 = vector.multi_reduction <maximumf>, %524, %cst_164 [1] : vector<8x8xf32> to vector<8xf32>
    %526 = vector.shape_cast %525 : vector<8xf32> to vector<8x1xf32>
    %527 = vector.broadcast %526 : vector<8x1xf32> to vector<8x8xf32>
    %528 = arith.subf %524, %527 : vector<8x8xf32>
    %529 = math.exp %528 : vector<8x8xf32>
    %cst_165 = arith.constant dense<0.000000e+00> : vector<8xf32>
    %530 = vector.multi_reduction <add>, %529, %cst_165 [1] : vector<8x8xf32> to vector<8xf32>
    %531 = vector.shape_cast %530 : vector<8xf32> to vector<8x1xf32>
    %532 = tpu.reciprocal %531 {approx = true} : vector<8x1xf32> -> vector<8x1xf32>
    %533 = vector.broadcast %532 : vector<8x1xf32> to vector<8x8xf32>
    %534 = arith.mulf %529, %533 : vector<8x8xf32>
    %535 = arith.truncf %534 : vector<8x8xf32> to vector<8x8xbf16>
    %cst_166 = arith.constant dense<0.000000e+00> : vector<8x4xf32>
    %536 = tpu.matmul %535, %482, %cst_166 {dimension_numbers = #tpu.dot_dimension_numbers<[1], [0], [0], [1], [0, 0, 1, 1], [], []>} : vector<8x8xbf16>, vector<8x4xbf16>, vector<8x4xf32> -> vector<8x4xf32>
    %537 = arith.truncf %536 : vector<8x4xf32> to vector<8x4xbf16>
    %c0_167 = arith.constant 0 : index
    %c28 = arith.constant 28 : index
    %538 = vector.load %arg20[%c0_167, %c28] : memref<16x32xbf16, #tpu.memory_space<vmem>>, vector<8x4xbf16>
    tpu.vector_store %arg20[%c0_167, %c28], %537 {strides = array<i32>} : memref<16x32xbf16, #tpu.memory_space<vmem>>, vector<8x4xbf16>,
    %c1 = arith.constant 1 : index
    %c0_168 = arith.constant 0 : index
    %c0_169 = arith.constant 0 : index
    %539 = vector.load %arg3[%c1, %c0_168, %c0_169] : memref<2x1x8xf32, #tpu.memory_space<vmem>>, vector<1x1x8xf32>
    %540 = vector.shape_cast %539 : vector<1x1x8xf32> to vector<1x8xf32>
    %541 = vector.extract_strided_slice %35 {offsets = [8, 0], sizes = [8, 4], strides = [1, 1]} : vector<16x96xf32> to vector<8x4xf32>
    %542 = arith.truncf %541 : vector<8x4xf32> to vector<8x4xbf16>
    %543 = vector.extract_strided_slice %35 {offsets = [8, 32], sizes = [8, 4], strides = [1, 1]} : vector<16x96xf32> to vector<8x4xf32>
    %544 = arith.truncf %543 : vector<8x4xf32> to vector<8x4xbf16>
    %545 = vector.extract_strided_slice %35 {offsets = [8, 64], sizes = [8, 4], strides = [1, 1]} : vector<16x96xf32> to vector<8x4xf32>
    %546 = arith.truncf %545 : vector<8x4xf32> to vector<8x4xbf16>
    %cst_170 = arith.constant dense<0.000000e+00> : vector<8x8xf32>
    %547 = tpu.matmul %542, %544, %cst_170 {dimension_numbers = #tpu.dot_dimension_numbers<[1], [1], [0], [0], [0, 0, 1, 0], [], []>} : vector<8x4xbf16>, vector<8x4xbf16>, vector<8x8xf32> -> vector<8x8xf32>
    %cst_171 = arith.constant dense<0.000000e+00> : vector<8x15xf32>
    %548 = tpu.matmul %542, %37, %cst_171 {dimension_numbers = #tpu.dot_dimension_numbers<[1], [0], [0], [1], [0, 0, 1, 1], [], []>} : vector<8x4xbf16>, vector<4x15xbf16>, vector<8x15xf32> -> vector<8x15xf32>
    %549 = vector.extract_strided_slice %548 {offsets = [0, 1], sizes = [8, 14], strides = [1, 1]} : vector<8x15xf32> to vector<8x14xf32>
    %cst_172 = arith.constant 0.000000e+00 : f32
    %550 = vector.broadcast %cst_172 : f32 to vector<8x1xf32>
    %551 = tpu.concatenate %549, %550 in 1 : vector<8x14xf32>, vector<8x1xf32> -> vector<8x15xf32>
    %c0_i32_173 = arith.constant 0 : i32
    %552 = vector.broadcast %c0_i32_173 : i32 to vector<8x1xi32>
    %553 = arith.shrsi %40, %552 : vector<8x1xi32>
    %c1_i32_174 = arith.constant 1 : i32
    %554 = vector.broadcast %c1_i32_174 : i32 to vector<8x1xi32>
    %555 = arith.andi %553, %554 : vector<8x1xi32>
    %c1_i32_175 = arith.constant 1 : i32
    %556 = vector.broadcast %c1_i32_175 : i32 to vector<8x1xi32>
    %557 = arith.cmpi eq, %555, %556 : vector<8x1xi32>
    %558 = vector.shape_cast %557 : vector<8x1xi1> to vector<8x1xi1>
    %559 = vector.broadcast %558 : vector<8x1xi1> to vector<8x15xi1>
    %560 = arith.select %559, %551, %548 : vector<8x15xi1>, vector<8x15xf32>
    %561 = vector.extract_strided_slice %560 {offsets = [0, 2], sizes = [8, 13], strides = [1, 1]} : vector<8x15xf32> to vector<8x13xf32>
    %cst_176 = arith.constant 0.000000e+00 : f32
    %562 = vector.broadcast %cst_176 : f32 to vector<8x2xf32>
    %563 = tpu.concatenate %561, %562 in 1 : vector<8x13xf32>, vector<8x2xf32> -> vector<8x15xf32>
    %c1_i32_177 = arith.constant 1 : i32
    %564 = vector.broadcast %c1_i32_177 : i32 to vector<8x1xi32>
    %565 = arith.shrsi %40, %564 : vector<8x1xi32>
    %c1_i32_178 = arith.constant 1 : i32
    %566 = vector.broadcast %c1_i32_178 : i32 to vector<8x1xi32>
    %567 = arith.andi %565, %566 : vector<8x1xi32>
    %c1_i32_179 = arith.constant 1 : i32
    %568 = vector.broadcast %c1_i32_179 : i32 to vector<8x1xi32>
    %569 = arith.cmpi eq, %567, %568 : vector<8x1xi32>
    %570 = vector.shape_cast %569 : vector<8x1xi1> to vector<8x1xi1>
    %571 = vector.broadcast %570 : vector<8x1xi1> to vector<8x15xi1>
    %572 = arith.select %571, %563, %560 : vector<8x15xi1>, vector<8x15xf32>
    %573 = vector.extract_strided_slice %572 {offsets = [0, 4], sizes = [8, 11], strides = [1, 1]} : vector<8x15xf32> to vector<8x11xf32>
    %cst_180 = arith.constant 0.000000e+00 : f32
    %574 = vector.broadcast %cst_180 : f32 to vector<8x4xf32>
    %575 = tpu.concatenate %573, %574 in 1 : vector<8x11xf32>, vector<8x4xf32> -> vector<8x15xf32>
    %c2_i32_181 = arith.constant 2 : i32
    %576 = vector.broadcast %c2_i32_181 : i32 to vector<8x1xi32>
    %577 = arith.shrsi %40, %576 : vector<8x1xi32>
    %c1_i32_182 = arith.constant 1 : i32
    %578 = vector.broadcast %c1_i32_182 : i32 to vector<8x1xi32>
    %579 = arith.andi %577, %578 : vector<8x1xi32>
    %c1_i32_183 = arith.constant 1 : i32
    %580 = vector.broadcast %c1_i32_183 : i32 to vector<8x1xi32>
    %581 = arith.cmpi eq, %579, %580 : vector<8x1xi32>
    %582 = vector.shape_cast %581 : vector<8x1xi1> to vector<8x1xi1>
    %583 = vector.broadcast %582 : vector<8x1xi1> to vector<8x15xi1>
    %584 = arith.select %583, %575, %572 : vector<8x15xi1>, vector<8x15xf32>
    %585 = vector.extract_strided_slice %584 {offsets = [0, 0], sizes = [8, 8], strides = [1, 1]} : vector<8x15xf32> to vector<8x8xf32>
    %586 = arith.addf %547, %585 : vector<8x8xf32>
    %587 = vector.broadcast %540 : vector<1x8xf32> to vector<8x8xf32>
    %588 = arith.addf %586, %587 : vector<8x8xf32>
    %cst_184 = arith.constant dense<0xFF800000> : vector<8xf32>
    %589 = vector.multi_reduction <maximumf>, %588, %cst_184 [1] : vector<8x8xf32> to vector<8xf32>
    %590 = vector.shape_cast %589 : vector<8xf32> to vector<8x1xf32>
    %591 = vector.broadcast %590 : vector<8x1xf32> to vector<8x8xf32>
    %592 = arith.subf %588, %591 : vector<8x8xf32>
    %593 = math.exp %592 : vector<8x8xf32>
    %cst_185 = arith.constant dense<0.000000e+00> : vector<8xf32>
    %594 = vector.multi_reduction <add>, %593, %cst_185 [1] : vector<8x8xf32> to vector<8xf32>
    %595 = vector.shape_cast %594 : vector<8xf32> to vector<8x1xf32>
    %596 = tpu.reciprocal %595 {approx = true} : vector<8x1xf32> -> vector<8x1xf32>
    %597 = vector.broadcast %596 : vector<8x1xf32> to vector<8x8xf32>
    %598 = arith.mulf %593, %597 : vector<8x8xf32>
    %599 = arith.truncf %598 : vector<8x8xf32> to vector<8x8xbf16>
    %cst_186 = arith.constant dense<0.000000e+00> : vector<8x4xf32>
    %600 = tpu.matmul %599, %546, %cst_186 {dimension_numbers = #tpu.dot_dimension_numbers<[1], [0], [0], [1], [0, 0, 1, 1], [], []>} : vector<8x8xbf16>, vector<8x4xbf16>, vector<8x4xf32> -> vector<8x4xf32>
    %601 = arith.truncf %600 : vector<8x4xf32> to vector<8x4xbf16>
    %c8_187 = arith.constant 8 : index
    %c0_188 = arith.constant 0 : index
    %602 = vector.load %arg20[%c8_187, %c0_188] : memref<16x32xbf16, #tpu.memory_space<vmem>>, vector<8x4xbf16>
    tpu.vector_store %arg20[%c8_187, %c0_188], %601 {strides = array<i32>} : memref<16x32xbf16, #tpu.memory_space<vmem>>, vector<8x4xbf16>,
    %603 = vector.extract_strided_slice %35 {offsets = [8, 4], sizes = [8, 4], strides = [1, 1]} : vector<16x96xf32> to vector<8x4xf32>
    %604 = arith.truncf %603 : vector<8x4xf32> to vector<8x4xbf16>
    %605 = vector.extract_strided_slice %35 {offsets = [8, 36], sizes = [8, 4], strides = [1, 1]} : vector<16x96xf32> to vector<8x4xf32>
    %606 = arith.truncf %605 : vector<8x4xf32> to vector<8x4xbf16>
    %607 = vector.extract_strided_slice %35 {offsets = [8, 68], sizes = [8, 4], strides = [1, 1]} : vector<16x96xf32> to vector<8x4xf32>
    %608 = arith.truncf %607 : vector<8x4xf32> to vector<8x4xbf16>
    %cst_189 = arith.constant dense<0.000000e+00> : vector<8x8xf32>
    %609 = tpu.matmul %604, %606, %cst_189 {dimension_numbers = #tpu.dot_dimension_numbers<[1], [1], [0], [0], [0, 0, 1, 0], [], []>} : vector<8x4xbf16>, vector<8x4xbf16>, vector<8x8xf32> -> vector<8x8xf32>
    %cst_190 = arith.constant dense<0.000000e+00> : vector<8x15xf32>
    %610 = tpu.matmul %604, %37, %cst_190 {dimension_numbers = #tpu.dot_dimension_numbers<[1], [0], [0], [1], [0, 0, 1, 1], [], []>} : vector<8x4xbf16>, vector<4x15xbf16>, vector<8x15xf32> -> vector<8x15xf32>
    %611 = vector.extract_strided_slice %610 {offsets = [0, 1], sizes = [8, 14], strides = [1, 1]} : vector<8x15xf32> to vector<8x14xf32>
    %cst_191 = arith.constant 0.000000e+00 : f32
    %612 = vector.broadcast %cst_191 : f32 to vector<8x1xf32>
    %613 = tpu.concatenate %611, %612 in 1 : vector<8x14xf32>, vector<8x1xf32> -> vector<8x15xf32>
    %c0_i32_192 = arith.constant 0 : i32
    %614 = vector.broadcast %c0_i32_192 : i32 to vector<8x1xi32>
    %615 = arith.shrsi %40, %614 : vector<8x1xi32>
    %c1_i32_193 = arith.constant 1 : i32
    %616 = vector.broadcast %c1_i32_193 : i32 to vector<8x1xi32>
    %617 = arith.andi %615, %616 : vector<8x1xi32>
    %c1_i32_194 = arith.constant 1 : i32
    %618 = vector.broadcast %c1_i32_194 : i32 to vector<8x1xi32>
    %619 = arith.cmpi eq, %617, %618 : vector<8x1xi32>
    %620 = vector.shape_cast %619 : vector<8x1xi1> to vector<8x1xi1>
    %621 = vector.broadcast %620 : vector<8x1xi1> to vector<8x15xi1>
    %622 = arith.select %621, %613, %610 : vector<8x15xi1>, vector<8x15xf32>
    %623 = vector.extract_strided_slice %622 {offsets = [0, 2], sizes = [8, 13], strides = [1, 1]} : vector<8x15xf32> to vector<8x13xf32>
    %cst_195 = arith.constant 0.000000e+00 : f32
    %624 = vector.broadcast %cst_195 : f32 to vector<8x2xf32>
    %625 = tpu.concatenate %623, %624 in 1 : vector<8x13xf32>, vector<8x2xf32> -> vector<8x15xf32>
    %c1_i32_196 = arith.constant 1 : i32
    %626 = vector.broadcast %c1_i32_196 : i32 to vector<8x1xi32>
    %627 = arith.shrsi %40, %626 : vector<8x1xi32>
    %c1_i32_197 = arith.constant 1 : i32
    %628 = vector.broadcast %c1_i32_197 : i32 to vector<8x1xi32>
    %629 = arith.andi %627, %628 : vector<8x1xi32>
    %c1_i32_198 = arith.constant 1 : i32
    %630 = vector.broadcast %c1_i32_198 : i32 to vector<8x1xi32>
    %631 = arith.cmpi eq, %629, %630 : vector<8x1xi32>
    %632 = vector.shape_cast %631 : vector<8x1xi1> to vector<8x1xi1>
    %633 = vector.broadcast %632 : vector<8x1xi1> to vector<8x15xi1>
    %634 = arith.select %633, %625, %622 : vector<8x15xi1>, vector<8x15xf32>
    %635 = vector.extract_strided_slice %634 {offsets = [0, 4], sizes = [8, 11], strides = [1, 1]} : vector<8x15xf32> to vector<8x11xf32>
    %cst_199 = arith.constant 0.000000e+00 : f32
    %636 = vector.broadcast %cst_199 : f32 to vector<8x4xf32>
    %637 = tpu.concatenate %635, %636 in 1 : vector<8x11xf32>, vector<8x4xf32> -> vector<8x15xf32>
    %c2_i32_200 = arith.constant 2 : i32
    %638 = vector.broadcast %c2_i32_200 : i32 to vector<8x1xi32>
    %639 = arith.shrsi %40, %638 : vector<8x1xi32>
    %c1_i32_201 = arith.constant 1 : i32
    %640 = vector.broadcast %c1_i32_201 : i32 to vector<8x1xi32>
    %641 = arith.andi %639, %640 : vector<8x1xi32>
    %c1_i32_202 = arith.constant 1 : i32
    %642 = vector.broadcast %c1_i32_202 : i32 to vector<8x1xi32>
    %643 = arith.cmpi eq, %641, %642 : vector<8x1xi32>
    %644 = vector.shape_cast %643 : vector<8x1xi1> to vector<8x1xi1>
    %645 = vector.broadcast %644 : vector<8x1xi1> to vector<8x15xi1>
    %646 = arith.select %645, %637, %634 : vector<8x15xi1>, vector<8x15xf32>
    %647 = vector.extract_strided_slice %646 {offsets = [0, 0], sizes = [8, 8], strides = [1, 1]} : vector<8x15xf32> to vector<8x8xf32>
    %648 = arith.addf %609, %647 : vector<8x8xf32>
    %649 = vector.broadcast %540 : vector<1x8xf32> to vector<8x8xf32>
    %650 = arith.addf %648, %649 : vector<8x8xf32>
    %cst_203 = arith.constant dense<0xFF800000> : vector<8xf32>
    %651 = vector.multi_reduction <maximumf>, %650, %cst_203 [1] : vector<8x8xf32> to vector<8xf32>
    %652 = vector.shape_cast %651 : vector<8xf32> to vector<8x1xf32>
    %653 = vector.broadcast %652 : vector<8x1xf32> to vector<8x8xf32>
    %654 = arith.subf %650, %653 : vector<8x8xf32>
    %655 = math.exp %654 : vector<8x8xf32>
    %cst_204 = arith.constant dense<0.000000e+00> : vector<8xf32>
    %656 = vector.multi_reduction <add>, %655, %cst_204 [1] : vector<8x8xf32> to vector<8xf32>
    %657 = vector.shape_cast %656 : vector<8xf32> to vector<8x1xf32>
    %658 = tpu.reciprocal %657 {approx = true} : vector<8x1xf32> -> vector<8x1xf32>
    %659 = vector.broadcast %658 : vector<8x1xf32> to vector<8x8xf32>
    %660 = arith.mulf %655, %659 : vector<8x8xf32>
    %661 = arith.truncf %660 : vector<8x8xf32> to vector<8x8xbf16>
    %cst_205 = arith.constant dense<0.000000e+00> : vector<8x4xf32>
    %662 = tpu.matmul %661, %608, %cst_205 {dimension_numbers = #tpu.dot_dimension_numbers<[1], [0], [0], [1], [0, 0, 1, 1], [], []>} : vector<8x8xbf16>, vector<8x4xbf16>, vector<8x4xf32> -> vector<8x4xf32>
    %663 = arith.truncf %662 : vector<8x4xf32> to vector<8x4xbf16>
    %c8_206 = arith.constant 8 : index
    %c4_207 = arith.constant 4 : index
    %664 = vector.load %arg20[%c8_206, %c4_207] : memref<16x32xbf16, #tpu.memory_space<vmem>>, vector<8x4xbf16>
    tpu.vector_store %arg20[%c8_206, %c4_207], %663 {strides = array<i32>} : memref<16x32xbf16, #tpu.memory_space<vmem>>, vector<8x4xbf16>,
    %665 = vector.extract_strided_slice %35 {offsets = [8, 8], sizes = [8, 4], strides = [1, 1]} : vector<16x96xf32> to vector<8x4xf32>
    %666 = arith.truncf %665 : vector<8x4xf32> to vector<8x4xbf16>
    %667 = vector.extract_strided_slice %35 {offsets = [8, 40], sizes = [8, 4], strides = [1, 1]} : vector<16x96xf32> to vector<8x4xf32>
    %668 = arith.truncf %667 : vector<8x4xf32> to vector<8x4xbf16>
    %669 = vector.extract_strided_slice %35 {offsets = [8, 72], sizes = [8, 4], strides = [1, 1]} : vector<16x96xf32> to vector<8x4xf32>
    %670 = arith.truncf %669 : vector<8x4xf32> to vector<8x4xbf16>
    %cst_208 = arith.constant dense<0.000000e+00> : vector<8x8xf32>
    %671 = tpu.matmul %666, %668, %cst_208 {dimension_numbers = #tpu.dot_dimension_numbers<[1], [1], [0], [0], [0, 0, 1, 0], [], []>} : vector<8x4xbf16>, vector<8x4xbf16>, vector<8x8xf32> -> vector<8x8xf32>
    %cst_209 = arith.constant dense<0.000000e+00> : vector<8x15xf32>
    %672 = tpu.matmul %666, %37, %cst_209 {dimension_numbers = #tpu.dot_dimension_numbers<[1], [0], [0], [1], [0, 0, 1, 1], [], []>} : vector<8x4xbf16>, vector<4x15xbf16>, vector<8x15xf32> -> vector<8x15xf32>
    %673 = vector.extract_strided_slice %672 {offsets = [0, 1], sizes = [8, 14], strides = [1, 1]} : vector<8x15xf32> to vector<8x14xf32>
    %cst_210 = arith.constant 0.000000e+00 : f32
    %674 = vector.broadcast %cst_210 : f32 to vector<8x1xf32>
    %675 = tpu.concatenate %673, %674 in 1 : vector<8x14xf32>, vector<8x1xf32> -> vector<8x15xf32>
    %c0_i32_211 = arith.constant 0 : i32
    %676 = vector.broadcast %c0_i32_211 : i32 to vector<8x1xi32>
    %677 = arith.shrsi %40, %676 : vector<8x1xi32>
    %c1_i32_212 = arith.constant 1 : i32
    %678 = vector.broadcast %c1_i32_212 : i32 to vector<8x1xi32>
    %679 = arith.andi %677, %678 : vector<8x1xi32>
    %c1_i32_213 = arith.constant 1 : i32
    %680 = vector.broadcast %c1_i32_213 : i32 to vector<8x1xi32>
    %681 = arith.cmpi eq, %679, %680 : vector<8x1xi32>
    %682 = vector.shape_cast %681 : vector<8x1xi1> to vector<8x1xi1>
    %683 = vector.broadcast %682 : vector<8x1xi1> to vector<8x15xi1>
    %684 = arith.select %683, %675, %672 : vector<8x15xi1>, vector<8x15xf32>
    %685 = vector.extract_strided_slice %684 {offsets = [0, 2], sizes = [8, 13], strides = [1, 1]} : vector<8x15xf32> to vector<8x13xf32>
    %cst_214 = arith.constant 0.000000e+00 : f32
    %686 = vector.broadcast %cst_214 : f32 to vector<8x2xf32>
    %687 = tpu.concatenate %685, %686 in 1 : vector<8x13xf32>, vector<8x2xf32> -> vector<8x15xf32>
    %c1_i32_215 = arith.constant 1 : i32
    %688 = vector.broadcast %c1_i32_215 : i32 to vector<8x1xi32>
    %689 = arith.shrsi %40, %688 : vector<8x1xi32>
    %c1_i32_216 = arith.constant 1 : i32
    %690 = vector.broadcast %c1_i32_216 : i32 to vector<8x1xi32>
    %691 = arith.andi %689, %690 : vector<8x1xi32>
    %c1_i32_217 = arith.constant 1 : i32
    %692 = vector.broadcast %c1_i32_217 : i32 to vector<8x1xi32>
    %693 = arith.cmpi eq, %691, %692 : vector<8x1xi32>
    %694 = vector.shape_cast %693 : vector<8x1xi1> to vector<8x1xi1>
    %695 = vector.broadcast %694 : vector<8x1xi1> to vector<8x15xi1>
    %696 = arith.select %695, %687, %684 : vector<8x15xi1>, vector<8x15xf32>
    %697 = vector.extract_strided_slice %696 {offsets = [0, 4], sizes = [8, 11], strides = [1, 1]} : vector<8x15xf32> to vector<8x11xf32>
    %cst_218 = arith.constant 0.000000e+00 : f32
    %698 = vector.broadcast %cst_218 : f32 to vector<8x4xf32>
    %699 = tpu.concatenate %697, %698 in 1 : vector<8x11xf32>, vector<8x4xf32> -> vector<8x15xf32>
    %c2_i32_219 = arith.constant 2 : i32
    %700 = vector.broadcast %c2_i32_219 : i32 to vector<8x1xi32>
    %701 = arith.shrsi %40, %700 : vector<8x1xi32>
    %c1_i32_220 = arith.constant 1 : i32
    %702 = vector.broadcast %c1_i32_220 : i32 to vector<8x1xi32>
    %703 = arith.andi %701, %702 : vector<8x1xi32>
    %c1_i32_221 = arith.constant 1 : i32
    %704 = vector.broadcast %c1_i32_221 : i32 to vector<8x1xi32>
    %705 = arith.cmpi eq, %703, %704 : vector<8x1xi32>
    %706 = vector.shape_cast %705 : vector<8x1xi1> to vector<8x1xi1>
    %707 = vector.broadcast %706 : vector<8x1xi1> to vector<8x15xi1>
    %708 = arith.select %707, %699, %696 : vector<8x15xi1>, vector<8x15xf32>
    %709 = vector.extract_strided_slice %708 {offsets = [0, 0], sizes = [8, 8], strides = [1, 1]} : vector<8x15xf32> to vector<8x8xf32>
    %710 = arith.addf %671, %709 : vector<8x8xf32>
    %711 = vector.broadcast %540 : vector<1x8xf32> to vector<8x8xf32>
    %712 = arith.addf %710, %711 : vector<8x8xf32>
    %cst_222 = arith.constant dense<0xFF800000> : vector<8xf32>
    %713 = vector.multi_reduction <maximumf>, %712, %cst_222 [1] : vector<8x8xf32> to vector<8xf32>
    %714 = vector.shape_cast %713 : vector<8xf32> to vector<8x1xf32>
    %715 = vector.broadcast %714 : vector<8x1xf32> to vector<8x8xf32>
    %716 = arith.subf %712, %715 : vector<8x8xf32>
    %717 = math.exp %716 : vector<8x8xf32>
    %cst_223 = arith.constant dense<0.000000e+00> : vector<8xf32>
    %718 = vector.multi_reduction <add>, %717, %cst_223 [1] : vector<8x8xf32> to vector<8xf32>
    %719 = vector.shape_cast %718 : vector<8xf32> to vector<8x1xf32>
    %720 = tpu.reciprocal %719 {approx = true} : vector<8x1xf32> -> vector<8x1xf32>
    %721 = vector.broadcast %720 : vector<8x1xf32> to vector<8x8xf32>
    %722 = arith.mulf %717, %721 : vector<8x8xf32>
    %723 = arith.truncf %722 : vector<8x8xf32> to vector<8x8xbf16>
    %cst_224 = arith.constant dense<0.000000e+00> : vector<8x4xf32>
    %724 = tpu.matmul %723, %670, %cst_224 {dimension_numbers = #tpu.dot_dimension_numbers<[1], [0], [0], [1], [0, 0, 1, 1], [], []>} : vector<8x8xbf16>, vector<8x4xbf16>, vector<8x4xf32> -> vector<8x4xf32>
    %725 = arith.truncf %724 : vector<8x4xf32> to vector<8x4xbf16>
    %c8_225 = arith.constant 8 : index
    %c8_226 = arith.constant 8 : index
    %726 = vector.load %arg20[%c8_225, %c8_226] : memref<16x32xbf16, #tpu.memory_space<vmem>>, vector<8x4xbf16>
    tpu.vector_store %arg20[%c8_225, %c8_226], %725 {strides = array<i32>} : memref<16x32xbf16, #tpu.memory_space<vmem>>, vector<8x4xbf16>,
    %727 = vector.extract_strided_slice %35 {offsets = [8, 12], sizes = [8, 4], strides = [1, 1]} : vector<16x96xf32> to vector<8x4xf32>
    %728 = arith.truncf %727 : vector<8x4xf32> to vector<8x4xbf16>
    %729 = vector.extract_strided_slice %35 {offsets = [8, 44], sizes = [8, 4], strides = [1, 1]} : vector<16x96xf32> to vector<8x4xf32>
    %730 = arith.truncf %729 : vector<8x4xf32> to vector<8x4xbf16>
    %731 = vector.extract_strided_slice %35 {offsets = [8, 76], sizes = [8, 4], strides = [1, 1]} : vector<16x96xf32> to vector<8x4xf32>
    %732 = arith.truncf %731 : vector<8x4xf32> to vector<8x4xbf16>
    %cst_227 = arith.constant dense<0.000000e+00> : vector<8x8xf32>
    %733 = tpu.matmul %728, %730, %cst_227 {dimension_numbers = #tpu.dot_dimension_numbers<[1], [1], [0], [0], [0, 0, 1, 0], [], []>} : vector<8x4xbf16>, vector<8x4xbf16>, vector<8x8xf32> -> vector<8x8xf32>
    %cst_228 = arith.constant dense<0.000000e+00> : vector<8x15xf32>
    %734 = tpu.matmul %728, %37, %cst_228 {dimension_numbers = #tpu.dot_dimension_numbers<[1], [0], [0], [1], [0, 0, 1, 1], [], []>} : vector<8x4xbf16>, vector<4x15xbf16>, vector<8x15xf32> -> vector<8x15xf32>
    %735 = vector.extract_strided_slice %734 {offsets = [0, 1], sizes = [8, 14], strides = [1, 1]} : vector<8x15xf32> to vector<8x14xf32>
    %cst_229 = arith.constant 0.000000e+00 : f32
    %736 = vector.broadcast %cst_229 : f32 to vector<8x1xf32>
    %737 = tpu.concatenate %735, %736 in 1 : vector<8x14xf32>, vector<8x1xf32> -> vector<8x15xf32>
    %c0_i32_230 = arith.constant 0 : i32
    %738 = vector.broadcast %c0_i32_230 : i32 to vector<8x1xi32>
    %739 = arith.shrsi %40, %738 : vector<8x1xi32>
    %c1_i32_231 = arith.constant 1 : i32
    %740 = vector.broadcast %c1_i32_231 : i32 to vector<8x1xi32>
    %741 = arith.andi %739, %740 : vector<8x1xi32>
    %c1_i32_232 = arith.constant 1 : i32
    %742 = vector.broadcast %c1_i32_232 : i32 to vector<8x1xi32>
    %743 = arith.cmpi eq, %741, %742 : vector<8x1xi32>
    %744 = vector.shape_cast %743 : vector<8x1xi1> to vector<8x1xi1>
    %745 = vector.broadcast %744 : vector<8x1xi1> to vector<8x15xi1>
    %746 = arith.select %745, %737, %734 : vector<8x15xi1>, vector<8x15xf32>
    %747 = vector.extract_strided_slice %746 {offsets = [0, 2], sizes = [8, 13], strides = [1, 1]} : vector<8x15xf32> to vector<8x13xf32>
    %cst_233 = arith.constant 0.000000e+00 : f32
    %748 = vector.broadcast %cst_233 : f32 to vector<8x2xf32>
    %749 = tpu.concatenate %747, %748 in 1 : vector<8x13xf32>, vector<8x2xf32> -> vector<8x15xf32>
    %c1_i32_234 = arith.constant 1 : i32
    %750 = vector.broadcast %c1_i32_234 : i32 to vector<8x1xi32>
    %751 = arith.shrsi %40, %750 : vector<8x1xi32>
    %c1_i32_235 = arith.constant 1 : i32
    %752 = vector.broadcast %c1_i32_235 : i32 to vector<8x1xi32>
    %753 = arith.andi %751, %752 : vector<8x1xi32>
    %c1_i32_236 = arith.constant 1 : i32
    %754 = vector.broadcast %c1_i32_236 : i32 to vector<8x1xi32>
    %755 = arith.cmpi eq, %753, %754 : vector<8x1xi32>
    %756 = vector.shape_cast %755 : vector<8x1xi1> to vector<8x1xi1>
    %757 = vector.broadcast %756 : vector<8x1xi1> to vector<8x15xi1>
    %758 = arith.select %757, %749, %746 : vector<8x15xi1>, vector<8x15xf32>
    %759 = vector.extract_strided_slice %758 {offsets = [0, 4], sizes = [8, 11], strides = [1, 1]} : vector<8x15xf32> to vector<8x11xf32>
    %cst_237 = arith.constant 0.000000e+00 : f32
    %760 = vector.broadcast %cst_237 : f32 to vector<8x4xf32>
    %761 = tpu.concatenate %759, %760 in 1 : vector<8x11xf32>, vector<8x4xf32> -> vector<8x15xf32>
    %c2_i32_238 = arith.constant 2 : i32
    %762 = vector.broadcast %c2_i32_238 : i32 to vector<8x1xi32>
    %763 = arith.shrsi %40, %762 : vector<8x1xi32>
    %c1_i32_239 = arith.constant 1 : i32
    %764 = vector.broadcast %c1_i32_239 : i32 to vector<8x1xi32>
    %765 = arith.andi %763, %764 : vector<8x1xi32>
    %c1_i32_240 = arith.constant 1 : i32
    %766 = vector.broadcast %c1_i32_240 : i32 to vector<8x1xi32>
    %767 = arith.cmpi eq, %765, %766 : vector<8x1xi32>
    %768 = vector.shape_cast %767 : vector<8x1xi1> to vector<8x1xi1>
    %769 = vector.broadcast %768 : vector<8x1xi1> to vector<8x15xi1>
    %770 = arith.select %769, %761, %758 : vector<8x15xi1>, vector<8x15xf32>
    %771 = vector.extract_strided_slice %770 {offsets = [0, 0], sizes = [8, 8], strides = [1, 1]} : vector<8x15xf32> to vector<8x8xf32>
    %772 = arith.addf %733, %771 : vector<8x8xf32>
    %773 = vector.broadcast %540 : vector<1x8xf32> to vector<8x8xf32>
    %774 = arith.addf %772, %773 : vector<8x8xf32>
    %cst_241 = arith.constant dense<0xFF800000> : vector<8xf32>
    %775 = vector.multi_reduction <maximumf>, %774, %cst_241 [1] : vector<8x8xf32> to vector<8xf32>
    %776 = vector.shape_cast %775 : vector<8xf32> to vector<8x1xf32>
    %777 = vector.broadcast %776 : vector<8x1xf32> to vector<8x8xf32>
    %778 = arith.subf %774, %777 : vector<8x8xf32>
    %779 = math.exp %778 : vector<8x8xf32>
    %cst_242 = arith.constant dense<0.000000e+00> : vector<8xf32>
    %780 = vector.multi_reduction <add>, %779, %cst_242 [1] : vector<8x8xf32> to vector<8xf32>
    %781 = vector.shape_cast %780 : vector<8xf32> to vector<8x1xf32>
    %782 = tpu.reciprocal %781 {approx = true} : vector<8x1xf32> -> vector<8x1xf32>
    %783 = vector.broadcast %782 : vector<8x1xf32> to vector<8x8xf32>
    %784 = arith.mulf %779, %783 : vector<8x8xf32>
    %785 = arith.truncf %784 : vector<8x8xf32> to vector<8x8xbf16>
    %cst_243 = arith.constant dense<0.000000e+00> : vector<8x4xf32>
    %786 = tpu.matmul %785, %732, %cst_243 {dimension_numbers = #tpu.dot_dimension_numbers<[1], [0], [0], [1], [0, 0, 1, 1], [], []>} : vector<8x8xbf16>, vector<8x4xbf16>, vector<8x4xf32> -> vector<8x4xf32>
    %787 = arith.truncf %786 : vector<8x4xf32> to vector<8x4xbf16>
    %c8_244 = arith.constant 8 : index
    %c12_245 = arith.constant 12 : index
    %788 = vector.load %arg20[%c8_244, %c12_245] : memref<16x32xbf16, #tpu.memory_space<vmem>>, vector<8x4xbf16>
    tpu.vector_store %arg20[%c8_244, %c12_245], %787 {strides = array<i32>} : memref<16x32xbf16, #tpu.memory_space<vmem>>, vector<8x4xbf16>,
    %789 = vector.extract_strided_slice %35 {offsets = [8, 16], sizes = [8, 4], strides = [1, 1]} : vector<16x96xf32> to vector<8x4xf32>
    %790 = arith.truncf %789 : vector<8x4xf32> to vector<8x4xbf16>
    %791 = vector.extract_strided_slice %35 {offsets = [8, 48], sizes = [8, 4], strides = [1, 1]} : vector<16x96xf32> to vector<8x4xf32>
    %792 = arith.truncf %791 : vector<8x4xf32> to vector<8x4xbf16>
    %793 = vector.extract_strided_slice %35 {offsets = [8, 80], sizes = [8, 4], strides = [1, 1]} : vector<16x96xf32> to vector<8x4xf32>
    %794 = arith.truncf %793 : vector<8x4xf32> to vector<8x4xbf16>
    %cst_246 = arith.constant dense<0.000000e+00> : vector<8x8xf32>
    %795 = tpu.matmul %790, %792, %cst_246 {dimension_numbers = #tpu.dot_dimension_numbers<[1], [1], [0], [0], [0, 0, 1, 0], [], []>} : vector<8x4xbf16>, vector<8x4xbf16>, vector<8x8xf32> -> vector<8x8xf32>
    %cst_247 = arith.constant dense<0.000000e+00> : vector<8x15xf32>
    %796 = tpu.matmul %790, %37, %cst_247 {dimension_numbers = #tpu.dot_dimension_numbers<[1], [0], [0], [1], [0, 0, 1, 1], [], []>} : vector<8x4xbf16>, vector<4x15xbf16>, vector<8x15xf32> -> vector<8x15xf32>
    %797 = vector.extract_strided_slice %796 {offsets = [0, 1], sizes = [8, 14], strides = [1, 1]} : vector<8x15xf32> to vector<8x14xf32>
    %cst_248 = arith.constant 0.000000e+00 : f32
    %798 = vector.broadcast %cst_248 : f32 to vector<8x1xf32>
    %799 = tpu.concatenate %797, %798 in 1 : vector<8x14xf32>, vector<8x1xf32> -> vector<8x15xf32>
    %c0_i32_249 = arith.constant 0 : i32
    %800 = vector.broadcast %c0_i32_249 : i32 to vector<8x1xi32>
    %801 = arith.shrsi %40, %800 : vector<8x1xi32>
    %c1_i32_250 = arith.constant 1 : i32
    %802 = vector.broadcast %c1_i32_250 : i32 to vector<8x1xi32>
    %803 = arith.andi %801, %802 : vector<8x1xi32>
    %c1_i32_251 = arith.constant 1 : i32
    %804 = vector.broadcast %c1_i32_251 : i32 to vector<8x1xi32>
    %805 = arith.cmpi eq, %803, %804 : vector<8x1xi32>
    %806 = vector.shape_cast %805 : vector<8x1xi1> to vector<8x1xi1>
    %807 = vector.broadcast %806 : vector<8x1xi1> to vector<8x15xi1>
    %808 = arith.select %807, %799, %796 : vector<8x15xi1>, vector<8x15xf32>
    %809 = vector.extract_strided_slice %808 {offsets = [0, 2], sizes = [8, 13], strides = [1, 1]} : vector<8x15xf32> to vector<8x13xf32>
    %cst_252 = arith.constant 0.000000e+00 : f32
    %810 = vector.broadcast %cst_252 : f32 to vector<8x2xf32>
    %811 = tpu.concatenate %809, %810 in 1 : vector<8x13xf32>, vector<8x2xf32> -> vector<8x15xf32>
    %c1_i32_253 = arith.constant 1 : i32
    %812 = vector.broadcast %c1_i32_253 : i32 to vector<8x1xi32>
    %813 = arith.shrsi %40, %812 : vector<8x1xi32>
    %c1_i32_254 = arith.constant 1 : i32
    %814 = vector.broadcast %c1_i32_254 : i32 to vector<8x1xi32>
    %815 = arith.andi %813, %814 : vector<8x1xi32>
    %c1_i32_255 = arith.constant 1 : i32
    %816 = vector.broadcast %c1_i32_255 : i32 to vector<8x1xi32>
    %817 = arith.cmpi eq, %815, %816 : vector<8x1xi32>
    %818 = vector.shape_cast %817 : vector<8x1xi1> to vector<8x1xi1>
    %819 = vector.broadcast %818 : vector<8x1xi1> to vector<8x15xi1>
    %820 = arith.select %819, %811, %808 : vector<8x15xi1>, vector<8x15xf32>
    %821 = vector.extract_strided_slice %820 {offsets = [0, 4], sizes = [8, 11], strides = [1, 1]} : vector<8x15xf32> to vector<8x11xf32>
    %cst_256 = arith.constant 0.000000e+00 : f32
    %822 = vector.broadcast %cst_256 : f32 to vector<8x4xf32>
    %823 = tpu.concatenate %821, %822 in 1 : vector<8x11xf32>, vector<8x4xf32> -> vector<8x15xf32>
    %c2_i32_257 = arith.constant 2 : i32
    %824 = vector.broadcast %c2_i32_257 : i32 to vector<8x1xi32>
    %825 = arith.shrsi %40, %824 : vector<8x1xi32>
    %c1_i32_258 = arith.constant 1 : i32
    %826 = vector.broadcast %c1_i32_258 : i32 to vector<8x1xi32>
    %827 = arith.andi %825, %826 : vector<8x1xi32>
    %c1_i32_259 = arith.constant 1 : i32
    %828 = vector.broadcast %c1_i32_259 : i32 to vector<8x1xi32>
    %829 = arith.cmpi eq, %827, %828 : vector<8x1xi32>
    %830 = vector.shape_cast %829 : vector<8x1xi1> to vector<8x1xi1>
    %831 = vector.broadcast %830 : vector<8x1xi1> to vector<8x15xi1>
    %832 = arith.select %831, %823, %820 : vector<8x15xi1>, vector<8x15xf32>
    %833 = vector.extract_strided_slice %832 {offsets = [0, 0], sizes = [8, 8], strides = [1, 1]} : vector<8x15xf32> to vector<8x8xf32>
    %834 = arith.addf %795, %833 : vector<8x8xf32>
    %835 = vector.broadcast %540 : vector<1x8xf32> to vector<8x8xf32>
    %836 = arith.addf %834, %835 : vector<8x8xf32>
    %cst_260 = arith.constant dense<0xFF800000> : vector<8xf32>
    %837 = vector.multi_reduction <maximumf>, %836, %cst_260 [1] : vector<8x8xf32> to vector<8xf32>
    %838 = vector.shape_cast %837 : vector<8xf32> to vector<8x1xf32>
    %839 = vector.broadcast %838 : vector<8x1xf32> to vector<8x8xf32>
    %840 = arith.subf %836, %839 : vector<8x8xf32>
    %841 = math.exp %840 : vector<8x8xf32>
    %cst_261 = arith.constant dense<0.000000e+00> : vector<8xf32>
    %842 = vector.multi_reduction <add>, %841, %cst_261 [1] : vector<8x8xf32> to vector<8xf32>
    %843 = vector.shape_cast %842 : vector<8xf32> to vector<8x1xf32>
    %844 = tpu.reciprocal %843 {approx = true} : vector<8x1xf32> -> vector<8x1xf32>
    %845 = vector.broadcast %844 : vector<8x1xf32> to vector<8x8xf32>
    %846 = arith.mulf %841, %845 : vector<8x8xf32>
    %847 = arith.truncf %846 : vector<8x8xf32> to vector<8x8xbf16>
    %cst_262 = arith.constant dense<0.000000e+00> : vector<8x4xf32>
    %848 = tpu.matmul %847, %794, %cst_262 {dimension_numbers = #tpu.dot_dimension_numbers<[1], [0], [0], [1], [0, 0, 1, 1], [], []>} : vector<8x8xbf16>, vector<8x4xbf16>, vector<8x4xf32> -> vector<8x4xf32>
    %849 = arith.truncf %848 : vector<8x4xf32> to vector<8x4xbf16>
    %c8_263 = arith.constant 8 : index
    %c16_264 = arith.constant 16 : index
    %850 = vector.load %arg20[%c8_263, %c16_264] : memref<16x32xbf16, #tpu.memory_space<vmem>>, vector<8x4xbf16>
    tpu.vector_store %arg20[%c8_263, %c16_264], %849 {strides = array<i32>} : memref<16x32xbf16, #tpu.memory_space<vmem>>, vector<8x4xbf16>,
    %851 = vector.extract_strided_slice %35 {offsets = [8, 20], sizes = [8, 4], strides = [1, 1]} : vector<16x96xf32> to vector<8x4xf32>
    %852 = arith.truncf %851 : vector<8x4xf32> to vector<8x4xbf16>
    %853 = vector.extract_strided_slice %35 {offsets = [8, 52], sizes = [8, 4], strides = [1, 1]} : vector<16x96xf32> to vector<8x4xf32>
    %854 = arith.truncf %853 : vector<8x4xf32> to vector<8x4xbf16>
    %855 = vector.extract_strided_slice %35 {offsets = [8, 84], sizes = [8, 4], strides = [1, 1]} : vector<16x96xf32> to vector<8x4xf32>
    %856 = arith.truncf %855 : vector<8x4xf32> to vector<8x4xbf16>
    %cst_265 = arith.constant dense<0.000000e+00> : vector<8x8xf32>
    %857 = tpu.matmul %852, %854, %cst_265 {dimension_numbers = #tpu.dot_dimension_numbers<[1], [1], [0], [0], [0, 0, 1, 0], [], []>} : vector<8x4xbf16>, vector<8x4xbf16>, vector<8x8xf32> -> vector<8x8xf32>
    %cst_266 = arith.constant dense<0.000000e+00> : vector<8x15xf32>
    %858 = tpu.matmul %852, %37, %cst_266 {dimension_numbers = #tpu.dot_dimension_numbers<[1], [0], [0], [1], [0, 0, 1, 1], [], []>} : vector<8x4xbf16>, vector<4x15xbf16>, vector<8x15xf32> -> vector<8x15xf32>
    %859 = vector.extract_strided_slice %858 {offsets = [0, 1], sizes = [8, 14], strides = [1, 1]} : vector<8x15xf32> to vector<8x14xf32>
    %cst_267 = arith.constant 0.000000e+00 : f32
    %860 = vector.broadcast %cst_267 : f32 to vector<8x1xf32>
    %861 = tpu.concatenate %859, %860 in 1 : vector<8x14xf32>, vector<8x1xf32> -> vector<8x15xf32>
    %c0_i32_268 = arith.constant 0 : i32
    %862 = vector.broadcast %c0_i32_268 : i32 to vector<8x1xi32>
    %863 = arith.shrsi %40, %862 : vector<8x1xi32>
    %c1_i32_269 = arith.constant 1 : i32
    %864 = vector.broadcast %c1_i32_269 : i32 to vector<8x1xi32>
    %865 = arith.andi %863, %864 : vector<8x1xi32>
    %c1_i32_270 = arith.constant 1 : i32
    %866 = vector.broadcast %c1_i32_270 : i32 to vector<8x1xi32>
    %867 = arith.cmpi eq, %865, %866 : vector<8x1xi32>
    %868 = vector.shape_cast %867 : vector<8x1xi1> to vector<8x1xi1>
    %869 = vector.broadcast %868 : vector<8x1xi1> to vector<8x15xi1>
    %870 = arith.select %869, %861, %858 : vector<8x15xi1>, vector<8x15xf32>
    %871 = vector.extract_strided_slice %870 {offsets = [0, 2], sizes = [8, 13], strides = [1, 1]} : vector<8x15xf32> to vector<8x13xf32>
    %cst_271 = arith.constant 0.000000e+00 : f32
    %872 = vector.broadcast %cst_271 : f32 to vector<8x2xf32>
    %873 = tpu.concatenate %871, %872 in 1 : vector<8x13xf32>, vector<8x2xf32> -> vector<8x15xf32>
    %c1_i32_272 = arith.constant 1 : i32
    %874 = vector.broadcast %c1_i32_272 : i32 to vector<8x1xi32>
    %875 = arith.shrsi %40, %874 : vector<8x1xi32>
    %c1_i32_273 = arith.constant 1 : i32
    %876 = vector.broadcast %c1_i32_273 : i32 to vector<8x1xi32>
    %877 = arith.andi %875, %876 : vector<8x1xi32>
    %c1_i32_274 = arith.constant 1 : i32
    %878 = vector.broadcast %c1_i32_274 : i32 to vector<8x1xi32>
    %879 = arith.cmpi eq, %877, %878 : vector<8x1xi32>
    %880 = vector.shape_cast %879 : vector<8x1xi1> to vector<8x1xi1>
    %881 = vector.broadcast %880 : vector<8x1xi1> to vector<8x15xi1>
    %882 = arith.select %881, %873, %870 : vector<8x15xi1>, vector<8x15xf32>
    %883 = vector.extract_strided_slice %882 {offsets = [0, 4], sizes = [8, 11], strides = [1, 1]} : vector<8x15xf32> to vector<8x11xf32>
    %cst_275 = arith.constant 0.000000e+00 : f32
    %884 = vector.broadcast %cst_275 : f32 to vector<8x4xf32>
    %885 = tpu.concatenate %883, %884 in 1 : vector<8x11xf32>, vector<8x4xf32> -> vector<8x15xf32>
    %c2_i32_276 = arith.constant 2 : i32
    %886 = vector.broadcast %c2_i32_276 : i32 to vector<8x1xi32>
    %887 = arith.shrsi %40, %886 : vector<8x1xi32>
    %c1_i32_277 = arith.constant 1 : i32
    %888 = vector.broadcast %c1_i32_277 : i32 to vector<8x1xi32>
    %889 = arith.andi %887, %888 : vector<8x1xi32>
    %c1_i32_278 = arith.constant 1 : i32
    %890 = vector.broadcast %c1_i32_278 : i32 to vector<8x1xi32>
    %891 = arith.cmpi eq, %889, %890 : vector<8x1xi32>
    %892 = vector.shape_cast %891 : vector<8x1xi1> to vector<8x1xi1>
    %893 = vector.broadcast %892 : vector<8x1xi1> to vector<8x15xi1>
    %894 = arith.select %893, %885, %882 : vector<8x15xi1>, vector<8x15xf32>
    %895 = vector.extract_strided_slice %894 {offsets = [0, 0], sizes = [8, 8], strides = [1, 1]} : vector<8x15xf32> to vector<8x8xf32>
    %896 = arith.addf %857, %895 : vector<8x8xf32>
    %897 = vector.broadcast %540 : vector<1x8xf32> to vector<8x8xf32>
    %898 = arith.addf %896, %897 : vector<8x8xf32>
    %cst_279 = arith.constant dense<0xFF800000> : vector<8xf32>
    %899 = vector.multi_reduction <maximumf>, %898, %cst_279 [1] : vector<8x8xf32> to vector<8xf32>
    %900 = vector.shape_cast %899 : vector<8xf32> to vector<8x1xf32>
    %901 = vector.broadcast %900 : vector<8x1xf32> to vector<8x8xf32>
    %902 = arith.subf %898, %901 : vector<8x8xf32>
    %903 = math.exp %902 : vector<8x8xf32>
    %cst_280 = arith.constant dense<0.000000e+00> : vector<8xf32>
    %904 = vector.multi_reduction <add>, %903, %cst_280 [1] : vector<8x8xf32> to vector<8xf32>
    %905 = vector.shape_cast %904 : vector<8xf32> to vector<8x1xf32>
    %906 = tpu.reciprocal %905 {approx = true} : vector<8x1xf32> -> vector<8x1xf32>
    %907 = vector.broadcast %906 : vector<8x1xf32> to vector<8x8xf32>
    %908 = arith.mulf %903, %907 : vector<8x8xf32>
    %909 = arith.truncf %908 : vector<8x8xf32> to vector<8x8xbf16>
    %cst_281 = arith.constant dense<0.000000e+00> : vector<8x4xf32>
    %910 = tpu.matmul %909, %856, %cst_281 {dimension_numbers = #tpu.dot_dimension_numbers<[1], [0], [0], [1], [0, 0, 1, 1], [], []>} : vector<8x8xbf16>, vector<8x4xbf16>, vector<8x4xf32> -> vector<8x4xf32>
    %911 = arith.truncf %910 : vector<8x4xf32> to vector<8x4xbf16>
    %c8_282 = arith.constant 8 : index
    %c20_283 = arith.constant 20 : index
    %912 = vector.load %arg20[%c8_282, %c20_283] : memref<16x32xbf16, #tpu.memory_space<vmem>>, vector<8x4xbf16>
    tpu.vector_store %arg20[%c8_282, %c20_283], %911 {strides = array<i32>} : memref<16x32xbf16, #tpu.memory_space<vmem>>, vector<8x4xbf16>,
    %913 = vector.extract_strided_slice %35 {offsets = [8, 24], sizes = [8, 4], strides = [1, 1]} : vector<16x96xf32> to vector<8x4xf32>
    %914 = arith.truncf %913 : vector<8x4xf32> to vector<8x4xbf16>
    %915 = vector.extract_strided_slice %35 {offsets = [8, 56], sizes = [8, 4], strides = [1, 1]} : vector<16x96xf32> to vector<8x4xf32>
    %916 = arith.truncf %915 : vector<8x4xf32> to vector<8x4xbf16>
    %917 = vector.extract_strided_slice %35 {offsets = [8, 88], sizes = [8, 4], strides = [1, 1]} : vector<16x96xf32> to vector<8x4xf32>
    %918 = arith.truncf %917 : vector<8x4xf32> to vector<8x4xbf16>
    %cst_284 = arith.constant dense<0.000000e+00> : vector<8x8xf32>
    %919 = tpu.matmul %914, %916, %cst_284 {dimension_numbers = #tpu.dot_dimension_numbers<[1], [1], [0], [0], [0, 0, 1, 0], [], []>} : vector<8x4xbf16>, vector<8x4xbf16>, vector<8x8xf32> -> vector<8x8xf32>
    %cst_285 = arith.constant dense<0.000000e+00> : vector<8x15xf32>
    %920 = tpu.matmul %914, %37, %cst_285 {dimension_numbers = #tpu.dot_dimension_numbers<[1], [0], [0], [1], [0, 0, 1, 1], [], []>} : vector<8x4xbf16>, vector<4x15xbf16>, vector<8x15xf32> -> vector<8x15xf32>
    %921 = vector.extract_strided_slice %920 {offsets = [0, 1], sizes = [8, 14], strides = [1, 1]} : vector<8x15xf32> to vector<8x14xf32>
    %cst_286 = arith.constant 0.000000e+00 : f32
    %922 = vector.broadcast %cst_286 : f32 to vector<8x1xf32>
    %923 = tpu.concatenate %921, %922 in 1 : vector<8x14xf32>, vector<8x1xf32> -> vector<8x15xf32>
    %c0_i32_287 = arith.constant 0 : i32
    %924 = vector.broadcast %c0_i32_287 : i32 to vector<8x1xi32>
    %925 = arith.shrsi %40, %924 : vector<8x1xi32>
    %c1_i32_288 = arith.constant 1 : i32
    %926 = vector.broadcast %c1_i32_288 : i32 to vector<8x1xi32>
    %927 = arith.andi %925, %926 : vector<8x1xi32>
    %c1_i32_289 = arith.constant 1 : i32
    %928 = vector.broadcast %c1_i32_289 : i32 to vector<8x1xi32>
    %929 = arith.cmpi eq, %927, %928 : vector<8x1xi32>
    %930 = vector.shape_cast %929 : vector<8x1xi1> to vector<8x1xi1>
    %931 = vector.broadcast %930 : vector<8x1xi1> to vector<8x15xi1>
    %932 = arith.select %931, %923, %920 : vector<8x15xi1>, vector<8x15xf32>
    %933 = vector.extract_strided_slice %932 {offsets = [0, 2], sizes = [8, 13], strides = [1, 1]} : vector<8x15xf32> to vector<8x13xf32>
    %cst_290 = arith.constant 0.000000e+00 : f32
    %934 = vector.broadcast %cst_290 : f32 to vector<8x2xf32>
    %935 = tpu.concatenate %933, %934 in 1 : vector<8x13xf32>, vector<8x2xf32> -> vector<8x15xf32>
    %c1_i32_291 = arith.constant 1 : i32
    %936 = vector.broadcast %c1_i32_291 : i32 to vector<8x1xi32>
    %937 = arith.shrsi %40, %936 : vector<8x1xi32>
    %c1_i32_292 = arith.constant 1 : i32
    %938 = vector.broadcast %c1_i32_292 : i32 to vector<8x1xi32>
    %939 = arith.andi %937, %938 : vector<8x1xi32>
    %c1_i32_293 = arith.constant 1 : i32
    %940 = vector.broadcast %c1_i32_293 : i32 to vector<8x1xi32>
    %941 = arith.cmpi eq, %939, %940 : vector<8x1xi32>
    %942 = vector.shape_cast %941 : vector<8x1xi1> to vector<8x1xi1>
    %943 = vector.broadcast %942 : vector<8x1xi1> to vector<8x15xi1>
    %944 = arith.select %943, %935, %932 : vector<8x15xi1>, vector<8x15xf32>
    %945 = vector.extract_strided_slice %944 {offsets = [0, 4], sizes = [8, 11], strides = [1, 1]} : vector<8x15xf32> to vector<8x11xf32>
    %cst_294 = arith.constant 0.000000e+00 : f32
    %946 = vector.broadcast %cst_294 : f32 to vector<8x4xf32>
    %947 = tpu.concatenate %945, %946 in 1 : vector<8x11xf32>, vector<8x4xf32> -> vector<8x15xf32>
    %c2_i32_295 = arith.constant 2 : i32
    %948 = vector.broadcast %c2_i32_295 : i32 to vector<8x1xi32>
    %949 = arith.shrsi %40, %948 : vector<8x1xi32>
    %c1_i32_296 = arith.constant 1 : i32
    %950 = vector.broadcast %c1_i32_296 : i32 to vector<8x1xi32>
    %951 = arith.andi %949, %950 : vector<8x1xi32>
    %c1_i32_297 = arith.constant 1 : i32
    %952 = vector.broadcast %c1_i32_297 : i32 to vector<8x1xi32>
    %953 = arith.cmpi eq, %951, %952 : vector<8x1xi32>
    %954 = vector.shape_cast %953 : vector<8x1xi1> to vector<8x1xi1>
    %955 = vector.broadcast %954 : vector<8x1xi1> to vector<8x15xi1>
    %956 = arith.select %955, %947, %944 : vector<8x15xi1>, vector<8x15xf32>
    %957 = vector.extract_strided_slice %956 {offsets = [0, 0], sizes = [8, 8], strides = [1, 1]} : vector<8x15xf32> to vector<8x8xf32>
    %958 = arith.addf %919, %957 : vector<8x8xf32>
    %959 = vector.broadcast %540 : vector<1x8xf32> to vector<8x8xf32>
    %960 = arith.addf %958, %959 : vector<8x8xf32>
    %cst_298 = arith.constant dense<0xFF800000> : vector<8xf32>
    %961 = vector.multi_reduction <maximumf>, %960, %cst_298 [1] : vector<8x8xf32> to vector<8xf32>
    %962 = vector.shape_cast %961 : vector<8xf32> to vector<8x1xf32>
    %963 = vector.broadcast %962 : vector<8x1xf32> to vector<8x8xf32>
    %964 = arith.subf %960, %963 : vector<8x8xf32>
    %965 = math.exp %964 : vector<8x8xf32>
    %cst_299 = arith.constant dense<0.000000e+00> : vector<8xf32>
    %966 = vector.multi_reduction <add>, %965, %cst_299 [1] : vector<8x8xf32> to vector<8xf32>
    %967 = vector.shape_cast %966 : vector<8xf32> to vector<8x1xf32>
    %968 = tpu.reciprocal %967 {approx = true} : vector<8x1xf32> -> vector<8x1xf32>
    %969 = vector.broadcast %968 : vector<8x1xf32> to vector<8x8xf32>
    %970 = arith.mulf %965, %969 : vector<8x8xf32>
    %971 = arith.truncf %970 : vector<8x8xf32> to vector<8x8xbf16>
    %cst_300 = arith.constant dense<0.000000e+00> : vector<8x4xf32>
    %972 = tpu.matmul %971, %918, %cst_300 {dimension_numbers = #tpu.dot_dimension_numbers<[1], [0], [0], [1], [0, 0, 1, 1], [], []>} : vector<8x8xbf16>, vector<8x4xbf16>, vector<8x4xf32> -> vector<8x4xf32>
    %973 = arith.truncf %972 : vector<8x4xf32> to vector<8x4xbf16>
    %c8_301 = arith.constant 8 : index
    %c24_302 = arith.constant 24 : index
    %974 = vector.load %arg20[%c8_301, %c24_302] : memref<16x32xbf16, #tpu.memory_space<vmem>>, vector<8x4xbf16>
    tpu.vector_store %arg20[%c8_301, %c24_302], %973 {strides = array<i32>} : memref<16x32xbf16, #tpu.memory_space<vmem>>, vector<8x4xbf16>,
    %975 = vector.extract_strided_slice %35 {offsets = [8, 28], sizes = [8, 4], strides = [1, 1]} : vector<16x96xf32> to vector<8x4xf32>
    %976 = arith.truncf %975 : vector<8x4xf32> to vector<8x4xbf16>
    %977 = vector.extract_strided_slice %35 {offsets = [8, 60], sizes = [8, 4], strides = [1, 1]} : vector<16x96xf32> to vector<8x4xf32>
    %978 = arith.truncf %977 : vector<8x4xf32> to vector<8x4xbf16>
    %979 = vector.extract_strided_slice %35 {offsets = [8, 92], sizes = [8, 4], strides = [1, 1]} : vector<16x96xf32> to vector<8x4xf32>
    %980 = arith.truncf %979 : vector<8x4xf32> to vector<8x4xbf16>
    %cst_303 = arith.constant dense<0.000000e+00> : vector<8x8xf32>
    %981 = tpu.matmul %976, %978, %cst_303 {dimension_numbers = #tpu.dot_dimension_numbers<[1], [1], [0], [0], [0, 0, 1, 0], [], []>} : vector<8x4xbf16>, vector<8x4xbf16>, vector<8x8xf32> -> vector<8x8xf32>
    %cst_304 = arith.constant dense<0.000000e+00> : vector<8x15xf32>
    %982 = tpu.matmul %976, %37, %cst_304 {dimension_numbers = #tpu.dot_dimension_numbers<[1], [0], [0], [1], [0, 0, 1, 1], [], []>} : vector<8x4xbf16>, vector<4x15xbf16>, vector<8x15xf32> -> vector<8x15xf32>
    %983 = vector.extract_strided_slice %982 {offsets = [0, 1], sizes = [8, 14], strides = [1, 1]} : vector<8x15xf32> to vector<8x14xf32>
    %cst_305 = arith.constant 0.000000e+00 : f32
    %984 = vector.broadcast %cst_305 : f32 to vector<8x1xf32>
    %985 = tpu.concatenate %983, %984 in 1 : vector<8x14xf32>, vector<8x1xf32> -> vector<8x15xf32>
    %c0_i32_306 = arith.constant 0 : i32
    %986 = vector.broadcast %c0_i32_306 : i32 to vector<8x1xi32>
    %987 = arith.shrsi %40, %986 : vector<8x1xi32>
    %c1_i32_307 = arith.constant 1 : i32
    %988 = vector.broadcast %c1_i32_307 : i32 to vector<8x1xi32>
    %989 = arith.andi %987, %988 : vector<8x1xi32>
    %c1_i32_308 = arith.constant 1 : i32
    %990 = vector.broadcast %c1_i32_308 : i32 to vector<8x1xi32>
    %991 = arith.cmpi eq, %989, %990 : vector<8x1xi32>
    %992 = vector.shape_cast %991 : vector<8x1xi1> to vector<8x1xi1>
    %993 = vector.broadcast %992 : vector<8x1xi1> to vector<8x15xi1>
    %994 = arith.select %993, %985, %982 : vector<8x15xi1>, vector<8x15xf32>
    %995 = vector.extract_strided_slice %994 {offsets = [0, 2], sizes = [8, 13], strides = [1, 1]} : vector<8x15xf32> to vector<8x13xf32>
    %cst_309 = arith.constant 0.000000e+00 : f32
    %996 = vector.broadcast %cst_309 : f32 to vector<8x2xf32>
    %997 = tpu.concatenate %995, %996 in 1 : vector<8x13xf32>, vector<8x2xf32> -> vector<8x15xf32>
    %c1_i32_310 = arith.constant 1 : i32
    %998 = vector.broadcast %c1_i32_310 : i32 to vector<8x1xi32>
    %999 = arith.shrsi %40, %998 : vector<8x1xi32>
    %c1_i32_311 = arith.constant 1 : i32
    %1000 = vector.broadcast %c1_i32_311 : i32 to vector<8x1xi32>
    %1001 = arith.andi %999, %1000 : vector<8x1xi32>
    %c1_i32_312 = arith.constant 1 : i32
    %1002 = vector.broadcast %c1_i32_312 : i32 to vector<8x1xi32>
    %1003 = arith.cmpi eq, %1001, %1002 : vector<8x1xi32>
    %1004 = vector.shape_cast %1003 : vector<8x1xi1> to vector<8x1xi1>
    %1005 = vector.broadcast %1004 : vector<8x1xi1> to vector<8x15xi1>
    %1006 = arith.select %1005, %997, %994 : vector<8x15xi1>, vector<8x15xf32>
    %1007 = vector.extract_strided_slice %1006 {offsets = [0, 4], sizes = [8, 11], strides = [1, 1]} : vector<8x15xf32> to vector<8x11xf32>
    %cst_313 = arith.constant 0.000000e+00 : f32
    %1008 = vector.broadcast %cst_313 : f32 to vector<8x4xf32>
    %1009 = tpu.concatenate %1007, %1008 in 1 : vector<8x11xf32>, vector<8x4xf32> -> vector<8x15xf32>
    %c2_i32_314 = arith.constant 2 : i32
    %1010 = vector.broadcast %c2_i32_314 : i32 to vector<8x1xi32>
    %1011 = arith.shrsi %40, %1010 : vector<8x1xi32>
    %c1_i32_315 = arith.constant 1 : i32
    %1012 = vector.broadcast %c1_i32_315 : i32 to vector<8x1xi32>
    %1013 = arith.andi %1011, %1012 : vector<8x1xi32>
    %c1_i32_316 = arith.constant 1 : i32
    %1014 = vector.broadcast %c1_i32_316 : i32 to vector<8x1xi32>
    %1015 = arith.cmpi eq, %1013, %1014 : vector<8x1xi32>
    %1016 = vector.shape_cast %1015 : vector<8x1xi1> to vector<8x1xi1>
    %1017 = vector.broadcast %1016 : vector<8x1xi1> to vector<8x15xi1>
    %1018 = arith.select %1017, %1009, %1006 : vector<8x15xi1>, vector<8x15xf32>
    %1019 = vector.extract_strided_slice %1018 {offsets = [0, 0], sizes = [8, 8], strides = [1, 1]} : vector<8x15xf32> to vector<8x8xf32>
    %1020 = arith.addf %981, %1019 : vector<8x8xf32>
    %1021 = vector.broadcast %540 : vector<1x8xf32> to vector<8x8xf32>
    %1022 = arith.addf %1020, %1021 : vector<8x8xf32>
    %cst_317 = arith.constant dense<0xFF800000> : vector<8xf32>
    %1023 = vector.multi_reduction <maximumf>, %1022, %cst_317 [1] : vector<8x8xf32> to vector<8xf32>
    %1024 = vector.shape_cast %1023 : vector<8xf32> to vector<8x1xf32>
    %1025 = vector.broadcast %1024 : vector<8x1xf32> to vector<8x8xf32>
    %1026 = arith.subf %1022, %1025 : vector<8x8xf32>
    %1027 = math.exp %1026 : vector<8x8xf32>
    %cst_318 = arith.constant dense<0.000000e+00> : vector<8xf32>
    %1028 = vector.multi_reduction <add>, %1027, %cst_318 [1] : vector<8x8xf32> to vector<8xf32>
    %1029 = vector.shape_cast %1028 : vector<8xf32> to vector<8x1xf32>
    %1030 = tpu.reciprocal %1029 {approx = true} : vector<8x1xf32> -> vector<8x1xf32>
    %1031 = vector.broadcast %1030 : vector<8x1xf32> to vector<8x8xf32>
    %1032 = arith.mulf %1027, %1031 : vector<8x8xf32>
    %1033 = arith.truncf %1032 : vector<8x8xf32> to vector<8x8xbf16>
    %cst_319 = arith.constant dense<0.000000e+00> : vector<8x4xf32>
    %1034 = tpu.matmul %1033, %980, %cst_319 {dimension_numbers = #tpu.dot_dimension_numbers<[1], [0], [0], [1], [0, 0, 1, 1], [], []>} : vector<8x8xbf16>, vector<8x4xbf16>, vector<8x4xf32> -> vector<8x4xf32>
    %1035 = arith.truncf %1034 : vector<8x4xf32> to vector<8x4xbf16>
    %c8_320 = arith.constant 8 : index
    %c28_321 = arith.constant 28 : index
    %1036 = vector.load %arg20[%c8_320, %c28_321] : memref<16x32xbf16, #tpu.memory_space<vmem>>, vector<8x4xbf16>
    tpu.vector_store %arg20[%c8_320, %c28_321], %1035 {strides = array<i32>} : memref<16x32xbf16, #tpu.memory_space<vmem>>, vector<8x4xbf16>,
    %c0_322 = arith.constant 0 : index
    %c0_323 = arith.constant 0 : index
    %1037 = vector.load %arg20[%c0_322, %c0_323] : memref<16x32xbf16, #tpu.memory_space<vmem>>, vector<16x32xbf16>
    %c0_324 = arith.constant 0 : index
    %c0_325 = arith.constant 0 : index
    %c0_326 = arith.constant 0 : index
    %1038 = vector.load %arg9[%c0_324, %c0_325, %c0_326] : memref<1x32x32xbf16, #tpu.memory_space<vmem>>, vector<1x32x32xbf16>
    %1039 = vector.shape_cast %1038 : vector<1x32x32xbf16> to vector<32x32xbf16>
    %cst_327 = arith.constant dense<0.000000e+00> : vector<16x32xf32>
    %1040 = tpu.matmul %1037, %1039, %cst_327 {dimension_numbers = #tpu.dot_dimension_numbers<[1], [0], [0], [1], [0, 0, 1, 1], [], []>} : vector<16x32xbf16>, vector<32x32xbf16>, vector<16x32xf32> -> vector<16x32xf32>
    %c0_328 = arith.constant 0 : index
    %c0_329 = arith.constant 0 : index
    %c0_330 = arith.constant 0 : index
    %1041 = vector.load %arg10[%c0_328, %c0_329, %c0_330] : memref<1x1x32xf32, #tpu.memory_space<vmem>>, vector<1x1x32xf32>
    %1042 = vector.shape_cast %1041 : vector<1x1x32xf32> to vector<1x32xf32>
    %1043 = vector.broadcast %1042 : vector<1x32xf32> to vector<16x32xf32>
    %1044 = arith.addf %1040, %1043 : vector<16x32xf32>
    %1045 = arith.addf %1044, %3 : vector<16x32xf32>
    %c0_331 = arith.constant 0 : index
    %c0_332 = arith.constant 0 : index
    %c0_333 = arith.constant 0 : index
    %1046 = vector.load %arg11[%c0_331, %c0_332, %c0_333] : memref<1x1x32xf32, #tpu.memory_space<vmem>>, vector<1x1x32xf32>
    %1047 = vector.shape_cast %1046 : vector<1x1x32xf32> to vector<1x32xf32>
    %c0_334 = arith.constant 0 : index
    %c0_335 = arith.constant 0 : index
    %c0_336 = arith.constant 0 : index
    %1048 = vector.load %arg12[%c0_334, %c0_335, %c0_336] : memref<1x1x32xf32, #tpu.memory_space<vmem>>, vector<1x1x32xf32>
    %1049 = vector.shape_cast %1048 : vector<1x1x32xf32> to vector<1x32xf32>
    %cst_337 = arith.constant dense<0.000000e+00> : vector<16xf32>
    %1050 = vector.multi_reduction <add>, %1045, %cst_337 [1] : vector<16x32xf32> to vector<16xf32>
    %1051 = vector.shape_cast %1050 : vector<16xf32> to vector<16x1xf32>
    %cst_338 = arith.constant 3.200000e+01 : f32
    %1052 = vector.broadcast %cst_338 : f32 to vector<16x1xf32>
    %1053 = arith.divf %1051, %1052 : vector<16x1xf32>
    %1054 = vector.broadcast %1053 : vector<16x1xf32> to vector<16x32xf32>
    %1055 = arith.subf %1045, %1054 : vector<16x32xf32>
    %1056 = arith.mulf %1055, %1055 : vector<16x32xf32>
    %cst_339 = arith.constant dense<0.000000e+00> : vector<16xf32>
    %1057 = vector.multi_reduction <add>, %1056, %cst_339 [1] : vector<16x32xf32> to vector<16xf32>
    %1058 = vector.shape_cast %1057 : vector<16xf32> to vector<16x1xf32>
    %cst_340 = arith.constant 3.200000e+01 : f32
    %1059 = vector.broadcast %cst_340 : f32 to vector<16x1xf32>
    %1060 = arith.divf %1058, %1059 : vector<16x1xf32>
    %cst_341 = arith.constant 9.99999974E-6 : f32
    %1061 = vector.broadcast %cst_341 : f32 to vector<16x1xf32>
    %1062 = arith.addf %1060, %1061 : vector<16x1xf32>
    %1063 = math.rsqrt %1062 : vector<16x1xf32>
    %1064 = vector.broadcast %1063 : vector<16x1xf32> to vector<16x32xf32>
    %1065 = arith.mulf %1055, %1064 : vector<16x32xf32>
    %1066 = vector.broadcast %1047 : vector<1x32xf32> to vector<16x32xf32>
    %1067 = arith.mulf %1065, %1066 : vector<16x32xf32>
    %1068 = vector.broadcast %1049 : vector<1x32xf32> to vector<16x32xf32>
    %1069 = arith.addf %1067, %1068 : vector<16x32xf32>
    %1070 = arith.truncf %1069 : vector<16x32xf32> to vector<16x32xbf16>
    %c0_342 = arith.constant 0 : index
    %c0_343 = arith.constant 0 : index
    %c0_344 = arith.constant 0 : index
    %1071 = vector.load %arg13[%c0_342, %c0_343, %c0_344] : memref<1x32x128xbf16, #tpu.memory_space<vmem>>, vector<1x32x128xbf16>
    %1072 = vector.shape_cast %1071 : vector<1x32x128xbf16> to vector<32x128xbf16>
    %cst_345 = arith.constant dense<0.000000e+00> : vector<16x128xf32>
    %1073 = tpu.matmul %1070, %1072, %cst_345 {dimension_numbers = #tpu.dot_dimension_numbers<[1], [0], [0], [1], [0, 0, 1, 1], [], []>} : vector<16x32xbf16>, vector<32x128xbf16>, vector<16x128xf32> -> vector<16x128xf32>
    %c0_346 = arith.constant 0 : index
    %c0_347 = arith.constant 0 : index
    %c0_348 = arith.constant 0 : index
    %1074 = vector.load %arg14[%c0_346, %c0_347, %c0_348] : memref<1x1x128xf32, #tpu.memory_space<vmem>>, vector<1x1x128xf32>
    %1075 = vector.shape_cast %1074 : vector<1x1x128xf32> to vector<1x128xf32>
    %1076 = vector.broadcast %1075 : vector<1x128xf32> to vector<16x128xf32>
    %1077 = arith.addf %1073, %1076 : vector<16x128xf32>
    %cst_349 = arith.constant 0.000000e+00 : f32
    %1078 = vector.broadcast %cst_349 : f32 to vector<16x128xf32>
    %1079 = arith.maximumf %1077, %1078 : vector<16x128xf32>
    %1080 = arith.truncf %1079 : vector<16x128xf32> to vector<16x128xbf16>
    %c0_350 = arith.constant 0 : index
    %c0_351 = arith.constant 0 : index
    %c0_352 = arith.constant 0 : index
    %1081 = vector.load %arg15[%c0_350, %c0_351, %c0_352] : memref<1x128x32xbf16, #tpu.memory_space<vmem>>, vector<1x128x32xbf16>
    %1082 = vector.shape_cast %1081 : vector<1x128x32xbf16> to vector<128x32xbf16>
    %cst_353 = arith.constant dense<0.000000e+00> : vector<16x32xf32>
    %1083 = tpu.matmul %1080, %1082, %cst_353 {dimension_numbers = #tpu.dot_dimension_numbers<[1], [0], [0], [1], [0, 0, 1, 1], [], []>} : vector<16x128xbf16>, vector<128x32xbf16>, vector<16x32xf32> -> vector<16x32xf32>
    %c0_354 = arith.constant 0 : index
    %c0_355 = arith.constant 0 : index
    %c0_356 = arith.constant 0 : index
    %1084 = vector.load %arg16[%c0_354, %c0_355, %c0_356] : memref<1x1x32xf32, #tpu.memory_space<vmem>>, vector<1x1x32xf32>
    %1085 = vector.shape_cast %1084 : vector<1x1x32xf32> to vector<1x32xf32>
    %1086 = vector.broadcast %1085 : vector<1x32xf32> to vector<16x32xf32>
    %1087 = arith.addf %1083, %1086 : vector<16x32xf32>
    %1088 = arith.addf %1087, %1045 : vector<16x32xf32>
    %c1_i32_357 = arith.constant 1 : i32
    %1089 = arith.cmpi slt, %arg1, %c1_i32_357 : i32
    %1090 = arith.extui %1089 : i1 to i32
    %c0_i32_358 = arith.constant 0 : i32
    %1091 = arith.cmpi ne, %1090, %c0_i32_358 : i32
    scf.if %1091 {
      %c0_361 = arith.constant 0 : index
      %c0_362 = arith.constant 0 : index
      %1095 = vector.load %arg19[%c0_361, %c0_362] : memref<16x32xf32, #tpu.memory_space<vmem>>, vector<16x32xf32>
      tpu.vector_store %arg19[%c0_361, %c0_362], %1088 {strides = array<i32>} : memref<16x32xf32, #tpu.memory_space<vmem>>, vector<16x32xf32>,
    } else {
    }
    %c1_i32_359 = arith.constant 1 : i32
    %1092 = arith.cmpi eq, %arg1, %c1_i32_359 : i32
    %1093 = arith.extui %1092 : i1 to i32
    %c0_i32_360 = arith.constant 0 : i32
    %1094 = arith.cmpi ne, %1093, %c0_i32_360 : i32
    scf.if %1094 {
      %c0_361 = arith.constant 0 : index
      %c0_362 = arith.constant 0 : index
      %1095 = vector.load %arg17[%c0_361, %c0_362] : memref<1x32xf32, #tpu.memory_space<vmem>>, vector<1x32xf32>
      %c0_363 = arith.constant 0 : index
      %c0_364 = arith.constant 0 : index
      %1096 = vector.load %arg18[%c0_363, %c0_364] : memref<1x32xf32, #tpu.memory_space<vmem>>, vector<1x32xf32>
      %cst_365 = arith.constant dense<0.000000e+00> : vector<16xf32>
      %1097 = vector.multi_reduction <add>, %1088, %cst_365 [1] : vector<16x32xf32> to vector<16xf32>
      %1098 = vector.shape_cast %1097 : vector<16xf32> to vector<16x1xf32>
      %cst_366 = arith.constant 3.200000e+01 : f32
      %1099 = vector.broadcast %cst_366 : f32 to vector<16x1xf32>
      %1100 = arith.divf %1098, %1099 : vector<16x1xf32>
      %1101 = vector.broadcast %1100 : vector<16x1xf32> to vector<16x32xf32>
      %1102 = arith.subf %1088, %1101 : vector<16x32xf32>
      %1103 = arith.mulf %1102, %1102 : vector<16x32xf32>
      %cst_367 = arith.constant dense<0.000000e+00> : vector<16xf32>
      %1104 = vector.multi_reduction <add>, %1103, %cst_367 [1] : vector<16x32xf32> to vector<16xf32>
      %1105 = vector.shape_cast %1104 : vector<16xf32> to vector<16x1xf32>
      %cst_368 = arith.constant 3.200000e+01 : f32
      %1106 = vector.broadcast %cst_368 : f32 to vector<16x1xf32>
      %1107 = arith.divf %1105, %1106 : vector<16x1xf32>
      %cst_369 = arith.constant 9.99999974E-6 : f32
      %1108 = vector.broadcast %cst_369 : f32 to vector<16x1xf32>
      %1109 = arith.addf %1107, %1108 : vector<16x1xf32>
      %1110 = math.rsqrt %1109 : vector<16x1xf32>
      %1111 = vector.broadcast %1110 : vector<16x1xf32> to vector<16x32xf32>
      %1112 = arith.mulf %1102, %1111 : vector<16x32xf32>
      %1113 = vector.broadcast %1095 : vector<1x32xf32> to vector<16x32xf32>
      %1114 = arith.mulf %1112, %1113 : vector<16x32xf32>
      %1115 = vector.broadcast %1096 : vector<1x32xf32> to vector<16x32xf32>
      %1116 = arith.addf %1114, %1115 : vector<16x32xf32>
      %c0_370 = arith.constant 0 : index
      %c0_371 = arith.constant 0 : index
      %1117 = vector.load %arg19[%c0_370, %c0_371] : memref<16x32xf32, #tpu.memory_space<vmem>>, vector<16x32xf32>
      tpu.vector_store %arg19[%c0_370, %c0_371], %1116 {strides = array<i32>} : memref<16x32xf32, #tpu.memory_space<vmem>>, vector<16x32xf32>,
    } else {
    }
    return
  }
  func.func @transform_0(%arg0: i32, %arg1: i32) -> (i32, i32) {
    %c0_i32 = arith.constant 0 : i32
    %c0_i32_0 = arith.constant 0 : i32
    return %arg0, %c0_i32 : i32, i32
  }
  func.func @transform_1(%arg0: i32, %arg1: i32) -> (i32, i32, i32) {
    %c0_i32 = arith.constant 0 : i32
    %c0_i32_0 = arith.constant 0 : i32
    %c0_i32_1 = arith.constant 0 : i32
    return %arg0, %c0_i32, %c0_i32_0 : i32, i32, i32
  }
  func.func @transform_2(%arg0: i32, %arg1: i32) -> (i32, i32, i32) {
    %c0_i32 = arith.constant 0 : i32
    %c0_i32_0 = arith.constant 0 : i32
    %c0_i32_1 = arith.constant 0 : i32
    return %arg1, %c0_i32, %c0_i32_0 : i32, i32, i32
  }
  func.func @transform_3(%arg0: i32, %arg1: i32) -> (i32, i32, i32) {
    %c0_i32 = arith.constant 0 : i32
    %c0_i32_0 = arith.constant 0 : i32
    %c0_i32_1 = arith.constant 0 : i32
    return %arg1, %c0_i32, %c0_i32_0 : i32, i32, i32
  }
  func.func @transform_4(%arg0: i32, %arg1: i32) -> (i32, i32, i32) {
    %c0_i32 = arith.constant 0 : i32
    %c0_i32_0 = arith.constant 0 : i32
    %c0_i32_1 = arith.constant 0 : i32
    return %arg1, %c0_i32, %c0_i32_0 : i32, i32, i32
  }
  func.func @transform_5(%arg0: i32, %arg1: i32) -> (i32, i32, i32) {
    %c0_i32 = arith.constant 0 : i32
    %c0_i32_0 = arith.constant 0 : i32
    %c0_i32_1 = arith.constant 0 : i32
    return %arg1, %c0_i32, %c0_i32_0 : i32, i32, i32
  }
  func.func @transform_6(%arg0: i32, %arg1: i32) -> (i32, i32, i32) {
    %c0_i32 = arith.constant 0 : i32
    %c0_i32_0 = arith.constant 0 : i32
    %c0_i32_1 = arith.constant 0 : i32
    return %arg1, %c0_i32, %c0_i32_0 : i32, i32, i32
  }
  func.func @transform_7(%arg0: i32, %arg1: i32) -> (i32, i32, i32) {
    %c0_i32 = arith.constant 0 : i32
    %c0_i32_0 = arith.constant 0 : i32
    %c0_i32_1 = arith.constant 0 : i32
    return %arg1, %c0_i32, %c0_i32_0 : i32, i32, i32
  }
  func.func @transform_8(%arg0: i32, %arg1: i32) -> (i32, i32, i32) {
    %c0_i32 = arith.constant 0 : i32
    %c0_i32_0 = arith.constant 0 : i32
    %c0_i32_1 = arith.constant 0 : i32
    return %arg1, %c0_i32, %c0_i32_0 : i32, i32, i32
  }
  func.func @transform_9(%arg0: i32, %arg1: i32) -> (i32, i32, i32) {
    %c0_i32 = arith.constant 0 : i32
    %c0_i32_0 = arith.constant 0 : i32
    %c0_i32_1 = arith.constant 0 : i32
    return %arg1, %c0_i32, %c0_i32_0 : i32, i32, i32
  }
  func.func @transform_10(%arg0: i32, %arg1: i32) -> (i32, i32, i32) {
    %c0_i32 = arith.constant 0 : i32
    %c0_i32_0 = arith.constant 0 : i32
    %c0_i32_1 = arith.constant 0 : i32
    return %arg1, %c0_i32, %c0_i32_0 : i32, i32, i32
  }
  func.func @transform_11(%arg0: i32, %arg1: i32) -> (i32, i32, i32) {
    %c0_i32 = arith.constant 0 : i32
    %c0_i32_0 = arith.constant 0 : i32
    %c0_i32_1 = arith.constant 0 : i32
    return %arg1, %c0_i32, %c0_i32_0 : i32, i32, i32
  }
  func.func @transform_12(%arg0: i32, %arg1: i32) -> (i32, i32, i32) {
    %c0_i32 = arith.constant 0 : i32
    %c0_i32_0 = arith.constant 0 : i32
    %c0_i32_1 = arith.constant 0 : i32
    return %arg1, %c0_i32, %c0_i32_0 : i32, i32, i32
  }
  func.func @transform_13(%arg0: i32, %arg1: i32) -> (i32, i32, i32) {
    %c0_i32 = arith.constant 0 : i32
    %c0_i32_0 = arith.constant 0 : i32
    %c0_i32_1 = arith.constant 0 : i32
    return %arg1, %c0_i32, %c0_i32_0 : i32, i32, i32
  }
  func.func @transform_14(%arg0: i32, %arg1: i32) -> (i32, i32, i32) {
    %c0_i32 = arith.constant 0 : i32
    %c0_i32_0 = arith.constant 0 : i32
    %c0_i32_1 = arith.constant 0 : i32
    return %arg1, %c0_i32, %c0_i32_0 : i32, i32, i32
  }
  func.func @transform_15(%arg0: i32, %arg1: i32) -> (i32, i32) {
    %c0_i32 = arith.constant 0 : i32
    %c0_i32_0 = arith.constant 0 : i32
    %c0_i32_1 = arith.constant 0 : i32
    return %c0_i32, %c0_i32_0 : i32, i32
  }
  func.func @transform_16(%arg0: i32, %arg1: i32) -> (i32, i32) {
    %c0_i32 = arith.constant 0 : i32
    %c0_i32_0 = arith.constant 0 : i32
    %c0_i32_1 = arith.constant 0 : i32
    return %c0_i32, %c0_i32_0 : i32, i32
  }
  func.func @transform_17(%arg0: i32, %arg1: i32) -> (i32, i32) {
    %c0_i32 = arith.constant 0 : i32
    %c0_i32_0 = arith.constant 0 : i32
    return %arg0, %c0_i32 : i32, i32
  }
}

</mosaic_0001>

<llo_original>
// kernel: transformer_encoder_forward.1
$region0: #{transformer_encoder_forward.1}
  #allocation0 [shape = 'u32[]', space=smem, size = 0x4, offset = 0x4, fixed_abs, tag = 'smem constant byte address 0x4 - core index']
  #allocation1 [shape = 'u32[72,128]{1,0:T(1,128)}', space=vmem, size = 0x9000, scoped, tag = 'internal scratch']
  #allocation2 [shape = 'bf16[16,32]{1,0:T(8,128)(2,1)}', space=vmem, size = 0x1000, scoped, tag = 'scratch operand']
  %s0 = inlined_call_operand.vmem [shape: f32[16,32], index: 0, kind: input, shape index: {}]
  %s1 = inlined_call_operand.vmem [shape: f32[2,1,8], index: 1, kind: input, shape index: {}]
  %s2 = inlined_call_operand.vmem [shape: f32[2,1,32], index: 2, kind: input, shape index: {}]
  %s3 = inlined_call_operand.vmem [shape: f32[2,1,32], index: 3, kind: input, shape index: {}]
  %s4 = inlined_call_operand.vmem [shape: bf16[2,32,96], index: 4, kind: input, shape index: {}]
  %s5 = inlined_call_operand.vmem [shape: f32[2,1,96], index: 5, kind: input, shape index: {}]
  %s6 = inlined_call_operand.vmem [shape: bf16[2,4,15], index: 6, kind: input, shape index: {}]
  %s7 = inlined_call_operand.vmem [shape: bf16[2,32,32], index: 7, kind: input, shape index: {}]
  %s8 = inlined_call_operand.vmem [shape: f32[2,1,32], index: 8, kind: input, shape index: {}]
  %s9 = inlined_call_operand.vmem [shape: f32[2,1,32], index: 9, kind: input, shape index: {}]
  %s10 = inlined_call_operand.vmem [shape: f32[2,1,32], index: 10, kind: input, shape index: {}]
  %s11 = inlined_call_operand.vmem [shape: bf16[2,32,128], index: 11, kind: input, shape index: {}]
  %s12 = inlined_call_operand.vmem [shape: f32[2,1,128], index: 12, kind: input, shape index: {}]
  %s13 = inlined_call_operand.vmem [shape: bf16[2,128,32], index: 13, kind: input, shape index: {}]
  %s14 = inlined_call_operand.vmem [shape: f32[2,1,32], index: 14, kind: input, shape index: {}]
  %s15 = inlined_call_operand.vmem [shape: f32[1,32], index: 15, kind: input, shape index: {}]
  %s16 = inlined_call_operand.vmem [shape: f32[1,32], index: 16, kind: input, shape index: {}]
  %s17 = inlined_call_operand.hbm [shape: f32[16,32], index: 17, kind: output, shape index: {}]
  %s18 = sld [smem:[#allocation0]]
  $region113: #{transformer_encoder_forward.1} parent=0
    _
  %s20 = ssub.s32 1, %s18
  %s21 = scalar_select 0, %s20, %s18
  $region1: #{transformer_encoder_forward.1} parent=0
    #allocation3 [shape = 'u8[8192]{0}', space=vmem, size = 0x2000, scoped, tag = 'output window, operand 0, single buffered']
    #allocation4 [shape = 's32[2]{0}', space=sflag, size = 0x8, scoped, tag = 'scoped memory for transformer_encoder_forward.1']
    %22 = vsyncpa [#allocation4], 0
    loop: start=0, step=1, limit=4
    $region2: #{transformer_encoder_forward.1} parent=1 // loop_pre_header
      _
    $region3: #{transformer_encoder_forward.1} parent=1 // loop_header
      %s24 = sphi 0, %s28
      %p25 = scmp.ge.s32.totalorder %s24, 4
      %s31 = sphi 0, %s43
      %s32 = sphi 0, %s39
      %s33 = sphi 0, %s31
      %s34 = sphi 0, %s32
      %s35 = sphi 0, %s33
      %s36 = sphi 0, %s34
      %s46 = sphi 0, %s48
      %s49 = sphi 0, %s46
      %s50 = sphi 0, %s49
      %s66 = sphi 0, %s50
      %s72 = sphi 0, %s74
      %s75 = sphi 0, %s72
      %s76 = sphi 0, %s75
      %s92 = sphi 0, %s76
      %s98 = sphi 0, %s100
      %s101 = sphi 0, %s98
      %s102 = sphi 0, %s101
      %s118 = sphi 0, %s102
      %s124 = sphi 0, %s126
      %s127 = sphi 0, %s124
      %s128 = sphi 0, %s127
      %s144 = sphi 0, %s128
      %s150 = sphi 0, %s152
      %s153 = sphi 0, %s150
      %s154 = sphi 0, %s153
      %s170 = sphi 0, %s154
      %s176 = sphi 0, %s178
      %s179 = sphi 0, %s176
      %s180 = sphi 0, %s179
      %s196 = sphi 0, %s180
      %s202 = sphi 0, %s204
      %s205 = sphi 0, %s202
      %s206 = sphi 0, %s205
      %s222 = sphi 0, %s206
      %s228 = sphi 0, %s230
      %s231 = sphi 0, %s228
      %s232 = sphi 0, %s231
      %s248 = sphi 0, %s232
      %s254 = sphi 0, %s256
      %s257 = sphi 0, %s254
      %s258 = sphi 0, %s257
      %s274 = sphi 0, %s258
      %s280 = sphi 0, %s282
      %s283 = sphi 0, %s280
      %s284 = sphi 0, %s283
      %s300 = sphi 0, %s284
      %s306 = sphi 0, %s308
      %s309 = sphi 0, %s306
      %s310 = sphi 0, %s309
      %s326 = sphi 0, %s310
      %s332 = sphi 0, %s334
      %s335 = sphi 0, %s332
      %s336 = sphi 0, %s335
      %s352 = sphi 0, %s336
      %s358 = sphi 0, %s360
      %s361 = sphi 0, %s358
      %s362 = sphi 0, %s361
      %s378 = sphi 0, %s362
      %s384 = sphi 0, %s386
      %s387 = sphi 0, %s384
      %s388 = sphi 0, %s387
      %s404 = sphi 0, %s388
      %s410 = sphi 0, %s412
      %s413 = sphi 0, %s410
      %s414 = sphi 0, %s413
      %s430 = sphi 0, %s414
      %s434 = sphi 0, %s434
      %s436 = sphi 0, %s434
      %s437 = sphi 0, %s436
      %s451 = sphi 0, %s437
      %s455 = sphi 0, %s455
      %s457 = sphi 0, %s455
      %s458 = sphi 0, %s457
      %s472 = sphi 0, %s458
      %s478 = sphi 0, %s480
      %s481 = sphi 0, %s478
      %s482 = sphi 0, %s481
      %s498 = sphi 0, %s482
    $region4: #{transformer_encoder_forward.1} parent=1 // loop_header_branch
      %27 = sbr.rel (%p25) target = $region8
    $region5: #{transformer_encoder_forward.1} parent=1 // loop_body
      %s29 = ssub.s32 %s24, 1
      %s30 = ssub.s32 %s24, 2
      %s37 = sadd.s32 1, %s32
      %p38 = scmp.ge.s32.totalorder %s37, 2
      %s39 = scalar_select %p38, 0, %s37
      %s40 = sadd.s32 1, %s31
      %s41 = scalar_select %p38, %s40, %s31
      %p42 = scmp.ge.s32.totalorder %s41, 1
      %s43 = scalar_select %p42, 0, %s41
      %s44 = ssub.s32 %s31, %s43
      %p45 = scmp.eq.s32.totalorder %s44, 0
      %s47 = sadd.s32 %s46, 1
      %s48 = scalar_select %p45, %s46, %s47
      %p51 = pneg %p45
      %p52 = scmp.eq.s32.totalorder %s24, 1
      %p53 = por %p51, %p52
      %p54 = scmp.ne.s32.totalorder %s46, %s49
      %p55 = scmp.eq.s32.totalorder %s24, 0
      %p56 = por %p54, %p55
      %p57 = scmp.ne.s32.totalorder %s46, %s49
      %p58 = scmp.eq.s32.totalorder %s29, 1
      %p59 = por %p57, %p58
      %p60 = scmp.ne.s32.totalorder %s49, %s50
      %p61 = scmp.eq.s32.totalorder %s29, 0
      %p62 = por %p60, %p61
      %p63 = scmp.ne.s32.totalorder %s49, %s50
      %p64 = scmp.eq.s32.totalorder %s30, 1
      %p65 = por %p63, %p64
      %p67 = scmp.ne.s32.totalorder %s50, %s66
      %p68 = scmp.eq.s32.totalorder %s30, 0
      %p69 = por %p67, %p68
      %s70 = ssub.s32 %s31, %s43
      %p71 = scmp.eq.s32.totalorder %s70, 0
      %s73 = sadd.s32 %s72, 1
      %s74 = scalar_select %p71, %s72, %s73
      %p77 = pneg %p71
      %p78 = scmp.eq.s32.totalorder %s24, 1
      %p79 = por %p77, %p78
      %p80 = scmp.ne.s32.totalorder %s72, %s75
      %p81 = scmp.eq.s32.totalorder %s24, 0
      %p82 = por %p80, %p81
      %p83 = scmp.ne.s32.totalorder %s72, %s75
      %p84 = scmp.eq.s32.totalorder %s29, 1
      %p85 = por %p83, %p84
      %p86 = scmp.ne.s32.totalorder %s75, %s76
      %p87 = scmp.eq.s32.totalorder %s29, 0
      %p88 = por %p86, %p87
      %p89 = scmp.ne.s32.totalorder %s75, %s76
      %p90 = scmp.eq.s32.totalorder %s30, 1
      %p91 = por %p89, %p90
      %p93 = scmp.ne.s32.totalorder %s76, %s92
      %p94 = scmp.eq.s32.totalorder %s30, 0
      %p95 = por %p93, %p94
      %s96 = ssub.s32 %s32, %s39
      %p97 = scmp.eq.s32.totalorder %s96, 0
      %s99 = sadd.s32 %s98, 1
      %s100 = scalar_select %p97, %s98, %s99
      %p103 = pneg %p97
      %p104 = scmp.eq.s32.totalorder %s24, 1
      %p105 = por %p103, %p104
      %p106 = scmp.ne.s32.totalorder %s98, %s101
      %p107 = scmp.eq.s32.totalorder %s24, 0
      %p108 = por %p106, %p107
      %p109 = scmp.ne.s32.totalorder %s98, %s101
      %p110 = scmp.eq.s32.totalorder %s29, 1
      %p111 = por %p109, %p110
      %p112 = scmp.ne.s32.totalorder %s101, %s102
      %p113 = scmp.eq.s32.totalorder %s29, 0
      %p114 = por %p112, %p113
      %p115 = scmp.ne.s32.totalorder %s101, %s102
      %p116 = scmp.eq.s32.totalorder %s30, 1
      %p117 = por %p115, %p116
      %p119 = scmp.ne.s32.totalorder %s102, %s118
      %p120 = scmp.eq.s32.totalorder %s30, 0
      %p121 = por %p119, %p120
      %s122 = ssub.s32 %s32, %s39
      %p123 = scmp.eq.s32.totalorder %s122, 0
      %s125 = sadd.s32 %s124, 1
      %s126 = scalar_select %p123, %s124, %s125
      %p129 = pneg %p123
      %p130 = scmp.eq.s32.totalorder %s24, 1
      %p131 = por %p129, %p130
      %p132 = scmp.ne.s32.totalorder %s124, %s127
      %p133 = scmp.eq.s32.totalorder %s24, 0
      %p134 = por %p132, %p133
      %p135 = scmp.ne.s32.totalorder %s124, %s127
      %p136 = scmp.eq.s32.totalorder %s29, 1
      %p137 = por %p135, %p136
      %p138 = scmp.ne.s32.totalorder %s127, %s128
      %p139 = scmp.eq.s32.totalorder %s29, 0
      %p140 = por %p138, %p139
      %p141 = scmp.ne.s32.totalorder %s127, %s128
      %p142 = scmp.eq.s32.totalorder %s30, 1
      %p143 = por %p141, %p142
      %p145 = scmp.ne.s32.totalorder %s128, %s144
      %p146 = scmp.eq.s32.totalorder %s30, 0
      %p147 = por %p145, %p146
      %s148 = ssub.s32 %s32, %s39
      %p149 = scmp.eq.s32.totalorder %s148, 0
      %s151 = sadd.s32 %s150, 1
      %s152 = scalar_select %p149, %s150, %s151
      %p155 = pneg %p149
      %p156 = scmp.eq.s32.totalorder %s24, 1
      %p157 = por %p155, %p156
      %p158 = scmp.ne.s32.totalorder %s150, %s153
      %p159 = scmp.eq.s32.totalorder %s24, 0
      %p160 = por %p158, %p159
      %p161 = scmp.ne.s32.totalorder %s150, %s153
      %p162 = scmp.eq.s32.totalorder %s29, 1
      %p163 = por %p161, %p162
      %p164 = scmp.ne.s32.totalorder %s153, %s154
      %p165 = scmp.eq.s32.totalorder %s29, 0
      %p166 = por %p164, %p165
      %p167 = scmp.ne.s32.totalorder %s153, %s154
      %p168 = scmp.eq.s32.totalorder %s30, 1
      %p169 = por %p167, %p168
      %p171 = scmp.ne.s32.totalorder %s154, %s170
      %p172 = scmp.eq.s32.totalorder %s30, 0
      %p173 = por %p171, %p172
      %s174 = ssub.s32 %s32, %s39
      %p175 = scmp.eq.s32.totalorder %s174, 0
      %s177 = sadd.s32 %s176, 1
      %s178 = scalar_select %p175, %s176, %s177
      %p181 = pneg %p175
      %p182 = scmp.eq.s32.totalorder %s24, 1
      %p183 = por %p181, %p182
      %p184 = scmp.ne.s32.totalorder %s176, %s179
      %p185 = scmp.eq.s32.totalorder %s24, 0
      %p186 = por %p184, %p185
      %p187 = scmp.ne.s32.totalorder %s176, %s179
      %p188 = scmp.eq.s32.totalorder %s29, 1
      %p189 = por %p187, %p188
      %p190 = scmp.ne.s32.totalorder %s179, %s180
      %p191 = scmp.eq.s32.totalorder %s29, 0
      %p192 = por %p190, %p191
      %p193 = scmp.ne.s32.totalorder %s179, %s180
      %p194 = scmp.eq.s32.totalorder %s30, 1
      %p195 = por %p193, %p194
      %p197 = scmp.ne.s32.totalorder %s180, %s196
      %p198 = scmp.eq.s32.totalorder %s30, 0
      %p199 = por %p197, %p198
      %s200 = ssub.s32 %s32, %s39
      %p201 = scmp.eq.s32.totalorder %s200, 0
      %s203 = sadd.s32 %s202, 1
      %s204 = scalar_select %p201, %s202, %s203
      %p207 = pneg %p201
      %p208 = scmp.eq.s32.totalorder %s24, 1
      %p209 = por %p207, %p208
      %p210 = scmp.ne.s32.totalorder %s202, %s205
      %p211 = scmp.eq.s32.totalorder %s24, 0
      %p212 = por %p210, %p211
      %p213 = scmp.ne.s32.totalorder %s202, %s205
      %p214 = scmp.eq.s32.totalorder %s29, 1
      %p215 = por %p213, %p214
      %p216 = scmp.ne.s32.totalorder %s205, %s206
      %p217 = scmp.eq.s32.totalorder %s29, 0
      %p218 = por %p216, %p217
      %p219 = scmp.ne.s32.totalorder %s205, %s206
      %p220 = scmp.eq.s32.totalorder %s30, 1
      %p221 = por %p219, %p220
      %p223 = scmp.ne.s32.totalorder %s206, %s222
      %p224 = scmp.eq.s32.totalorder %s30, 0
      %p225 = por %p223, %p224
      %s226 = ssub.s32 %s32, %s39
      %p227 = scmp.eq.s32.totalorder %s226, 0
      %s229 = sadd.s32 %s228, 1
      %s230 = scalar_select %p227, %s228, %s229
      %p233 = pneg %p227
      %p234 = scmp.eq.s32.totalorder %s24, 1
      %p235 = por %p233, %p234
      %p236 = scmp.ne.s32.totalorder %s228, %s231
      %p237 = scmp.eq.s32.totalorder %s24, 0
      %p238 = por %p236, %p237
      %p239 = scmp.ne.s32.totalorder %s228, %s231
      %p240 = scmp.eq.s32.totalorder %s29, 1
      %p241 = por %p239, %p240
      %p242 = scmp.ne.s32.totalorder %s231, %s232
      %p243 = scmp.eq.s32.totalorder %s29, 0
      %p244 = por %p242, %p243
      %p245 = scmp.ne.s32.totalorder %s231, %s232
      %p246 = scmp.eq.s32.totalorder %s30, 1
      %p247 = por %p245, %p246
      %p249 = scmp.ne.s32.totalorder %s232, %s248
      %p250 = scmp.eq.s32.totalorder %s30, 0
      %p251 = por %p249, %p250
      %s252 = ssub.s32 %s32, %s39
      %p253 = scmp.eq.s32.totalorder %s252, 0
      %s255 = sadd.s32 %s254, 1
      %s256 = scalar_select %p253, %s254, %s255
      %p259 = pneg %p253
      %p260 = scmp.eq.s32.totalorder %s24, 1
      %p261 = por %p259, %p260
      %p262 = scmp.ne.s32.totalorder %s254, %s257
      %p263 = scmp.eq.s32.totalorder %s24, 0
      %p264 = por %p262, %p263
      %p265 = scmp.ne.s32.totalorder %s254, %s257
      %p266 = scmp.eq.s32.totalorder %s29, 1
      %p267 = por %p265, %p266
      %p268 = scmp.ne.s32.totalorder %s257, %s258
      %p269 = scmp.eq.s32.totalorder %s29, 0
      %p270 = por %p268, %p269
      %p271 = scmp.ne.s32.totalorder %s257, %s258
      %p272 = scmp.eq.s32.totalorder %s30, 1
      %p273 = por %p271, %p272
      %p275 = scmp.ne.s32.totalorder %s258, %s274
      %p276 = scmp.eq.s32.totalorder %s30, 0
      %p277 = por %p275, %p276
      %s278 = ssub.s32 %s32, %s39
      %p279 = scmp.eq.s32.totalorder %s278, 0
      %s281 = sadd.s32 %s280, 1
      %s282 = scalar_select %p279, %s280, %s281
      %p285 = pneg %p279
      %p286 = scmp.eq.s32.totalorder %s24, 1
      %p287 = por %p285, %p286
      %p288 = scmp.ne.s32.totalorder %s280, %s283
      %p289 = scmp.eq.s32.totalorder %s24, 0
      %p290 = por %p288, %p289
      %p291 = scmp.ne.s32.totalorder %s280, %s283
      %p292 = scmp.eq.s32.totalorder %s29, 1
      %p293 = por %p291, %p292
      %p294 = scmp.ne.s32.totalorder %s283, %s284
      %p295 = scmp.eq.s32.totalorder %s29, 0
      %p296 = por %p294, %p295
      %p297 = scmp.ne.s32.totalorder %s283, %s284
      %p298 = scmp.eq.s32.totalorder %s30, 1
      %p299 = por %p297, %p298
      %p301 = scmp.ne.s32.totalorder %s284, %s300
      %p302 = scmp.eq.s32.totalorder %s30, 0
      %p303 = por %p301, %p302
      %s304 = ssub.s32 %s32, %s39
      %p305 = scmp.eq.s32.totalorder %s304, 0
      %s307 = sadd.s32 %s306, 1
      %s308 = scalar_select %p305, %s306, %s307
      %p311 = pneg %p305
      %p312 = scmp.eq.s32.totalorder %s24, 1
      %p313 = por %p311, %p312
      %p314 = scmp.ne.s32.totalorder %s306, %s309
      %p315 = scmp.eq.s32.totalorder %s24, 0
      %p316 = por %p314, %p315
      %p317 = scmp.ne.s32.totalorder %s306, %s309
      %p318 = scmp.eq.s32.totalorder %s29, 1
      %p319 = por %p317, %p318
      %p320 = scmp.ne.s32.totalorder %s309, %s310
      %p321 = scmp.eq.s32.totalorder %s29, 0
      %p322 = por %p320, %p321
      %p323 = scmp.ne.s32.totalorder %s309, %s310
      %p324 = scmp.eq.s32.totalorder %s30, 1
      %p325 = por %p323, %p324
      %p327 = scmp.ne.s32.totalorder %s310, %s326
      %p328 = scmp.eq.s32.totalorder %s30, 0
      %p329 = por %p327, %p328
      %s330 = ssub.s32 %s32, %s39
      %p331 = scmp.eq.s32.totalorder %s330, 0
      %s333 = sadd.s32 %s332, 1
      %s334 = scalar_select %p331, %s332, %s333
      %p337 = pneg %p331
      %p338 = scmp.eq.s32.totalorder %s24, 1
      %p339 = por %p337, %p338
      %p340 = scmp.ne.s32.totalorder %s332, %s335
      %p341 = scmp.eq.s32.totalorder %s24, 0
      %p342 = por %p340, %p341
      %p343 = scmp.ne.s32.totalorder %s332, %s335
      %p344 = scmp.eq.s32.totalorder %s29, 1
      %p345 = por %p343, %p344
      %p346 = scmp.ne.s32.totalorder %s335, %s336
      %p347 = scmp.eq.s32.totalorder %s29, 0
      %p348 = por %p346, %p347
      %p349 = scmp.ne.s32.totalorder %s335, %s336
      %p350 = scmp.eq.s32.totalorder %s30, 1
      %p351 = por %p349, %p350
      %p353 = scmp.ne.s32.totalorder %s336, %s352
      %p354 = scmp.eq.s32.totalorder %s30, 0
      %p355 = por %p353, %p354
      %s356 = ssub.s32 %s32, %s39
      %p357 = scmp.eq.s32.totalorder %s356, 0
      %s359 = sadd.s32 %s358, 1
      %s360 = scalar_select %p357, %s358, %s359
      %p363 = pneg %p357
      %p364 = scmp.eq.s32.totalorder %s24, 1
      %p365 = por %p363, %p364
      %p366 = scmp.ne.s32.totalorder %s358, %s361
      %p367 = scmp.eq.s32.totalorder %s24, 0
      %p368 = por %p366, %p367
      %p369 = scmp.ne.s32.totalorder %s358, %s361
      %p370 = scmp.eq.s32.totalorder %s29, 1
      %p371 = por %p369, %p370
      %p372 = scmp.ne.s32.totalorder %s361, %s362
      %p373 = scmp.eq.s32.totalorder %s29, 0
      %p374 = por %p372, %p373
      %p375 = scmp.ne.s32.totalorder %s361, %s362
      %p376 = scmp.eq.s32.totalorder %s30, 1
      %p377 = por %p375, %p376
      %p379 = scmp.ne.s32.totalorder %s362, %s378
      %p380 = scmp.eq.s32.totalorder %s30, 0
      %p381 = por %p379, %p380
      %s382 = ssub.s32 %s32, %s39
      %p383 = scmp.eq.s32.totalorder %s382, 0
      %s385 = sadd.s32 %s384, 1
      %s386 = scalar_select %p383, %s384, %s385
      %p389 = pneg %p383
      %p390 = scmp.eq.s32.totalorder %s24, 1
      %p391 = por %p389, %p390
      %p392 = scmp.ne.s32.totalorder %s384, %s387
      %p393 = scmp.eq.s32.totalorder %s24, 0
      %p394 = por %p392, %p393
      %p395 = scmp.ne.s32.totalorder %s384, %s387
      %p396 = scmp.eq.s32.totalorder %s29, 1
      %p397 = por %p395, %p396
      %p398 = scmp.ne.s32.totalorder %s387, %s388
      %p399 = scmp.eq.s32.totalorder %s29, 0
      %p400 = por %p398, %p399
      %p401 = scmp.ne.s32.totalorder %s387, %s388
      %p402 = scmp.eq.s32.totalorder %s30, 1
      %p403 = por %p401, %p402
      %p405 = scmp.ne.s32.totalorder %s388, %s404
      %p406 = scmp.eq.s32.totalorder %s30, 0
      %p407 = por %p405, %p406
      %s408 = ssub.s32 %s32, %s39
      %p409 = scmp.eq.s32.totalorder %s408, 0
      %s411 = sadd.s32 %s410, 1
      %s412 = scalar_select %p409, %s410, %s411
      %p415 = pneg %p409
      %p416 = scmp.eq.s32.totalorder %s24, 1
      %p417 = por %p415, %p416
      %p418 = scmp.ne.s32.totalorder %s410, %s413
      %p419 = scmp.eq.s32.totalorder %s24, 0
      %p420 = por %p418, %p419
      %p421 = scmp.ne.s32.totalorder %s410, %s413
      %p422 = scmp.eq.s32.totalorder %s29, 1
      %p423 = por %p421, %p422
      %p424 = scmp.ne.s32.totalorder %s413, %s414
      %p425 = scmp.eq.s32.totalorder %s29, 0
      %p426 = por %p424, %p425
      %p427 = scmp.ne.s32.totalorder %s413, %s414
      %p428 = scmp.eq.s32.totalorder %s30, 1
      %p429 = por %p427, %p428
      %p431 = scmp.ne.s32.totalorder %s414, %s430
      %p432 = scmp.eq.s32.totalorder %s30, 0
      %p433 = por %p431, %p432
      %s435 = sadd.s32 %s434, 1
      %p438 = scmp.eq.s32.totalorder %s24, 1
      %p439 = scmp.ne.s32.totalorder %s434, %s436
      %p440 = scmp.eq.s32.totalorder %s24, 0
      %p441 = por %p439, %p440
      %p442 = scmp.ne.s32.totalorder %s434, %s436
      %p443 = scmp.eq.s32.totalorder %s29, 1
      %p444 = por %p442, %p443
      %p445 = scmp.ne.s32.totalorder %s436, %s437
      %p446 = scmp.eq.s32.totalorder %s29, 0
      %p447 = por %p445, %p446
      %p448 = scmp.ne.s32.totalorder %s436, %s437
      %p449 = scmp.eq.s32.totalorder %s30, 1
      %p450 = por %p448, %p449
      %p452 = scmp.ne.s32.totalorder %s437, %s451
      %p453 = scmp.eq.s32.totalorder %s30, 0
      %p454 = por %p452, %p453
      %s456 = sadd.s32 %s455, 1
      %p459 = scmp.eq.s32.totalorder %s24, 1
      %p460 = scmp.ne.s32.totalorder %s455, %s457
      %p461 = scmp.eq.s32.totalorder %s24, 0
      %p462 = por %p460, %p461
      %p463 = scmp.ne.s32.totalorder %s455, %s457
      %p464 = scmp.eq.s32.totalorder %s29, 1
      %p465 = por %p463, %p464
      %p466 = scmp.ne.s32.totalorder %s457, %s458
      %p467 = scmp.eq.s32.totalorder %s29, 0
      %p468 = por %p466, %p467
      %p469 = scmp.ne.s32.totalorder %s457, %s458
      %p470 = scmp.eq.s32.totalorder %s30, 1
      %p471 = por %p469, %p470
      %p473 = scmp.ne.s32.totalorder %s458, %s472
      %p474 = scmp.eq.s32.totalorder %s30, 0
      %p475 = por %p473, %p474
      %s476 = ssub.s32 %s31, %s43
      %p477 = scmp.eq.s32.totalorder %s476, 0
      %s479 = sadd.s32 %s478, 1
      %s480 = scalar_select %p477, %s478, %s479
      %p483 = pneg %p477
      %p484 = scmp.eq.s32.totalorder %s24, 1
      %p485 = por %p483, %p484
      %p486 = scmp.ne.s32.totalorder %s478, %s481
      %p487 = scmp.eq.s32.totalorder %s24, 0
      %p488 = por %p486, %p487
      %p489 = scmp.ne.s32.totalorder %s478, %s481
      %p490 = scmp.eq.s32.totalorder %s29, 1
      %p491 = por %p489, %p490
      %p492 = scmp.ne.s32.totalorder %s481, %s482
      %p493 = scmp.eq.s32.totalorder %s29, 0
      %p494 = por %p492, %p493
      %p495 = scmp.ne.s32.totalorder %s481, %s482
      %p496 = scmp.eq.s32.totalorder %s30, 1
      %p497 = por %p495, %p496
      %p499 = scmp.ne.s32.totalorder %s482, %s498
      %p500 = scmp.eq.s32.totalorder %s30, 0
      %p501 = por %p499, %p500
      %p502 = scmp.le.s32.totalorder 1, %s24
      %p503 = scmp.lt.s32.totalorder %s24, 3
      %p504 = pnand %p502, %p503
      %p505 = pneg %p504
      // Predicated region
      $region9: #{transformer_encoder_forward.1} parent=5 // pred_check
        _
      $region10: #{transformer_encoder_forward.1} parent=5 // pred_check_branch
        %507 = sbr.rel (%p504) target = $region12
      $region11: #{transformer_encoder_forward.1} parent=5 // pred_region
        %s508 = ssub.s32 %s24, 1
        // Predicated region
        $region13: #{transformer_encoder_forward.1} parent=11 // pred_check
          %p509 = pneg %p62
        $region14: #{transformer_encoder_forward.1} parent=11 // pred_check_branch
          %511 = sbr.rel (%p509) target = $region16
        $region15: #{transformer_encoder_forward.1} parent=11 // pred_region
          %s512 = smul.u32 2, %s33
          %p513 = scmp.lt.s32.totalorder %s512, 1
          %s514 = scalar_select %p513, %s512, 1
          %s515 = smul.addr %s514, 8
          %s516 = scalar_lea.vmem %s0, %s515
          %s517 = smul.u32 2, %s33
        $region16: #{transformer_encoder_forward.1} parent=11 // pred_fallthru
          _
        // Predicated region
        $region17: #{transformer_encoder_forward.1} parent=11 // pred_check
          %p518 = pneg %p88
        $region18: #{transformer_encoder_forward.1} parent=11 // pred_check_branch
          %520 = sbr.rel (%p518) target = $region20
        $region19: #{transformer_encoder_forward.1} parent=11 // pred_region
          %s521 = smul.u32 2, %s33
          %p522 = scmp.lt.s32.totalorder %s521, 1
          %s523 = scalar_select %p522, %s521, 1
          %s524 = scalar_lea.vmem %s1, %s523
          %s525 = smul.u32 2, %s33
        $region20: #{transformer_encoder_forward.1} parent=11 // pred_fallthru
          _
        // Predicated region
        $region21: #{transformer_encoder_forward.1} parent=11 // pred_check
          %p526 = pneg %p447
        $region22: #{transformer_encoder_forward.1} parent=11 // pred_check_branch
          %528 = sbr.rel (%p526) target = $region24
        $region23: #{transformer_encoder_forward.1} parent=11 // pred_region
          _
        $region24: #{transformer_encoder_forward.1} parent=11 // pred_fallthru
          _
        // Predicated region
        $region25: #{transformer_encoder_forward.1} parent=11 // pred_check
          %p529 = pneg %p468
        $region26: #{transformer_encoder_forward.1} parent=11 // pred_check_branch
          %531 = sbr.rel (%p529) target = $region28
        $region27: #{transformer_encoder_forward.1} parent=11 // pred_region
          _
        $region28: #{transformer_encoder_forward.1} parent=11 // pred_fallthru
          _
      $region12: #{transformer_encoder_forward.1} parent=5 // pred_fallthru
        _
      %p532 = scmp.lt.s32.totalorder %s24, 2
      // Predicated region
      $region29: #{transformer_encoder_forward.1} parent=5 // pred_check
        %p533 = pneg %p532
      $region30: #{transformer_encoder_forward.1} parent=5 // pred_check_branch
        %535 = sbr.rel (%p533) target = $region32
      $region31: #{transformer_encoder_forward.1} parent=5 // pred_region
        // Predicated region
        $region33: #{transformer_encoder_forward.1} parent=31 // pred_check
          %p536 = pneg %p108
        $region34: #{transformer_encoder_forward.1} parent=31 // pred_check_branch
          %538 = sbr.rel (%p536) target = $region36
        $region35: #{transformer_encoder_forward.1} parent=31 // pred_region
          %p539 = scmp.lt.s32.totalorder %s32, 1
          %s540 = scalar_select %p539, %s32, 1
          %s541 = scalar_lea.vmem %s2, %s540
        $region36: #{transformer_encoder_forward.1} parent=31 // pred_fallthru
          _
        // Predicated region
        $region37: #{transformer_encoder_forward.1} parent=31 // pred_check
          %p542 = pneg %p134
        $region38: #{transformer_encoder_forward.1} parent=31 // pred_check_branch
          %544 = sbr.rel (%p542) target = $region40
        $region39: #{transformer_encoder_forward.1} parent=31 // pred_region
          %p545 = scmp.lt.s32.totalorder %s32, 1
          %s546 = scalar_select %p545, %s32, 1
          %s547 = scalar_lea.vmem %s3, %s546
        $region40: #{transformer_encoder_forward.1} parent=31 // pred_fallthru
          _
        // Predicated region
        $region41: #{transformer_encoder_forward.1} parent=31 // pred_check
          %p548 = pneg %p160
        $region42: #{transformer_encoder_forward.1} parent=31 // pred_check_branch
          %550 = sbr.rel (%p548) target = $region44
        $region43: #{transformer_encoder_forward.1} parent=31 // pred_region
          %p551 = scmp.lt.s32.totalorder %s32, 1
          %s552 = scalar_select %p551, %s32, 1
          %s553 = smul.addr %s552, 4
          %s554 = smul.addr %s553, 4
          %s555 = scalar_lea.vmem %s4, %s554
        $region44: #{transformer_encoder_forward.1} parent=31 // pred_fallthru
          _
        // Predicated region
        $region45: #{transformer_encoder_forward.1} parent=31 // pred_check
          %p556 = pneg %p186
        $region46: #{transformer_encoder_forward.1} parent=31 // pred_check_branch
          %558 = sbr.rel (%p556) target = $region48
        $region47: #{transformer_encoder_forward.1} parent=31 // pred_region
          %p559 = scmp.lt.s32.totalorder %s32, 1
          %s560 = scalar_select %p559, %s32, 1
          %s561 = scalar_lea.vmem %s5, %s560
        $region48: #{transformer_encoder_forward.1} parent=31 // pred_fallthru
          _
        // Predicated region
        $region49: #{transformer_encoder_forward.1} parent=31 // pred_check
          %p562 = pneg %p212
        $region50: #{transformer_encoder_forward.1} parent=31 // pred_check_branch
          %564 = sbr.rel (%p562) target = $region52
        $region51: #{transformer_encoder_forward.1} parent=31 // pred_region
          %p565 = scmp.lt.s32.totalorder %s32, 1
          %s566 = scalar_select %p565, %s32, 1
          %s567 = smul.addr %s566, 2
          %s568 = scalar_lea.vmem %s6, %s567
        $region52: #{transformer_encoder_forward.1} parent=31 // pred_fallthru
          _
        // Predicated region
        $region53: #{transformer_encoder_forward.1} parent=31 // pred_check
          %p569 = pneg %p238
        $region54: #{transformer_encoder_forward.1} parent=31 // pred_check_branch
          %571 = sbr.rel (%p569) target = $region56
        $region55: #{transformer_encoder_forward.1} parent=31 // pred_region
          %p572 = scmp.lt.s32.totalorder %s32, 1
          %s573 = scalar_select %p572, %s32, 1
          %s574 = smul.addr %s573, 4
          %s575 = smul.addr %s574, 4
          %s576 = scalar_lea.vmem %s7, %s575
        $region56: #{transformer_encoder_forward.1} parent=31 // pred_fallthru
          _
        // Predicated region
        $region57: #{transformer_encoder_forward.1} parent=31 // pred_check
          %p577 = pneg %p264
        $region58: #{transformer_encoder_forward.1} parent=31 // pred_check_branch
          %579 = sbr.rel (%p577) target = $region60
        $region59: #{transformer_encoder_forward.1} parent=31 // pred_region
          %p580 = scmp.lt.s32.totalorder %s32, 1
          %s581 = scalar_select %p580, %s32, 1
          %s582 = scalar_lea.vmem %s8, %s581
        $region60: #{transformer_encoder_forward.1} parent=31 // pred_fallthru
          _
        // Predicated region
        $region61: #{transformer_encoder_forward.1} parent=31 // pred_check
          %p583 = pneg %p290
        $region62: #{transformer_encoder_forward.1} parent=31 // pred_check_branch
          %585 = sbr.rel (%p583) target = $region64
        $region63: #{transformer_encoder_forward.1} parent=31 // pred_region
          %p586 = scmp.lt.s32.totalorder %s32, 1
          %s587 = scalar_select %p586, %s32, 1
          %s588 = scalar_lea.vmem %s9, %s587
        $region64: #{transformer_encoder_forward.1} parent=31 // pred_fallthru
          _
        // Predicated region
        $region65: #{transformer_encoder_forward.1} parent=31 // pred_check
          %p589 = pneg %p316
        $region66: #{transformer_encoder_forward.1} parent=31 // pred_check_branch
          %591 = sbr.rel (%p589) target = $region68
        $region67: #{transformer_encoder_forward.1} parent=31 // pred_region
          %p592 = scmp.lt.s32.totalorder %s32, 1
          %s593 = scalar_select %p592, %s32, 1
          %s594 = scalar_lea.vmem %s10, %s593
        $region68: #{transformer_encoder_forward.1} parent=31 // pred_fallthru
          _
        // Predicated region
        $region69: #{transformer_encoder_forward.1} parent=31 // pred_check
          %p595 = pneg %p342
        $region70: #{transformer_encoder_forward.1} parent=31 // pred_check_branch
          %597 = sbr.rel (%p595) target = $region72
        $region71: #{transformer_encoder_forward.1} parent=31 // pred_region
          %p598 = scmp.lt.s32.totalorder %s32, 1
          %s599 = scalar_select %p598, %s32, 1
          %s600 = smul.addr %s599, 4
          %s601 = smul.addr %s600, 4
          %s602 = scalar_lea.vmem %s11, %s601
        $region72: #{transformer_encoder_forward.1} parent=31 // pred_fallthru
          _
        // Predicated region
        $region73: #{transformer_encoder_forward.1} parent=31 // pred_check
          %p603 = pneg %p368
        $region74: #{transformer_encoder_forward.1} parent=31 // pred_check_branch
          %605 = sbr.rel (%p603) target = $region76
        $region75: #{transformer_encoder_forward.1} parent=31 // pred_region
          %p606 = scmp.lt.s32.totalorder %s32, 1
          %s607 = scalar_select %p606, %s32, 1
          %s608 = scalar_lea.vmem %s12, %s607
        $region76: #{transformer_encoder_forward.1} parent=31 // pred_fallthru
          _
        // Predicated region
        $region77: #{transformer_encoder_forward.1} parent=31 // pred_check
          %p609 = pneg %p394
        $region78: #{transformer_encoder_forward.1} parent=31 // pred_check_branch
          %611 = sbr.rel (%p609) target = $region80
        $region79: #{transformer_encoder_forward.1} parent=31 // pred_region
          %p612 = scmp.lt.s32.totalorder %s32, 1
          %s613 = scalar_select %p612, %s32, 1
          %s614 = smul.addr %s613, 16
          %s615 = smul.addr %s614, 4
          %s616 = scalar_lea.vmem %s13, %s615
        $region80: #{transformer_encoder_forward.1} parent=31 // pred_fallthru
          _
        // Predicated region
        $region81: #{transformer_encoder_forward.1} parent=31 // pred_check
          %p617 = pneg %p420
        $region82: #{transformer_encoder_forward.1} parent=31 // pred_check_branch
          %619 = sbr.rel (%p617) target = $region84
        $region83: #{transformer_encoder_forward.1} parent=31 // pred_region
          %p620 = scmp.lt.s32.totalorder %s32, 1
          %s621 = scalar_select %p620, %s32, 1
          %s622 = scalar_lea.vmem %s14, %s621
        $region84: #{transformer_encoder_forward.1} parent=31 // pred_fallthru
          _
      $region32: #{transformer_encoder_forward.1} parent=5 // pred_fallthru
        _
      %p623 = scmp.le.s32.totalorder 1, %s24
      %p624 = scmp.lt.s32.totalorder %s24, 3
      %p625 = pnand %p623, %p624
      %p626 = pneg %p625
      // Predicated region
      $region85: #{transformer_encoder_forward.1} parent=5 // pred_check
        _
      $region86: #{transformer_encoder_forward.1} parent=5 // pred_check_branch
        %628 = sbr.rel (%p625) target = $region88
      $region87: #{transformer_encoder_forward.1} parent=5 // pred_region
        %s629 = ssub.s32 %s24, 1
        %s630 = smul.u32 2, %s33
        %p631 = scmp.lt.s32.totalorder %s630, 1
        %s632 = scalar_select %p631, %s630, 1
        %s633 = smul.addr %s632, 8
        %s634 = scalar_lea.vmem %s0, %s633
        %p635 = pneg %p62
        %p636 = pneg %p59
        %s637 = smul.u32 2, %s33
        %p638 = scmp.lt.s32.totalorder %s637, 1
        %s639 = scalar_select %p638, %s637, 1
        %s640 = scalar_lea.vmem %s1, %s639
        %p641 = pneg %p88
        %p642 = pneg %p85
        %p643 = scmp.lt.s32.totalorder %s34, 1
        %s644 = scalar_select %p643, %s34, 1
        %s645 = scalar_lea.vmem %s2, %s644
        %p646 = pneg %p114
        %p647 = pneg %p111
        %p648 = scmp.lt.s32.totalorder %s34, 1
        %s649 = scalar_select %p648, %s34, 1
        %s650 = scalar_lea.vmem %s3, %s649
        %p651 = pneg %p140
        %p652 = pneg %p137
        %p653 = scmp.lt.s32.totalorder %s34, 1
        %s654 = scalar_select %p653, %s34, 1
        %s655 = smul.addr %s654, 4
        %s656 = smul.addr %s655, 4
        %s657 = scalar_lea.vmem %s4, %s656
        %p658 = pneg %p166
        %p659 = pneg %p163
        %p660 = scmp.lt.s32.totalorder %s34, 1
        %s661 = scalar_select %p660, %s34, 1
        %s662 = scalar_lea.vmem %s5, %s661
        %p663 = pneg %p192
        %p664 = pneg %p189
        %p665 = scmp.lt.s32.totalorder %s34, 1
        %s666 = scalar_select %p665, %s34, 1
        %s667 = smul.addr %s666, 2
        %s668 = scalar_lea.vmem %s6, %s667
        %p669 = pneg %p218
        %p670 = pneg %p215
        %p671 = scmp.lt.s32.totalorder %s34, 1
        %s672 = scalar_select %p671, %s34, 1
        %s673 = smul.addr %s672, 4
        %s674 = smul.addr %s673, 4
        %s675 = scalar_lea.vmem %s7, %s674
        %p676 = pneg %p244
        %p677 = pneg %p241
        %p678 = scmp.lt.s32.totalorder %s34, 1
        %s679 = scalar_select %p678, %s34, 1
        %s680 = scalar_lea.vmem %s8, %s679
        %p681 = pneg %p270
        %p682 = pneg %p267
        %p683 = scmp.lt.s32.totalorder %s34, 1
        %s684 = scalar_select %p683, %s34, 1
        %s685 = scalar_lea.vmem %s9, %s684
        %p686 = pneg %p296
        %p687 = pneg %p293
        %p688 = scmp.lt.s32.totalorder %s34, 1
        %s689 = scalar_select %p688, %s34, 1
        %s690 = scalar_lea.vmem %s10, %s689
        %p691 = pneg %p322
        %p692 = pneg %p319
        %p693 = scmp.lt.s32.totalorder %s34, 1
        %s694 = scalar_select %p693, %s34, 1
        %s695 = smul.addr %s694, 4
        %s696 = smul.addr %s695, 4
        %s697 = scalar_lea.vmem %s11, %s696
        %p698 = pneg %p348
        %p699 = pneg %p345
        %p700 = scmp.lt.s32.totalorder %s34, 1
        %s701 = scalar_select %p700, %s34, 1
        %s702 = scalar_lea.vmem %s12, %s701
        %p703 = pneg %p374
        %p704 = pneg %p371
        %p705 = scmp.lt.s32.totalorder %s34, 1
        %s706 = scalar_select %p705, %s34, 1
        %s707 = smul.addr %s706, 16
        %s708 = smul.addr %s707, 4
        %s709 = scalar_lea.vmem %s13, %s708
        %p710 = pneg %p400
        %p711 = pneg %p397
        %p712 = scmp.lt.s32.totalorder %s34, 1
        %s713 = scalar_select %p712, %s34, 1
        %s714 = scalar_lea.vmem %s14, %s713
        %p715 = pneg %p426
        %p716 = pneg %p423
        %p717 = pneg %p447
        %p718 = pneg %p444
        %p719 = pneg %p468
        %p720 = pneg %p465
        %p721 = pneg %p494
        %p722 = pneg %p491
        %s723 = smul.u32 2, %s33
        %p724 = scmp.lt.s32.totalorder %s723, 1
        %s725 = scalar_select %p724, %s723, 1
        %s726 = smul.addr %s725, 8
        %s727 = scalar_lea.vmem %s0, %s726
        %s728 = smul.u32 2, %s33
        %s729 = smul.u32 2, %s33
        %p730 = scmp.lt.s32.totalorder %s729, 1
        %s731 = scalar_select %p730, %s729, 1
        %s732 = scalar_lea.vmem %s1, %s731
        %s733 = smul.u32 2, %s33
        %p734 = scmp.lt.s32.totalorder %s34, 1
        %s735 = scalar_select %p734, %s34, 1
        %s736 = scalar_lea.vmem %s2, %s735
        %p737 = scmp.lt.s32.totalorder %s34, 1
        %s738 = scalar_select %p737, %s34, 1
        %s739 = scalar_lea.vmem %s3, %s738
        %p740 = scmp.lt.s32.totalorder %s34, 1
        %s741 = scalar_select %p740, %s34, 1
        %s742 = smul.addr %s741, 4
        %s743 = smul.addr %s742, 4
        %s744 = scalar_lea.vmem %s4, %s743
        %p745 = scmp.lt.s32.totalorder %s34, 1
        %s746 = scalar_select %p745, %s34, 1
        %s747 = scalar_lea.vmem %s5, %s746
        %p748 = scmp.lt.s32.totalorder %s34, 1
        %s749 = scalar_select %p748, %s34, 1
        %s750 = smul.addr %s749, 2
        %s751 = scalar_lea.vmem %s6, %s750
        %p752 = scmp.lt.s32.totalorder %s34, 1
        %s753 = scalar_select %p752, %s34, 1
        %s754 = smul.addr %s753, 4
        %s755 = smul.addr %s754, 4
        %s756 = scalar_lea.vmem %s7, %s755
        %p757 = scmp.lt.s32.totalorder %s34, 1
        %s758 = scalar_select %p757, %s34, 1
        %s759 = scalar_lea.vmem %s8, %s758
        %p760 = scmp.lt.s32.totalorder %s34, 1
        %s761 = scalar_select %p760, %s34, 1
        %s762 = scalar_lea.vmem %s9, %s761
        %p763 = scmp.lt.s32.totalorder %s34, 1
        %s764 = scalar_select %p763, %s34, 1
        %s765 = scalar_lea.vmem %s10, %s764
        %p766 = scmp.lt.s32.totalorder %s34, 1
        %s767 = scalar_select %p766, %s34, 1
        %s768 = smul.addr %s767, 4
        %s769 = smul.addr %s768, 4
        %s770 = scalar_lea.vmem %s11, %s769
        %p771 = scmp.lt.s32.totalorder %s34, 1
        %s772 = scalar_select %p771, %s34, 1
        %s773 = scalar_lea.vmem %s12, %s772
        %p774 = scmp.lt.s32.totalorder %s34, 1
        %s775 = scalar_select %p774, %s34, 1
        %s776 = smul.addr %s775, 16
        %s777 = smul.addr %s776, 4
        %s778 = scalar_lea.vmem %s13, %s777
        %p779 = scmp.lt.s32.totalorder %s34, 1
        %s780 = scalar_select %p779, %s34, 1
        %s781 = scalar_lea.vmem %s14, %s780
        %s782 = smul.u32 2, %s33
        %p784 = scmp.eq.s32.totalorder %s34, 0
        // Predicated region
        $region89: #{transformer_encoder_forward.1} parent=87 // pred_check
          %p785 = pneg %p784
        $region90: #{transformer_encoder_forward.1} parent=87 // pred_check_branch
          %787 = sbr.rel (%p785) target = $region92
        $region91: #{transformer_encoder_forward.1} parent=87 // pred_region
          %v788 = vld [vmem:[%s727] sm:$0xff]
          %v789 = vld [vmem:[%s727 + $0x8] sm:$0xff]
          %vm790 = vcmask 261120
          %791 = vst.msk [vmem:[#allocation3] sm:$0xff] %vm790, %v788
          %792 = vst.msk [vmem:[#allocation3 + $0x8] sm:$0xff] %vm790, %v789
        $region92: #{transformer_encoder_forward.1} parent=87 // pred_fallthru
          _
        %v793 = vld [vmem:[#allocation3] sm:$0xff]
        %v794 = vld [vmem:[#allocation3 + $0x8] sm:$0xff]
        %v795 = vld [vmem:[%s736] sm:$0x1]
        %v796 = vld [vmem:[%s739] sm:$0x1]
        %vm797 = vcmask 261120
        %v798 = vsel %vm797, %v793, 0.0
        %799 = vadd.xlane.f32.xlu0 %v798
        %v800 = vpop.xlane.xlu0 %799
        %v801 = vsel %vm797, %v794, 0.0
        %802 = vadd.xlane.f32.xlu0 %v801
        %v803 = vpop.xlane.xlu0 %802
        %v804 = vrcp.pop 32.0
        %v805 = vmul.f32 32.0, %v804
        %v806 = vsub.f32 1.0, %v805
        %v807 = vmul.f32 %v804, %v806
        %v808 = vadd.f32 %v804, %v807
        %vm809 = vweird.f32 %v804
        %v810 = vsel %vm809, %v804, %v808
        %v811 = vmul.f32 %v800, %v810
        %v812 = vmul.f32 %v803, %v810
        %v813 = vsub.f32 %v793, %v811
        %v814 = vsub.f32 %v794, %v812
        %v815 = vmul.f32 %v813, %v813
        %v816 = vmul.f32 %v814, %v814
        %v817 = vsel %vm797, %v815, 0.0
        %818 = vadd.xlane.f32.xlu0 %v817
        %v819 = vpop.xlane.xlu0 %818
        %v820 = vsel %vm797, %v816, 0.0
        %821 = vadd.xlane.f32.xlu0 %v820
        %v822 = vpop.xlane.xlu0 %821
        %v823 = vmul.f32 %v819, %v810
        %v824 = vmul.f32 %v822, %v810
        %v825 = vadd.f32 %v823, 1e-05
        %v826 = vadd.f32 %v824, 1e-05
        %v827 = vrsqrt.pop %v825
        %v828 = vmul.f32 %v827, %v825
        %v829 = vmul.f32 %v828, %v827
        %v830 = vmul.f32 0.5, %v829
        %v831 = vsub.f32 1.5, %v830
        %v832 = vmul.f32 %v827, %v831
        %vm833 = vweird.f32 %v825
        %vm834 = vweird.f32 %v827
        %vm835 = vmor %vm833, %vm834
        %v836 = vsel %vm835, %v827, %v832
        %v837 = vrsqrt.pop %v826
        %v838 = vmul.f32 %v837, %v826
        %v839 = vmul.f32 %v838, %v837
        %v840 = vmul.f32 0.5, %v839
        %v841 = vsub.f32 1.5, %v840
        %v842 = vmul.f32 %v837, %v841
        %vm843 = vweird.f32 %v826
        %vm844 = vweird.f32 %v837
        %vm845 = vmor %vm843, %vm844
        %v846 = vsel %vm845, %v837, %v842
        %v847 = vmul.f32 %v813, %v836
        %v848 = vmul.f32 %v814, %v846
        %v850 = vperm.slane %v795, 0
        %v852 = vmul.f32 %v847, %v850
        %v853 = vmul.f32 %v848, %v850
        %v855 = vperm.slane %v796, 0
        %v857 = vadd.f32 %v852, %v855
        %v858 = vadd.f32 %v853, %v855
        %v859 = vpack.c.bf16 %v858, %v857
        %v860 = vld [vmem:[%s744] sm:$0xf]
        %v861 = vld [vmem:[%s744 + $0x4] sm:$0xf]
        %v862 = vld [vmem:[%s744 + $0x8] sm:$0xf]
        %v863 = vld [vmem:[%s744 + $0xc] sm:$0xf]
        %v864 = vld [vmem:[%s747] sm:$0x1]
        %v866 = vperm.slane %v864, 0
        %v872 = vunpack.c.l.b16 %v860
        %v873 = vunpack.c.l.b16 %v861
        %v874 = vunpack.c.l.b16 %v862
        %v875 = vunpack.c.l.b16 %v863
        %v876 = vpack.c.b16 %v873, %v872
        %v877 = vpack.c.b16 %v875, %v874
        %v881 = vsel %vm797, %v859, 0
        %883 = vmatpush.bf16.msra.mxu0 0
        %884 = vmatpush.bf16.msra.mxu0 0
        %885 = vmatpush.bf16.msra.mxu0 0
        %886 = vmatpush.bf16.msra.mxu0 0
        %887 = vmatpush.bf16.msra.mxu0 0
        %888 = vmatpush.bf16.msra.mxu0 0
        %889 = vmatpush.bf16.msra.mxu0 %v877
        %890 = vmatpush.bf16.msra.mxu0 %v876
        %891 = vmatmul.bf16.gmra.mxu0 %v881
        %v892 = vpop.f32.mrf.mxu0
        %v893 = vadd.f32 %v866, %v892
        %v894 = vpop.f32.mrf.mxu0
        %v895 = vadd.f32 %v866, %v894
        %896 = vdwg.mxu0
        %v897 = vld [vmem:[%s751] sm:$0x3]
        %v898 = vlaneseq
        %v899 = vshrl.u32 %v898, 7
        %v900 = vsub.s32 7, %v899
        %v901 = vld [vmem:[%s732] sm:$0x1]
        %v902 = vpack.c.bf16 %v893, %v893
        %vm903 = vcmask 31744
        %v905 = vsel %vm903, %v902, 0
        %vm907 = vcmask 1041408
        %v909 = vsel %vm907, %v897, 0
        %911 = vmatpush.bf16.msra.mxu0 0
        %912 = vmatpush.bf16.msra.mxu0 0
        %913 = vmatpush.bf16.msra.mxu0 0
        %914 = vmatpush.bf16.msra.mxu0 0
        %915 = vmatpush.bf16.msra.mxu0 0
        %916 = vmatpush.bf16.msra.mxu0 0
        %917 = vmatpush.bf16.msra.mxu0 0
        %918 = vmatpush.bf16.msra.mxu0 %v909
        %919 = vmatmul.bf16.gmra.mxu0 %v905
        %v920 = vpop.f32.mrf.mxu0
        %v921 = vadd.f32 0.0, %v920
        %v922 = vpop.f32.mrf.mxu0
        %923 = vdwg.mxu0
        %925 = vrot.lane.b32.xlu0 %v921, 127
        %v926 = vpop.permute.xlu0 %925
        %vm928 = vcmask 113664
        %v929 = vsel %vm928, %v926, 0.0
        %v930 = vand.u32 %v900, 1
        %vm931 = vcmp.eq.s32.totalorder %v930, 1
        %v932 = vsel %vm931, 1, 0
        %vm933 = vcmp.eq.s32.totalorder %v932, 1
        %v934 = vsel %vm933, %v929, %v921
        %936 = vrot.lane.b32.xlu0 %v934, 126
        %v937 = vpop.permute.xlu0 %936
        %vm939 = vcmask 105472
        %v940 = vsel %vm939, %v937, 0.0
        %v941 = vshra.s32 %v900, 1
        %v942 = vand.u32 %v941, 1
        %vm943 = vcmp.eq.s32.totalorder %v942, 1
        %v944 = vsel %vm943, 1, 0
        %vm945 = vcmp.eq.s32.totalorder %v944, 1
        %v946 = vsel %vm945, %v940, %v934
        %948 = vrot.lane.b32.xlu0 %v946, 124
        %v949 = vpop.permute.xlu0 %948
        %vm951 = vcmask 89088
        %v952 = vsel %vm951, %v949, 0.0
        %v953 = vshra.s32 %v900, 2
        %v954 = vand.u32 %v953, 1
        %vm955 = vcmp.eq.s32.totalorder %v954, 1
        %v956 = vsel %vm955, 1, 0
        %vm957 = vcmp.eq.s32.totalorder %v956, 1
        %v958 = vsel %vm957, %v952, %v946
        %960 = vrot.lane.b32.xlu0 %v902, 96
        %v961 = vpop.permute.xlu0 %960
        %v963 = vsel %vm903, %v961, 0
        %965 = vmatpush.bf16.xpose.msra.mxu0 0
        %966 = vmatpush.bf16.xpose.msra.mxu0 0
        %967 = vmatpush.bf16.xpose.msra.mxu0 0
        %968 = vmatpush.bf16.xpose.msra.mxu0 0
        %969 = vmatpush.bf16.xpose.msra.mxu0 0
        %970 = vmatpush.bf16.xpose.msra.mxu0 0
        %971 = vmatpush.bf16.xpose.msra.mxu0 0
        %972 = vmatpush.bf16.xpose.msra.mxu0 %v963
        %973 = vmatmul.bf16.gmra.mxu0 %v905
        %v974 = vpop.f32.mrf.mxu0
        %v975 = vadd.f32 %v958, %v974
        %v976 = vpop.f32.mrf.mxu0
        %977 = vdwg.mxu0
        %v979 = vperm.slane %v901, 0
        %v981 = vadd.f32 %v975, %v979
        %vm982 = vcmask 64512
        %v983 = vsel %vm982, %v981, -inf
        %984 = vmax.xlane.f32.xlu0 %v983
        %v985 = vpop.xlane.xlu0 %984
        %v986 = vsub.f32 %v981, %v985
        %v987 = vmul.f32 %v986, 1.442695
        %v988 = vpow.pop %v987
        %v989 = vsel %vm982, %v988, 0.0
        %990 = vadd.xlane.f32.xlu0 %v989
        %v991 = vpop.xlane.xlu0 %990
        %v992 = vrcp.pop %v991
        %v993 = vmul.f32 %v988, %v992
        %v994 = vpack.c.bf16 %v993, %v993
        %995 = vrot.lane.b32.xlu0 %v902, 64
        %v996 = vpop.permute.xlu0 %995
        %v998 = vsel %vm982, %v994, 0
        %vm1000 = vcmask 1043456
        %v1002 = vsel %vm1000, %v996, 0
        %1004 = vmatpush.bf16.msra.mxu0 0
        %1005 = vmatpush.bf16.msra.mxu0 0
        %1006 = vmatpush.bf16.msra.mxu0 0
        %1007 = vmatpush.bf16.msra.mxu0 0
        %1008 = vmatpush.bf16.msra.mxu0 0
        %1009 = vmatpush.bf16.msra.mxu0 0
        %1010 = vmatpush.bf16.msra.mxu0 0
        %1011 = vmatpush.bf16.msra.mxu0 %v1002
        %1012 = vmatmul.bf16.gmra.mxu0 %v998
        %v1013 = vpop.f32.mrf.mxu0
        %v1014 = vadd.f32 0.0, %v1013
        %v1015 = vpop.f32.mrf.mxu0
        %1016 = vdwg.mxu0
        %v1017 = vpack.c.bf16 %v1014, %v1014
        %vm1018 = vcmask 27648
        %1019 = vst.msk [vmem:[#allocation2] sm:$0xf] %vm1018, %v1017
        %1020 = vrot.lane.b32.xlu0 %v902, 124
        %v1021 = vpop.permute.xlu0 %1020
        %v1023 = vsel %vm903, %v1021, 0
        %1025 = vmatpush.bf16.msra.mxu0 0
        %1026 = vmatpush.bf16.msra.mxu0 0
        %1027 = vmatpush.bf16.msra.mxu0 0
        %1028 = vmatpush.bf16.msra.mxu0 0
        %1029 = vmatpush.bf16.msra.mxu0 0
        %1030 = vmatpush.bf16.msra.mxu0 0
        %1031 = vmatpush.bf16.msra.mxu0 0
        %1032 = vmatpush.bf16.msra.mxu0 %v909
        %1033 = vmatmul.bf16.gmra.mxu0 %v1023
        %v1034 = vpop.f32.mrf.mxu0
        %v1035 = vadd.f32 0.0, %v1034
        %v1036 = vpop.f32.mrf.mxu0
        %1037 = vdwg.mxu0
        %1039 = vrot.lane.b32.xlu0 %v1035, 127
        %v1040 = vpop.permute.xlu0 %1039
        %v1042 = vsel %vm928, %v1040, 0.0
        %v1043 = vsel %vm933, %v1042, %v1035
        %1045 = vrot.lane.b32.xlu0 %v1043, 126
        %v1046 = vpop.permute.xlu0 %1045
        %v1048 = vsel %vm939, %v1046, 0.0
        %v1049 = vsel %vm945, %v1048, %v1043
        %1051 = vrot.lane.b32.xlu0 %v1049, 124
        %v1052 = vpop.permute.xlu0 %1051
        %v1054 = vsel %vm951, %v1052, 0.0
        %v1055 = vsel %vm957, %v1054, %v1049
        %1056 = vrot.lane.b32.xlu0 %v902, 92
        %v1057 = vpop.permute.xlu0 %1056
        %v1059 = vsel %vm903, %v1057, 0
        %1061 = vmatpush.bf16.xpose.msra.mxu0 0
        %1062 = vmatpush.bf16.xpose.msra.mxu0 0
        %1063 = vmatpush.bf16.xpose.msra.mxu0 0
        %1064 = vmatpush.bf16.xpose.msra.mxu0 0
        %1065 = vmatpush.bf16.xpose.msra.mxu0 0
        %1066 = vmatpush.bf16.xpose.msra.mxu0 0
        %1067 = vmatpush.bf16.xpose.msra.mxu0 0
        %1068 = vmatpush.bf16.xpose.msra.mxu0 %v1059
        %1069 = vmatmul.bf16.gmra.mxu0 %v1023
        %v1070 = vpop.f32.mrf.mxu0
        %v1071 = vadd.f32 %v1055, %v1070
        %v1072 = vpop.f32.mrf.mxu0
        %1073 = vdwg.mxu0
        %v1074 = vadd.f32 %v1071, %v979
        %v1075 = vsel %vm982, %v1074, -inf
        %1076 = vmax.xlane.f32.xlu0 %v1075
        %v1077 = vpop.xlane.xlu0 %1076
        %v1078 = vsub.f32 %v1074, %v1077
        %v1079 = vmul.f32 %v1078, 1.442695
        %v1080 = vpow.pop %v1079
        %v1081 = vsel %vm982, %v1080, 0.0
        %1082 = vadd.xlane.f32.xlu0 %v1081
        %v1083 = vpop.xlane.xlu0 %1082
        %v1084 = vrcp.pop %v1083
        %v1085 = vmul.f32 %v1080, %v1084
        %v1086 = vpack.c.bf16 %v1085, %v1085
        %1087 = vrot.lane.b32.xlu0 %v902, 60
        %v1088 = vpop.permute.xlu0 %1087
        %v1090 = vsel %vm982, %v1086, 0
        %v1093 = vsel %vm1000, %v1088, 0
        %1095 = vmatpush.bf16.msra.mxu0 0
        %1096 = vmatpush.bf16.msra.mxu0 0
        %1097 = vmatpush.bf16.msra.mxu0 0
        %1098 = vmatpush.bf16.msra.mxu0 0
        %1099 = vmatpush.bf16.msra.mxu0 0
        %1100 = vmatpush.bf16.msra.mxu0 0
        %1101 = vmatpush.bf16.msra.mxu0 0
        %1102 = vmatpush.bf16.msra.mxu0 %v1093
        %1103 = vmatmul.bf16.gmra.mxu0 %v1090
        %v1104 = vpop.f32.mrf.mxu0
        %v1105 = vadd.f32 0.0, %v1104
        %v1106 = vpop.f32.mrf.mxu0
        %1107 = vdwg.mxu0
        %v1108 = vpack.c.bf16 %v1105, %v1105
        %1110 = vrot.lane.b32.xlu0 %v1108, 4
        %v1111 = vpop.permute.xlu0 %1110
        %vm1113 = vcmask 60448
        %1114 = vst.msk [vmem:[#allocation2] sm:$0xf] %vm1113, %v1111
        %1115 = vrot.lane.b32.xlu0 %v902, 120
        %v1116 = vpop.permute.xlu0 %1115
        %v1118 = vsel %vm903, %v1116, 0
        %1120 = vmatpush.bf16.msra.mxu0 0
        %1121 = vmatpush.bf16.msra.mxu0 0
        %1122 = vmatpush.bf16.msra.mxu0 0
        %1123 = vmatpush.bf16.msra.mxu0 0
        %1124 = vmatpush.bf16.msra.mxu0 0
        %1125 = vmatpush.bf16.msra.mxu0 0
        %1126 = vmatpush.bf16.msra.mxu0 0
        %1127 = vmatpush.bf16.msra.mxu0 %v909
        %1128 = vmatmul.bf16.gmra.mxu0 %v1118
        %v1129 = vpop.f32.mrf.mxu0
        %v1130 = vadd.f32 0.0, %v1129
        %v1131 = vpop.f32.mrf.mxu0
        %1132 = vdwg.mxu0
        %1134 = vrot.lane.b32.xlu0 %v1130, 127
        %v1135 = vpop.permute.xlu0 %1134
        %v1137 = vsel %vm928, %v1135, 0.0
        %v1138 = vsel %vm933, %v1137, %v1130
        %1140 = vrot.lane.b32.xlu0 %v1138, 126
        %v1141 = vpop.permute.xlu0 %1140
        %v1143 = vsel %vm939, %v1141, 0.0
        %v1144 = vsel %vm945, %v1143, %v1138
        %1146 = vrot.lane.b32.xlu0 %v1144, 124
        %v1147 = vpop.permute.xlu0 %1146
        %v1149 = vsel %vm951, %v1147, 0.0
        %v1150 = vsel %vm957, %v1149, %v1144
        %1151 = vrot.lane.b32.xlu0 %v902, 88
        %v1152 = vpop.permute.xlu0 %1151
        %v1154 = vsel %vm903, %v1152, 0
        %1156 = vmatpush.bf16.xpose.msra.mxu0 0
        %1157 = vmatpush.bf16.xpose.msra.mxu0 0
        %1158 = vmatpush.bf16.xpose.msra.mxu0 0
        %1159 = vmatpush.bf16.xpose.msra.mxu0 0
        %1160 = vmatpush.bf16.xpose.msra.mxu0 0
        %1161 = vmatpush.bf16.xpose.msra.mxu0 0
        %1162 = vmatpush.bf16.xpose.msra.mxu0 0
        %1163 = vmatpush.bf16.xpose.msra.mxu0 %v1154
        %1164 = vmatmul.bf16.gmra.mxu0 %v1118
        %v1165 = vpop.f32.mrf.mxu0
        %v1166 = vadd.f32 %v1150, %v1165
        %v1167 = vpop.f32.mrf.mxu0
        %1168 = vdwg.mxu0
        %v1169 = vadd.f32 %v1166, %v979
        %v1170 = vsel %vm982, %v1169, -inf
        %1171 = vmax.xlane.f32.xlu0 %v1170
        %v1172 = vpop.xlane.xlu0 %1171
        %v1173 = vsub.f32 %v1169, %v1172
        %v1174 = vmul.f32 %v1173, 1.442695
        %v1175 = vpow.pop %v1174
        %v1176 = vsel %vm982, %v1175, 0.0
        %1177 = vadd.xlane.f32.xlu0 %v1176
        %v1178 = vpop.xlane.xlu0 %1177
        %v1179 = vrcp.pop %v1178
        %v1180 = vmul.f32 %v1175, %v1179
        %v1181 = vpack.c.bf16 %v1180, %v1180
        %1182 = vrot.lane.b32.xlu0 %v902, 56
        %v1183 = vpop.permute.xlu0 %1182
        %v1185 = vsel %vm982, %v1181, 0
        %v1188 = vsel %vm1000, %v1183, 0
        %1190 = vmatpush.bf16.msra.mxu0 0
        %1191 = vmatpush.bf16.msra.mxu0 0
        %1192 = vmatpush.bf16.msra.mxu0 0
        %1193 = vmatpush.bf16.msra.mxu0 0
        %1194 = vmatpush.bf16.msra.mxu0 0
        %1195 = vmatpush.bf16.msra.mxu0 0
        %1196 = vmatpush.bf16.msra.mxu0 0
        %1197 = vmatpush.bf16.msra.mxu0 %v1188
        %1198 = vmatmul.bf16.gmra.mxu0 %v1185
        %v1199 = vpop.f32.mrf.mxu0
        %v1200 = vadd.f32 0.0, %v1199
        %v1201 = vpop.f32.mrf.mxu0
        %1202 = vdwg.mxu0
        %v1203 = vpack.c.bf16 %v1200, %v1200
        %1205 = vrot.lane.b32.xlu0 %v1203, 8
        %v1206 = vpop.permute.xlu0 %1205
        %vm1208 = vcmask 93248
        %1209 = vst.msk [vmem:[#allocation2] sm:$0xf] %vm1208, %v1206
        %1210 = vrot.lane.b32.xlu0 %v902, 116
        %v1211 = vpop.permute.xlu0 %1210
        %v1213 = vsel %vm903, %v1211, 0
        %1215 = vmatpush.bf16.msra.mxu0 0
        %1216 = vmatpush.bf16.msra.mxu0 0
        %1217 = vmatpush.bf16.msra.mxu0 0
        %1218 = vmatpush.bf16.msra.mxu0 0
        %1219 = vmatpush.bf16.msra.mxu0 0
        %1220 = vmatpush.bf16.msra.mxu0 0
        %1221 = vmatpush.bf16.msra.mxu0 0
        %1222 = vmatpush.bf16.msra.mxu0 %v909
        %1223 = vmatmul.bf16.gmra.mxu0 %v1213
        %v1224 = vpop.f32.mrf.mxu0
        %v1225 = vadd.f32 0.0, %v1224
        %v1226 = vpop.f32.mrf.mxu0
        %1227 = vdwg.mxu0
        %1229 = vrot.lane.b32.xlu0 %v1225, 127
        %v1230 = vpop.permute.xlu0 %1229
        %v1232 = vsel %vm928, %v1230, 0.0
        %v1233 = vsel %vm933, %v1232, %v1225
        %1235 = vrot.lane.b32.xlu0 %v1233, 126
        %v1236 = vpop.permute.xlu0 %1235
        %v1238 = vsel %vm939, %v1236, 0.0
        %v1239 = vsel %vm945, %v1238, %v1233
        %1241 = vrot.lane.b32.xlu0 %v1239, 124
        %v1242 = vpop.permute.xlu0 %1241
        %v1244 = vsel %vm951, %v1242, 0.0
        %v1245 = vsel %vm957, %v1244, %v1239
        %1246 = vrot.lane.b32.xlu0 %v902, 84
        %v1247 = vpop.permute.xlu0 %1246
        %v1249 = vsel %vm903, %v1247, 0
        %1251 = vmatpush.bf16.xpose.msra.mxu0 0
        %1252 = vmatpush.bf16.xpose.msra.mxu0 0
        %1253 = vmatpush.bf16.xpose.msra.mxu0 0
        %1254 = vmatpush.bf16.xpose.msra.mxu0 0
        %1255 = vmatpush.bf16.xpose.msra.mxu0 0
        %1256 = vmatpush.bf16.xpose.msra.mxu0 0
        %1257 = vmatpush.bf16.xpose.msra.mxu0 0
        %1258 = vmatpush.bf16.xpose.msra.mxu0 %v1249
        %1259 = vmatmul.bf16.gmra.mxu0 %v1213
        %v1260 = vpop.f32.mrf.mxu0
        %v1261 = vadd.f32 %v1245, %v1260
        %v1262 = vpop.f32.mrf.mxu0
        %1263 = vdwg.mxu0
        %v1264 = vadd.f32 %v1261, %v979
        %v1265 = vsel %vm982, %v1264, -inf
        %1266 = vmax.xlane.f32.xlu0 %v1265
        %v1267 = vpop.xlane.xlu0 %1266
        %v1268 = vsub.f32 %v1264, %v1267
        %v1269 = vmul.f32 %v1268, 1.442695
        %v1270 = vpow.pop %v1269
        %v1271 = vsel %vm982, %v1270, 0.0
        %1272 = vadd.xlane.f32.xlu0 %v1271
        %v1273 = vpop.xlane.xlu0 %1272
        %v1274 = vrcp.pop %v1273
        %v1275 = vmul.f32 %v1270, %v1274
        %v1276 = vpack.c.bf16 %v1275, %v1275
        %1277 = vrot.lane.b32.xlu0 %v902, 52
        %v1278 = vpop.permute.xlu0 %1277
        %v1280 = vsel %vm982, %v1276, 0
        %v1283 = vsel %vm1000, %v1278, 0
        %1285 = vmatpush.bf16.msra.mxu0 0
        %1286 = vmatpush.bf16.msra.mxu0 0
        %1287 = vmatpush.bf16.msra.mxu0 0
        %1288 = vmatpush.bf16.msra.mxu0 0
        %1289 = vmatpush.bf16.msra.mxu0 0
        %1290 = vmatpush.bf16.msra.mxu0 0
        %1291 = vmatpush.bf16.msra.mxu0 0
        %1292 = vmatpush.bf16.msra.mxu0 %v1283
        %1293 = vmatmul.bf16.gmra.mxu0 %v1280
        %v1294 = vpop.f32.mrf.mxu0
        %v1295 = vadd.f32 0.0, %v1294
        %v1296 = vpop.f32.mrf.mxu0
        %1297 = vdwg.mxu0
        %v1298 = vpack.c.bf16 %v1295, %v1295
        %1300 = vrot.lane.b32.xlu0 %v1298, 12
        %v1301 = vpop.permute.xlu0 %1300
        %vm1303 = vcmask 126048
        %1304 = vst.msk [vmem:[#allocation2] sm:$0xf] %vm1303, %v1301
        %1305 = vrot.lane.b32.xlu0 %v902, 112
        %v1306 = vpop.permute.xlu0 %1305
        %v1308 = vsel %vm903, %v1306, 0
        %1310 = vmatpush.bf16.msra.mxu0 0
        %1311 = vmatpush.bf16.msra.mxu0 0
        %1312 = vmatpush.bf16.msra.mxu0 0
        %1313 = vmatpush.bf16.msra.mxu0 0
        %1314 = vmatpush.bf16.msra.mxu0 0
        %1315 = vmatpush.bf16.msra.mxu0 0
        %1316 = vmatpush.bf16.msra.mxu0 0
        %1317 = vmatpush.bf16.msra.mxu0 %v909
        %1318 = vmatmul.bf16.gmra.mxu0 %v1308
        %v1319 = vpop.f32.mrf.mxu0
        %v1320 = vadd.f32 0.0, %v1319
        %v1321 = vpop.f32.mrf.mxu0
        %1322 = vdwg.mxu0
        %1324 = vrot.lane.b32.xlu0 %v1320, 127
        %v1325 = vpop.permute.xlu0 %1324
        %v1327 = vsel %vm928, %v1325, 0.0
        %v1328 = vsel %vm933, %v1327, %v1320
        %1330 = vrot.lane.b32.xlu0 %v1328, 126
        %v1331 = vpop.permute.xlu0 %1330
        %v1333 = vsel %vm939, %v1331, 0.0
        %v1334 = vsel %vm945, %v1333, %v1328
        %1336 = vrot.lane.b32.xlu0 %v1334, 124
        %v1337 = vpop.permute.xlu0 %1336
        %v1339 = vsel %vm951, %v1337, 0.0
        %v1340 = vsel %vm957, %v1339, %v1334
        %1341 = vrot.lane.b32.xlu0 %v902, 80
        %v1342 = vpop.permute.xlu0 %1341
        %v1344 = vsel %vm903, %v1342, 0
        %1346 = vmatpush.bf16.xpose.msra.mxu0 0
        %1347 = vmatpush.bf16.xpose.msra.mxu0 0
        %1348 = vmatpush.bf16.xpose.msra.mxu0 0
        %1349 = vmatpush.bf16.xpose.msra.mxu0 0
        %1350 = vmatpush.bf16.xpose.msra.mxu0 0
        %1351 = vmatpush.bf16.xpose.msra.mxu0 0
        %1352 = vmatpush.bf16.xpose.msra.mxu0 0
        %1353 = vmatpush.bf16.xpose.msra.mxu0 %v1344
        %1354 = vmatmul.bf16.gmra.mxu0 %v1308
        %v1355 = vpop.f32.mrf.mxu0
        %v1356 = vadd.f32 %v1340, %v1355
        %v1357 = vpop.f32.mrf.mxu0
        %1358 = vdwg.mxu0
        %v1359 = vadd.f32 %v1356, %v979
        %v1360 = vsel %vm982, %v1359, -inf
        %1361 = vmax.xlane.f32.xlu0 %v1360
        %v1362 = vpop.xlane.xlu0 %1361
        %v1363 = vsub.f32 %v1359, %v1362
        %v1364 = vmul.f32 %v1363, 1.442695
        %v1365 = vpow.pop %v1364
        %v1366 = vsel %vm982, %v1365, 0.0
        %1367 = vadd.xlane.f32.xlu0 %v1366
        %v1368 = vpop.xlane.xlu0 %1367
        %v1369 = vrcp.pop %v1368
        %v1370 = vmul.f32 %v1365, %v1369
        %v1371 = vpack.c.bf16 %v1370, %v1370
        %1372 = vrot.lane.b32.xlu0 %v902, 48
        %v1373 = vpop.permute.xlu0 %1372
        %v1375 = vsel %vm982, %v1371, 0
        %v1378 = vsel %vm1000, %v1373, 0
        %1380 = vmatpush.bf16.msra.mxu0 0
        %1381 = vmatpush.bf16.msra.mxu0 0
        %1382 = vmatpush.bf16.msra.mxu0 0
        %1383 = vmatpush.bf16.msra.mxu0 0
        %1384 = vmatpush.bf16.msra.mxu0 0
        %1385 = vmatpush.bf16.msra.mxu0 0
        %1386 = vmatpush.bf16.msra.mxu0 0
        %1387 = vmatpush.bf16.msra.mxu0 %v1378
        %1388 = vmatmul.bf16.gmra.mxu0 %v1375
        %v1389 = vpop.f32.mrf.mxu0
        %v1390 = vadd.f32 0.0, %v1389
        %v1391 = vpop.f32.mrf.mxu0
        %1392 = vdwg.mxu0
        %v1393 = vpack.c.bf16 %v1390, %v1390
        %1395 = vrot.lane.b32.xlu0 %v1393, 16
        %v1396 = vpop.permute.xlu0 %1395
        %vm1398 = vcmask 158848
        %1399 = vst.msk [vmem:[#allocation2] sm:$0xf] %vm1398, %v1396
        %1400 = vrot.lane.b32.xlu0 %v902, 108
        %v1401 = vpop.permute.xlu0 %1400
        %v1403 = vsel %vm903, %v1401, 0
        %1405 = vmatpush.bf16.msra.mxu0 0
        %1406 = vmatpush.bf16.msra.mxu0 0
        %1407 = vmatpush.bf16.msra.mxu0 0
        %1408 = vmatpush.bf16.msra.mxu0 0
        %1409 = vmatpush.bf16.msra.mxu0 0
        %1410 = vmatpush.bf16.msra.mxu0 0
        %1411 = vmatpush.bf16.msra.mxu0 0
        %1412 = vmatpush.bf16.msra.mxu0 %v909
        %1413 = vmatmul.bf16.gmra.mxu0 %v1403
        %v1414 = vpop.f32.mrf.mxu0
        %v1415 = vadd.f32 0.0, %v1414
        %v1416 = vpop.f32.mrf.mxu0
        %1417 = vdwg.mxu0
        %1419 = vrot.lane.b32.xlu0 %v1415, 127
        %v1420 = vpop.permute.xlu0 %1419
        %v1422 = vsel %vm928, %v1420, 0.0
        %v1423 = vsel %vm933, %v1422, %v1415
        %1425 = vrot.lane.b32.xlu0 %v1423, 126
        %v1426 = vpop.permute.xlu0 %1425
        %v1428 = vsel %vm939, %v1426, 0.0
        %v1429 = vsel %vm945, %v1428, %v1423
        %1431 = vrot.lane.b32.xlu0 %v1429, 124
        %v1432 = vpop.permute.xlu0 %1431
        %v1434 = vsel %vm951, %v1432, 0.0
        %v1435 = vsel %vm957, %v1434, %v1429
        %1436 = vrot.lane.b32.xlu0 %v902, 76
        %v1437 = vpop.permute.xlu0 %1436
        %v1439 = vsel %vm903, %v1437, 0
        %1441 = vmatpush.bf16.xpose.msra.mxu0 0
        %1442 = vmatpush.bf16.xpose.msra.mxu0 0
        %1443 = vmatpush.bf16.xpose.msra.mxu0 0
        %1444 = vmatpush.bf16.xpose.msra.mxu0 0
        %1445 = vmatpush.bf16.xpose.msra.mxu0 0
        %1446 = vmatpush.bf16.xpose.msra.mxu0 0
        %1447 = vmatpush.bf16.xpose.msra.mxu0 0
        %1448 = vmatpush.bf16.xpose.msra.mxu0 %v1439
        %1449 = vmatmul.bf16.gmra.mxu0 %v1403
        %v1450 = vpop.f32.mrf.mxu0
        %v1451 = vadd.f32 %v1435, %v1450
        %v1452 = vpop.f32.mrf.mxu0
        %1453 = vdwg.mxu0
        %v1454 = vadd.f32 %v1451, %v979
        %v1455 = vsel %vm982, %v1454, -inf
        %1456 = vmax.xlane.f32.xlu0 %v1455
        %v1457 = vpop.xlane.xlu0 %1456
        %v1458 = vsub.f32 %v1454, %v1457
        %v1459 = vmul.f32 %v1458, 1.442695
        %v1460 = vpow.pop %v1459
        %v1461 = vsel %vm982, %v1460, 0.0
        %1462 = vadd.xlane.f32.xlu0 %v1461
        %v1463 = vpop.xlane.xlu0 %1462
        %v1464 = vrcp.pop %v1463
        %v1465 = vmul.f32 %v1460, %v1464
        %v1466 = vpack.c.bf16 %v1465, %v1465
        %1467 = vrot.lane.b32.xlu0 %v902, 44
        %v1468 = vpop.permute.xlu0 %1467
        %v1470 = vsel %vm982, %v1466, 0
        %v1473 = vsel %vm1000, %v1468, 0
        %1475 = vmatpush.bf16.msra.mxu0 0
        %1476 = vmatpush.bf16.msra.mxu0 0
        %1477 = vmatpush.bf16.msra.mxu0 0
        %1478 = vmatpush.bf16.msra.mxu0 0
        %1479 = vmatpush.bf16.msra.mxu0 0
        %1480 = vmatpush.bf16.msra.mxu0 0
        %1481 = vmatpush.bf16.msra.mxu0 0
        %1482 = vmatpush.bf16.msra.mxu0 %v1473
        %1483 = vmatmul.bf16.gmra.mxu0 %v1470
        %v1484 = vpop.f32.mrf.mxu0
        %v1485 = vadd.f32 0.0, %v1484
        %v1486 = vpop.f32.mrf.mxu0
        %1487 = vdwg.mxu0
        %v1488 = vpack.c.bf16 %v1485, %v1485
        %1490 = vrot.lane.b32.xlu0 %v1488, 20
        %v1491 = vpop.permute.xlu0 %1490
        %vm1493 = vcmask 191648
        %1494 = vst.msk [vmem:[#allocation2] sm:$0xf] %vm1493, %v1491
        %1495 = vrot.lane.b32.xlu0 %v902, 104
        %v1496 = vpop.permute.xlu0 %1495
        %v1498 = vsel %vm903, %v1496, 0
        %1500 = vmatpush.bf16.msra.mxu0 0
        %1501 = vmatpush.bf16.msra.mxu0 0
        %1502 = vmatpush.bf16.msra.mxu0 0
        %1503 = vmatpush.bf16.msra.mxu0 0
        %1504 = vmatpush.bf16.msra.mxu0 0
        %1505 = vmatpush.bf16.msra.mxu0 0
        %1506 = vmatpush.bf16.msra.mxu0 0
        %1507 = vmatpush.bf16.msra.mxu0 %v909
        %1508 = vmatmul.bf16.gmra.mxu0 %v1498
        %v1509 = vpop.f32.mrf.mxu0
        %v1510 = vadd.f32 0.0, %v1509
        %v1511 = vpop.f32.mrf.mxu0
        %1512 = vdwg.mxu0
        %1514 = vrot.lane.b32.xlu0 %v1510, 127
        %v1515 = vpop.permute.xlu0 %1514
        %v1517 = vsel %vm928, %v1515, 0.0
        %v1518 = vsel %vm933, %v1517, %v1510
        %1520 = vrot.lane.b32.xlu0 %v1518, 126
        %v1521 = vpop.permute.xlu0 %1520
        %v1523 = vsel %vm939, %v1521, 0.0
        %v1524 = vsel %vm945, %v1523, %v1518
        %1526 = vrot.lane.b32.xlu0 %v1524, 124
        %v1527 = vpop.permute.xlu0 %1526
        %v1529 = vsel %vm951, %v1527, 0.0
        %v1530 = vsel %vm957, %v1529, %v1524
        %1531 = vrot.lane.b32.xlu0 %v902, 72
        %v1532 = vpop.permute.xlu0 %1531
        %v1534 = vsel %vm903, %v1532, 0
        %1536 = vmatpush.bf16.xpose.msra.mxu0 0
        %1537 = vmatpush.bf16.xpose.msra.mxu0 0
        %1538 = vmatpush.bf16.xpose.msra.mxu0 0
        %1539 = vmatpush.bf16.xpose.msra.mxu0 0
        %1540 = vmatpush.bf16.xpose.msra.mxu0 0
        %1541 = vmatpush.bf16.xpose.msra.mxu0 0
        %1542 = vmatpush.bf16.xpose.msra.mxu0 0
        %1543 = vmatpush.bf16.xpose.msra.mxu0 %v1534
        %1544 = vmatmul.bf16.gmra.mxu0 %v1498
        %v1545 = vpop.f32.mrf.mxu0
        %v1546 = vadd.f32 %v1530, %v1545
        %v1547 = vpop.f32.mrf.mxu0
        %1548 = vdwg.mxu0
        %v1549 = vadd.f32 %v1546, %v979
        %v1550 = vsel %vm982, %v1549, -inf
        %1551 = vmax.xlane.f32.xlu0 %v1550
        %v1552 = vpop.xlane.xlu0 %1551
        %v1553 = vsub.f32 %v1549, %v1552
        %v1554 = vmul.f32 %v1553, 1.442695
        %v1555 = vpow.pop %v1554
        %v1556 = vsel %vm982, %v1555, 0.0
        %1557 = vadd.xlane.f32.xlu0 %v1556
        %v1558 = vpop.xlane.xlu0 %1557
        %v1559 = vrcp.pop %v1558
        %v1560 = vmul.f32 %v1555, %v1559
        %v1561 = vpack.c.bf16 %v1560, %v1560
        %1562 = vrot.lane.b32.xlu0 %v902, 40
        %v1563 = vpop.permute.xlu0 %1562
        %v1565 = vsel %vm982, %v1561, 0
        %v1568 = vsel %vm1000, %v1563, 0
        %1570 = vmatpush.bf16.msra.mxu0 0
        %1571 = vmatpush.bf16.msra.mxu0 0
        %1572 = vmatpush.bf16.msra.mxu0 0
        %1573 = vmatpush.bf16.msra.mxu0 0
        %1574 = vmatpush.bf16.msra.mxu0 0
        %1575 = vmatpush.bf16.msra.mxu0 0
        %1576 = vmatpush.bf16.msra.mxu0 0
        %1577 = vmatpush.bf16.msra.mxu0 %v1568
        %1578 = vmatmul.bf16.gmra.mxu0 %v1565
        %v1579 = vpop.f32.mrf.mxu0
        %v1580 = vadd.f32 0.0, %v1579
        %v1581 = vpop.f32.mrf.mxu0
        %1582 = vdwg.mxu0
        %v1583 = vpack.c.bf16 %v1580, %v1580
        %1585 = vrot.lane.b32.xlu0 %v1583, 24
        %v1586 = vpop.permute.xlu0 %1585
        %vm1588 = vcmask 224448
        %1589 = vst.msk [vmem:[#allocation2] sm:$0xf] %vm1588, %v1586
        %1590 = vrot.lane.b32.xlu0 %v902, 100
        %v1591 = vpop.permute.xlu0 %1590
        %v1593 = vsel %vm903, %v1591, 0
        %1595 = vmatpush.bf16.msra.mxu0 0
        %1596 = vmatpush.bf16.msra.mxu0 0
        %1597 = vmatpush.bf16.msra.mxu0 0
        %1598 = vmatpush.bf16.msra.mxu0 0
        %1599 = vmatpush.bf16.msra.mxu0 0
        %1600 = vmatpush.bf16.msra.mxu0 0
        %1601 = vmatpush.bf16.msra.mxu0 0
        %1602 = vmatpush.bf16.msra.mxu0 %v909
        %1603 = vmatmul.bf16.gmra.mxu0 %v1593
        %v1604 = vpop.f32.mrf.mxu0
        %v1605 = vadd.f32 0.0, %v1604
        %v1606 = vpop.f32.mrf.mxu0
        %1607 = vdwg.mxu0
        %1609 = vrot.lane.b32.xlu0 %v1605, 127
        %v1610 = vpop.permute.xlu0 %1609
        %v1612 = vsel %vm928, %v1610, 0.0
        %v1613 = vsel %vm933, %v1612, %v1605
        %1615 = vrot.lane.b32.xlu0 %v1613, 126
        %v1616 = vpop.permute.xlu0 %1615
        %v1618 = vsel %vm939, %v1616, 0.0
        %v1619 = vsel %vm945, %v1618, %v1613
        %1621 = vrot.lane.b32.xlu0 %v1619, 124
        %v1622 = vpop.permute.xlu0 %1621
        %v1624 = vsel %vm951, %v1622, 0.0
        %v1625 = vsel %vm957, %v1624, %v1619
        %1626 = vrot.lane.b32.xlu0 %v902, 68
        %v1627 = vpop.permute.xlu0 %1626
        %v1629 = vsel %vm903, %v1627, 0
        %1631 = vmatpush.bf16.xpose.msra.mxu0 0
        %1632 = vmatpush.bf16.xpose.msra.mxu0 0
        %1633 = vmatpush.bf16.xpose.msra.mxu0 0
        %1634 = vmatpush.bf16.xpose.msra.mxu0 0
        %1635 = vmatpush.bf16.xpose.msra.mxu0 0
        %1636 = vmatpush.bf16.xpose.msra.mxu0 0
        %1637 = vmatpush.bf16.xpose.msra.mxu0 0
        %1638 = vmatpush.bf16.xpose.msra.mxu0 %v1629
        %1639 = vmatmul.bf16.gmra.mxu0 %v1593
        %v1640 = vpop.f32.mrf.mxu0
        %v1641 = vadd.f32 %v1625, %v1640
        %v1642 = vpop.f32.mrf.mxu0
        %1643 = vdwg.mxu0
        %v1644 = vadd.f32 %v1641, %v979
        %v1645 = vsel %vm982, %v1644, -inf
        %1646 = vmax.xlane.f32.xlu0 %v1645
        %v1647 = vpop.xlane.xlu0 %1646
        %v1648 = vsub.f32 %v1644, %v1647
        %v1649 = vmul.f32 %v1648, 1.442695
        %v1650 = vpow.pop %v1649
        %v1651 = vsel %vm982, %v1650, 0.0
        %1652 = vadd.xlane.f32.xlu0 %v1651
        %v1653 = vpop.xlane.xlu0 %1652
        %v1654 = vrcp.pop %v1653
        %v1655 = vmul.f32 %v1650, %v1654
        %v1656 = vpack.c.bf16 %v1655, %v1655
        %1657 = vrot.lane.b32.xlu0 %v902, 36
        %v1658 = vpop.permute.xlu0 %1657
        %v1660 = vsel %vm982, %v1656, 0
        %v1663 = vsel %vm1000, %v1658, 0
        %1665 = vmatpush.bf16.msra.mxu0 0
        %1666 = vmatpush.bf16.msra.mxu0 0
        %1667 = vmatpush.bf16.msra.mxu0 0
        %1668 = vmatpush.bf16.msra.mxu0 0
        %1669 = vmatpush.bf16.msra.mxu0 0
        %1670 = vmatpush.bf16.msra.mxu0 0
        %1671 = vmatpush.bf16.msra.mxu0 0
        %1672 = vmatpush.bf16.msra.mxu0 %v1663
        %1673 = vmatmul.bf16.gmra.mxu0 %v1660
        %v1674 = vpop.f32.mrf.mxu0
        %v1675 = vadd.f32 0.0, %v1674
        %v1676 = vpop.f32.mrf.mxu0
        %1677 = vdwg.mxu0
        %v1678 = vpack.c.bf16 %v1675, %v1675
        %1680 = vrot.lane.b32.xlu0 %v1678, 28
        %v1681 = vpop.permute.xlu0 %1680
        %vm1683 = vcmask 257248
        %1684 = vst.msk [vmem:[#allocation2] sm:$0xf] %vm1683, %v1681
        %s1685 = scalar_lea.vmem %s732, 1
        %v1686 = vld [vmem:[%s1685] sm:$0x1]
        %v1687 = vpack.c.bf16 %v895, %v895
        %v1689 = vsel %vm903, %v1687, 0
        %1691 = vmatpush.bf16.msra.mxu0 0
        %1692 = vmatpush.bf16.msra.mxu0 0
        %1693 = vmatpush.bf16.msra.mxu0 0
        %1694 = vmatpush.bf16.msra.mxu0 0
        %1695 = vmatpush.bf16.msra.mxu0 0
        %1696 = vmatpush.bf16.msra.mxu0 0
        %1697 = vmatpush.bf16.msra.mxu0 0
        %1698 = vmatpush.bf16.msra.mxu0 %v909
        %1699 = vmatmul.bf16.gmra.mxu0 %v1689
        %v1700 = vpop.f32.mrf.mxu0
        %v1701 = vadd.f32 0.0, %v1700
        %v1702 = vpop.f32.mrf.mxu0
        %1703 = vdwg.mxu0
        %1705 = vrot.lane.b32.xlu0 %v1701, 127
        %v1706 = vpop.permute.xlu0 %1705
        %v1708 = vsel %vm928, %v1706, 0.0
        %v1709 = vsel %vm933, %v1708, %v1701
        %1711 = vrot.lane.b32.xlu0 %v1709, 126
        %v1712 = vpop.permute.xlu0 %1711
        %v1714 = vsel %vm939, %v1712, 0.0
        %v1715 = vsel %vm945, %v1714, %v1709
        %1717 = vrot.lane.b32.xlu0 %v1715, 124
        %v1718 = vpop.permute.xlu0 %1717
        %v1720 = vsel %vm951, %v1718, 0.0
        %v1721 = vsel %vm957, %v1720, %v1715
        %1723 = vrot.lane.b32.xlu0 %v1687, 96
        %v1724 = vpop.permute.xlu0 %1723
        %v1726 = vsel %vm903, %v1724, 0
        %1728 = vmatpush.bf16.xpose.msra.mxu0 0
        %1729 = vmatpush.bf16.xpose.msra.mxu0 0
        %1730 = vmatpush.bf16.xpose.msra.mxu0 0
        %1731 = vmatpush.bf16.xpose.msra.mxu0 0
        %1732 = vmatpush.bf16.xpose.msra.mxu0 0
        %1733 = vmatpush.bf16.xpose.msra.mxu0 0
        %1734 = vmatpush.bf16.xpose.msra.mxu0 0
        %1735 = vmatpush.bf16.xpose.msra.mxu0 %v1726
        %1736 = vmatmul.bf16.gmra.mxu0 %v1689
        %v1737 = vpop.f32.mrf.mxu0
        %v1738 = vadd.f32 %v1721, %v1737
        %v1739 = vpop.f32.mrf.mxu0
        %1740 = vdwg.mxu0
        %v1742 = vperm.slane %v1686, 0
        %v1744 = vadd.f32 %v1738, %v1742
        %v1745 = vsel %vm982, %v1744, -inf
        %1746 = vmax.xlane.f32.xlu0 %v1745
        %v1747 = vpop.xlane.xlu0 %1746
        %v1748 = vsub.f32 %v1744, %v1747
        %v1749 = vmul.f32 %v1748, 1.442695
        %v1750 = vpow.pop %v1749
        %v1751 = vsel %vm982, %v1750, 0.0
        %1752 = vadd.xlane.f32.xlu0 %v1751
        %v1753 = vpop.xlane.xlu0 %1752
        %v1754 = vrcp.pop %v1753
        %v1755 = vmul.f32 %v1750, %v1754
        %v1756 = vpack.c.bf16 %v1755, %v1755
        %1757 = vrot.lane.b32.xlu0 %v1687, 64
        %v1758 = vpop.permute.xlu0 %1757
        %v1760 = vsel %vm982, %v1756, 0
        %v1763 = vsel %vm1000, %v1758, 0
        %1765 = vmatpush.bf16.msra.mxu0 0
        %1766 = vmatpush.bf16.msra.mxu0 0
        %1767 = vmatpush.bf16.msra.mxu0 0
        %1768 = vmatpush.bf16.msra.mxu0 0
        %1769 = vmatpush.bf16.msra.mxu0 0
        %1770 = vmatpush.bf16.msra.mxu0 0
        %1771 = vmatpush.bf16.msra.mxu0 0
        %1772 = vmatpush.bf16.msra.mxu0 %v1763
        %1773 = vmatmul.bf16.gmra.mxu0 %v1760
        %v1774 = vpop.f32.mrf.mxu0
        %v1775 = vadd.f32 0.0, %v1774
        %v1776 = vpop.f32.mrf.mxu0
        %1777 = vdwg.mxu0
        %v1778 = vpack.c.bf16 %v1775, %v1775
        %1779 = vst.msk [vmem:[#allocation2 + $0x4] sm:$0xf] %vm1018, %v1778
        %1780 = vrot.lane.b32.xlu0 %v1687, 124
        %v1781 = vpop.permute.xlu0 %1780
        %v1783 = vsel %vm903, %v1781, 0
        %1785 = vmatpush.bf16.msra.mxu0 0
        %1786 = vmatpush.bf16.msra.mxu0 0
        %1787 = vmatpush.bf16.msra.mxu0 0
        %1788 = vmatpush.bf16.msra.mxu0 0
        %1789 = vmatpush.bf16.msra.mxu0 0
        %1790 = vmatpush.bf16.msra.mxu0 0
        %1791 = vmatpush.bf16.msra.mxu0 0
        %1792 = vmatpush.bf16.msra.mxu0 %v909
        %1793 = vmatmul.bf16.gmra.mxu0 %v1783
        %v1794 = vpop.f32.mrf.mxu0
        %v1795 = vadd.f32 0.0, %v1794
        %v1796 = vpop.f32.mrf.mxu0
        %1797 = vdwg.mxu0
        %1799 = vrot.lane.b32.xlu0 %v1795, 127
        %v1800 = vpop.permute.xlu0 %1799
        %v1802 = vsel %vm928, %v1800, 0.0
        %v1803 = vsel %vm933, %v1802, %v1795
        %1805 = vrot.lane.b32.xlu0 %v1803, 126
        %v1806 = vpop.permute.xlu0 %1805
        %v1808 = vsel %vm939, %v1806, 0.0
        %v1809 = vsel %vm945, %v1808, %v1803
        %1811 = vrot.lane.b32.xlu0 %v1809, 124
        %v1812 = vpop.permute.xlu0 %1811
        %v1814 = vsel %vm951, %v1812, 0.0
        %v1815 = vsel %vm957, %v1814, %v1809
        %1816 = vrot.lane.b32.xlu0 %v1687, 92
        %v1817 = vpop.permute.xlu0 %1816
        %v1819 = vsel %vm903, %v1817, 0
        %1821 = vmatpush.bf16.xpose.msra.mxu0 0
        %1822 = vmatpush.bf16.xpose.msra.mxu0 0
        %1823 = vmatpush.bf16.xpose.msra.mxu0 0
        %1824 = vmatpush.bf16.xpose.msra.mxu0 0
        %1825 = vmatpush.bf16.xpose.msra.mxu0 0
        %1826 = vmatpush.bf16.xpose.msra.mxu0 0
        %1827 = vmatpush.bf16.xpose.msra.mxu0 0
        %1828 = vmatpush.bf16.xpose.msra.mxu0 %v1819
        %1829 = vmatmul.bf16.gmra.mxu0 %v1783
        %v1830 = vpop.f32.mrf.mxu0
        %v1831 = vadd.f32 %v1815, %v1830
        %v1832 = vpop.f32.mrf.mxu0
        %1833 = vdwg.mxu0
        %v1834 = vadd.f32 %v1831, %v1742
        %v1835 = vsel %vm982, %v1834, -inf
        %1836 = vmax.xlane.f32.xlu0 %v1835
        %v1837 = vpop.xlane.xlu0 %1836
        %v1838 = vsub.f32 %v1834, %v1837
        %v1839 = vmul.f32 %v1838, 1.442695
        %v1840 = vpow.pop %v1839
        %v1841 = vsel %vm982, %v1840, 0.0
        %1842 = vadd.xlane.f32.xlu0 %v1841
        %v1843 = vpop.xlane.xlu0 %1842
        %v1844 = vrcp.pop %v1843
        %v1845 = vmul.f32 %v1840, %v1844
        %v1846 = vpack.c.bf16 %v1845, %v1845
        %1847 = vrot.lane.b32.xlu0 %v1687, 60
        %v1848 = vpop.permute.xlu0 %1847
        %v1850 = vsel %vm982, %v1846, 0
        %v1853 = vsel %vm1000, %v1848, 0
        %1855 = vmatpush.bf16.msra.mxu0 0
        %1856 = vmatpush.bf16.msra.mxu0 0
        %1857 = vmatpush.bf16.msra.mxu0 0
        %1858 = vmatpush.bf16.msra.mxu0 0
        %1859 = vmatpush.bf16.msra.mxu0 0
        %1860 = vmatpush.bf16.msra.mxu0 0
        %1861 = vmatpush.bf16.msra.mxu0 0
        %1862 = vmatpush.bf16.msra.mxu0 %v1853
        %1863 = vmatmul.bf16.gmra.mxu0 %v1850
        %v1864 = vpop.f32.mrf.mxu0
        %v1865 = vadd.f32 0.0, %v1864
        %v1866 = vpop.f32.mrf.mxu0
        %1867 = vdwg.mxu0
        %v1868 = vpack.c.bf16 %v1865, %v1865
        %1870 = vrot.lane.b32.xlu0 %v1868, 4
        %v1871 = vpop.permute.xlu0 %1870
        %1873 = vst.msk [vmem:[#allocation2 + $0x4] sm:$0xf] %vm1113, %v1871
        %1874 = vrot.lane.b32.xlu0 %v1687, 120
        %v1875 = vpop.permute.xlu0 %1874
        %v1877 = vsel %vm903, %v1875, 0
        %1879 = vmatpush.bf16.msra.mxu0 0
        %1880 = vmatpush.bf16.msra.mxu0 0
        %1881 = vmatpush.bf16.msra.mxu0 0
        %1882 = vmatpush.bf16.msra.mxu0 0
        %1883 = vmatpush.bf16.msra.mxu0 0
        %1884 = vmatpush.bf16.msra.mxu0 0
        %1885 = vmatpush.bf16.msra.mxu0 0
        %1886 = vmatpush.bf16.msra.mxu0 %v909
        %1887 = vmatmul.bf16.gmra.mxu0 %v1877
        %v1888 = vpop.f32.mrf.mxu0
        %v1889 = vadd.f32 0.0, %v1888
        %v1890 = vpop.f32.mrf.mxu0
        %1891 = vdwg.mxu0
        %1893 = vrot.lane.b32.xlu0 %v1889, 127
        %v1894 = vpop.permute.xlu0 %1893
        %v1896 = vsel %vm928, %v1894, 0.0
        %v1897 = vsel %vm933, %v1896, %v1889
        %1899 = vrot.lane.b32.xlu0 %v1897, 126
        %v1900 = vpop.permute.xlu0 %1899
        %v1902 = vsel %vm939, %v1900, 0.0
        %v1903 = vsel %vm945, %v1902, %v1897
        %1905 = vrot.lane.b32.xlu0 %v1903, 124
        %v1906 = vpop.permute.xlu0 %1905
        %v1908 = vsel %vm951, %v1906, 0.0
        %v1909 = vsel %vm957, %v1908, %v1903
        %1910 = vrot.lane.b32.xlu0 %v1687, 88
        %v1911 = vpop.permute.xlu0 %1910
        %v1913 = vsel %vm903, %v1911, 0
        %1915 = vmatpush.bf16.xpose.msra.mxu0 0
        %1916 = vmatpush.bf16.xpose.msra.mxu0 0
        %1917 = vmatpush.bf16.xpose.msra.mxu0 0
        %1918 = vmatpush.bf16.xpose.msra.mxu0 0
        %1919 = vmatpush.bf16.xpose.msra.mxu0 0
        %1920 = vmatpush.bf16.xpose.msra.mxu0 0
        %1921 = vmatpush.bf16.xpose.msra.mxu0 0
        %1922 = vmatpush.bf16.xpose.msra.mxu0 %v1913
        %1923 = vmatmul.bf16.gmra.mxu0 %v1877
        %v1924 = vpop.f32.mrf.mxu0
        %v1925 = vadd.f32 %v1909, %v1924
        %v1926 = vpop.f32.mrf.mxu0
        %1927 = vdwg.mxu0
        %v1928 = vadd.f32 %v1925, %v1742
        %v1929 = vsel %vm982, %v1928, -inf
        %1930 = vmax.xlane.f32.xlu0 %v1929
        %v1931 = vpop.xlane.xlu0 %1930
        %v1932 = vsub.f32 %v1928, %v1931
        %v1933 = vmul.f32 %v1932, 1.442695
        %v1934 = vpow.pop %v1933
        %v1935 = vsel %vm982, %v1934, 0.0
        %1936 = vadd.xlane.f32.xlu0 %v1935
        %v1937 = vpop.xlane.xlu0 %1936
        %v1938 = vrcp.pop %v1937
        %v1939 = vmul.f32 %v1934, %v1938
        %v1940 = vpack.c.bf16 %v1939, %v1939
        %1941 = vrot.lane.b32.xlu0 %v1687, 56
        %v1942 = vpop.permute.xlu0 %1941
        %v1944 = vsel %vm982, %v1940, 0
        %v1947 = vsel %vm1000, %v1942, 0
        %1949 = vmatpush.bf16.msra.mxu0 0
        %1950 = vmatpush.bf16.msra.mxu0 0
        %1951 = vmatpush.bf16.msra.mxu0 0
        %1952 = vmatpush.bf16.msra.mxu0 0
        %1953 = vmatpush.bf16.msra.mxu0 0
        %1954 = vmatpush.bf16.msra.mxu0 0
        %1955 = vmatpush.bf16.msra.mxu0 0
        %1956 = vmatpush.bf16.msra.mxu0 %v1947
        %1957 = vmatmul.bf16.gmra.mxu0 %v1944
        %v1958 = vpop.f32.mrf.mxu0
        %v1959 = vadd.f32 0.0, %v1958
        %v1960 = vpop.f32.mrf.mxu0
        %1961 = vdwg.mxu0
        %v1962 = vpack.c.bf16 %v1959, %v1959
        %1964 = vrot.lane.b32.xlu0 %v1962, 8
        %v1965 = vpop.permute.xlu0 %1964
        %1967 = vst.msk [vmem:[#allocation2 + $0x4] sm:$0xf] %vm1208, %v1965
        %1968 = vrot.lane.b32.xlu0 %v1687, 116
        %v1969 = vpop.permute.xlu0 %1968
        %v1971 = vsel %vm903, %v1969, 0
        %1973 = vmatpush.bf16.msra.mxu0 0
        %1974 = vmatpush.bf16.msra.mxu0 0
        %1975 = vmatpush.bf16.msra.mxu0 0
        %1976 = vmatpush.bf16.msra.mxu0 0
        %1977 = vmatpush.bf16.msra.mxu0 0
        %1978 = vmatpush.bf16.msra.mxu0 0
        %1979 = vmatpush.bf16.msra.mxu0 0
        %1980 = vmatpush.bf16.msra.mxu0 %v909
        %1981 = vmatmul.bf16.gmra.mxu0 %v1971
        %v1982 = vpop.f32.mrf.mxu0
        %v1983 = vadd.f32 0.0, %v1982
        %v1984 = vpop.f32.mrf.mxu0
        %1985 = vdwg.mxu0
        %1987 = vrot.lane.b32.xlu0 %v1983, 127
        %v1988 = vpop.permute.xlu0 %1987
        %v1990 = vsel %vm928, %v1988, 0.0
        %v1991 = vsel %vm933, %v1990, %v1983
        %1993 = vrot.lane.b32.xlu0 %v1991, 126
        %v1994 = vpop.permute.xlu0 %1993
        %v1996 = vsel %vm939, %v1994, 0.0
        %v1997 = vsel %vm945, %v1996, %v1991
        %1999 = vrot.lane.b32.xlu0 %v1997, 124
        %v2000 = vpop.permute.xlu0 %1999
        %v2002 = vsel %vm951, %v2000, 0.0
        %v2003 = vsel %vm957, %v2002, %v1997
        %2004 = vrot.lane.b32.xlu0 %v1687, 84
        %v2005 = vpop.permute.xlu0 %2004
        %v2007 = vsel %vm903, %v2005, 0
        %2009 = vmatpush.bf16.xpose.msra.mxu0 0
        %2010 = vmatpush.bf16.xpose.msra.mxu0 0
        %2011 = vmatpush.bf16.xpose.msra.mxu0 0
        %2012 = vmatpush.bf16.xpose.msra.mxu0 0
        %2013 = vmatpush.bf16.xpose.msra.mxu0 0
        %2014 = vmatpush.bf16.xpose.msra.mxu0 0
        %2015 = vmatpush.bf16.xpose.msra.mxu0 0
        %2016 = vmatpush.bf16.xpose.msra.mxu0 %v2007
        %2017 = vmatmul.bf16.gmra.mxu0 %v1971
        %v2018 = vpop.f32.mrf.mxu0
        %v2019 = vadd.f32 %v2003, %v2018
        %v2020 = vpop.f32.mrf.mxu0
        %2021 = vdwg.mxu0
        %v2022 = vadd.f32 %v2019, %v1742
        %v2023 = vsel %vm982, %v2022, -inf
        %2024 = vmax.xlane.f32.xlu0 %v2023
        %v2025 = vpop.xlane.xlu0 %2024
        %v2026 = vsub.f32 %v2022, %v2025
        %v2027 = vmul.f32 %v2026, 1.442695
        %v2028 = vpow.pop %v2027
        %v2029 = vsel %vm982, %v2028, 0.0
        %2030 = vadd.xlane.f32.xlu0 %v2029
        %v2031 = vpop.xlane.xlu0 %2030
        %v2032 = vrcp.pop %v2031
        %v2033 = vmul.f32 %v2028, %v2032
        %v2034 = vpack.c.bf16 %v2033, %v2033
        %2035 = vrot.lane.b32.xlu0 %v1687, 52
        %v2036 = vpop.permute.xlu0 %2035
        %v2038 = vsel %vm982, %v2034, 0
        %v2041 = vsel %vm1000, %v2036, 0
        %2043 = vmatpush.bf16.msra.mxu0 0
        %2044 = vmatpush.bf16.msra.mxu0 0
        %2045 = vmatpush.bf16.msra.mxu0 0
        %2046 = vmatpush.bf16.msra.mxu0 0
        %2047 = vmatpush.bf16.msra.mxu0 0
        %2048 = vmatpush.bf16.msra.mxu0 0
        %2049 = vmatpush.bf16.msra.mxu0 0
        %2050 = vmatpush.bf16.msra.mxu0 %v2041
        %2051 = vmatmul.bf16.gmra.mxu0 %v2038
        %v2052 = vpop.f32.mrf.mxu0
        %v2053 = vadd.f32 0.0, %v2052
        %v2054 = vpop.f32.mrf.mxu0
        %2055 = vdwg.mxu0
        %v2056 = vpack.c.bf16 %v2053, %v2053
        %2058 = vrot.lane.b32.xlu0 %v2056, 12
        %v2059 = vpop.permute.xlu0 %2058
        %2061 = vst.msk [vmem:[#allocation2 + $0x4] sm:$0xf] %vm1303, %v2059
        %2062 = vrot.lane.b32.xlu0 %v1687, 112
        %v2063 = vpop.permute.xlu0 %2062
        %v2065 = vsel %vm903, %v2063, 0
        %2067 = vmatpush.bf16.msra.mxu0 0
        %2068 = vmatpush.bf16.msra.mxu0 0
        %2069 = vmatpush.bf16.msra.mxu0 0
        %2070 = vmatpush.bf16.msra.mxu0 0
        %2071 = vmatpush.bf16.msra.mxu0 0
        %2072 = vmatpush.bf16.msra.mxu0 0
        %2073 = vmatpush.bf16.msra.mxu0 0
        %2074 = vmatpush.bf16.msra.mxu0 %v909
        %2075 = vmatmul.bf16.gmra.mxu0 %v2065
        %v2076 = vpop.f32.mrf.mxu0
        %v2077 = vadd.f32 0.0, %v2076
        %v2078 = vpop.f32.mrf.mxu0
        %2079 = vdwg.mxu0
        %2081 = vrot.lane.b32.xlu0 %v2077, 127
        %v2082 = vpop.permute.xlu0 %2081
        %v2084 = vsel %vm928, %v2082, 0.0
        %v2085 = vsel %vm933, %v2084, %v2077
        %2087 = vrot.lane.b32.xlu0 %v2085, 126
        %v2088 = vpop.permute.xlu0 %2087
        %v2090 = vsel %vm939, %v2088, 0.0
        %v2091 = vsel %vm945, %v2090, %v2085
        %2093 = vrot.lane.b32.xlu0 %v2091, 124
        %v2094 = vpop.permute.xlu0 %2093
        %v2096 = vsel %vm951, %v2094, 0.0
        %v2097 = vsel %vm957, %v2096, %v2091
        %2098 = vrot.lane.b32.xlu0 %v1687, 80
        %v2099 = vpop.permute.xlu0 %2098
        %v2101 = vsel %vm903, %v2099, 0
        %2103 = vmatpush.bf16.xpose.msra.mxu0 0
        %2104 = vmatpush.bf16.xpose.msra.mxu0 0
        %2105 = vmatpush.bf16.xpose.msra.mxu0 0
        %2106 = vmatpush.bf16.xpose.msra.mxu0 0
        %2107 = vmatpush.bf16.xpose.msra.mxu0 0
        %2108 = vmatpush.bf16.xpose.msra.mxu0 0
        %2109 = vmatpush.bf16.xpose.msra.mxu0 0
        %2110 = vmatpush.bf16.xpose.msra.mxu0 %v2101
        %2111 = vmatmul.bf16.gmra.mxu0 %v2065
        %v2112 = vpop.f32.mrf.mxu0
        %v2113 = vadd.f32 %v2097, %v2112
        %v2114 = vpop.f32.mrf.mxu0
        %2115 = vdwg.mxu0
        %v2116 = vadd.f32 %v2113, %v1742
        %v2117 = vsel %vm982, %v2116, -inf
        %2118 = vmax.xlane.f32.xlu0 %v2117
        %v2119 = vpop.xlane.xlu0 %2118
        %v2120 = vsub.f32 %v2116, %v2119
        %v2121 = vmul.f32 %v2120, 1.442695
        %v2122 = vpow.pop %v2121
        %v2123 = vsel %vm982, %v2122, 0.0
        %2124 = vadd.xlane.f32.xlu0 %v2123
        %v2125 = vpop.xlane.xlu0 %2124
        %v2126 = vrcp.pop %v2125
        %v2127 = vmul.f32 %v2122, %v2126
        %v2128 = vpack.c.bf16 %v2127, %v2127
        %2129 = vrot.lane.b32.xlu0 %v1687, 48
        %v2130 = vpop.permute.xlu0 %2129
        %v2132 = vsel %vm982, %v2128, 0
        %v2135 = vsel %vm1000, %v2130, 0
        %2137 = vmatpush.bf16.msra.mxu0 0
        %2138 = vmatpush.bf16.msra.mxu0 0
        %2139 = vmatpush.bf16.msra.mxu0 0
        %2140 = vmatpush.bf16.msra.mxu0 0
        %2141 = vmatpush.bf16.msra.mxu0 0
        %2142 = vmatpush.bf16.msra.mxu0 0
        %2143 = vmatpush.bf16.msra.mxu0 0
        %2144 = vmatpush.bf16.msra.mxu0 %v2135
        %2145 = vmatmul.bf16.gmra.mxu0 %v2132
        %v2146 = vpop.f32.mrf.mxu0
        %v2147 = vadd.f32 0.0, %v2146
        %v2148 = vpop.f32.mrf.mxu0
        %2149 = vdwg.mxu0
        %v2150 = vpack.c.bf16 %v2147, %v2147
        %2152 = vrot.lane.b32.xlu0 %v2150, 16
        %v2153 = vpop.permute.xlu0 %2152
        %2155 = vst.msk [vmem:[#allocation2 + $0x4] sm:$0xf] %vm1398, %v2153
        %2156 = vrot.lane.b32.xlu0 %v1687, 108
        %v2157 = vpop.permute.xlu0 %2156
        %v2159 = vsel %vm903, %v2157, 0
        %2161 = vmatpush.bf16.msra.mxu0 0
        %2162 = vmatpush.bf16.msra.mxu0 0
        %2163 = vmatpush.bf16.msra.mxu0 0
        %2164 = vmatpush.bf16.msra.mxu0 0
        %2165 = vmatpush.bf16.msra.mxu0 0
        %2166 = vmatpush.bf16.msra.mxu0 0
        %2167 = vmatpush.bf16.msra.mxu0 0
        %2168 = vmatpush.bf16.msra.mxu0 %v909
        %2169 = vmatmul.bf16.gmra.mxu0 %v2159
        %v2170 = vpop.f32.mrf.mxu0
        %v2171 = vadd.f32 0.0, %v2170
        %v2172 = vpop.f32.mrf.mxu0
        %2173 = vdwg.mxu0
        %2175 = vrot.lane.b32.xlu0 %v2171, 127
        %v2176 = vpop.permute.xlu0 %2175
        %v2178 = vsel %vm928, %v2176, 0.0
        %v2179 = vsel %vm933, %v2178, %v2171
        %2181 = vrot.lane.b32.xlu0 %v2179, 126
        %v2182 = vpop.permute.xlu0 %2181
        %v2184 = vsel %vm939, %v2182, 0.0
        %v2185 = vsel %vm945, %v2184, %v2179
        %2187 = vrot.lane.b32.xlu0 %v2185, 124
        %v2188 = vpop.permute.xlu0 %2187
        %v2190 = vsel %vm951, %v2188, 0.0
        %v2191 = vsel %vm957, %v2190, %v2185
        %2192 = vrot.lane.b32.xlu0 %v1687, 76
        %v2193 = vpop.permute.xlu0 %2192
        %v2195 = vsel %vm903, %v2193, 0
        %2197 = vmatpush.bf16.xpose.msra.mxu0 0
        %2198 = vmatpush.bf16.xpose.msra.mxu0 0
        %2199 = vmatpush.bf16.xpose.msra.mxu0 0
        %2200 = vmatpush.bf16.xpose.msra.mxu0 0
        %2201 = vmatpush.bf16.xpose.msra.mxu0 0
        %2202 = vmatpush.bf16.xpose.msra.mxu0 0
        %2203 = vmatpush.bf16.xpose.msra.mxu0 0
        %2204 = vmatpush.bf16.xpose.msra.mxu0 %v2195
        %2205 = vmatmul.bf16.gmra.mxu0 %v2159
        %v2206 = vpop.f32.mrf.mxu0
        %v2207 = vadd.f32 %v2191, %v2206
        %v2208 = vpop.f32.mrf.mxu0
        %2209 = vdwg.mxu0
        %v2210 = vadd.f32 %v2207, %v1742
        %v2211 = vsel %vm982, %v2210, -inf
        %2212 = vmax.xlane.f32.xlu0 %v2211
        %v2213 = vpop.xlane.xlu0 %2212
        %v2214 = vsub.f32 %v2210, %v2213
        %v2215 = vmul.f32 %v2214, 1.442695
        %v2216 = vpow.pop %v2215
        %v2217 = vsel %vm982, %v2216, 0.0
        %2218 = vadd.xlane.f32.xlu0 %v2217
        %v2219 = vpop.xlane.xlu0 %2218
        %v2220 = vrcp.pop %v2219
        %v2221 = vmul.f32 %v2216, %v2220
        %v2222 = vpack.c.bf16 %v2221, %v2221
        %2223 = vrot.lane.b32.xlu0 %v1687, 44
        %v2224 = vpop.permute.xlu0 %2223
        %v2226 = vsel %vm982, %v2222, 0
        %v2229 = vsel %vm1000, %v2224, 0
        %2231 = vmatpush.bf16.msra.mxu0 0
        %2232 = vmatpush.bf16.msra.mxu0 0
        %2233 = vmatpush.bf16.msra.mxu0 0
        %2234 = vmatpush.bf16.msra.mxu0 0
        %2235 = vmatpush.bf16.msra.mxu0 0
        %2236 = vmatpush.bf16.msra.mxu0 0
        %2237 = vmatpush.bf16.msra.mxu0 0
        %2238 = vmatpush.bf16.msra.mxu0 %v2229
        %2239 = vmatmul.bf16.gmra.mxu0 %v2226
        %v2240 = vpop.f32.mrf.mxu0
        %v2241 = vadd.f32 0.0, %v2240
        %v2242 = vpop.f32.mrf.mxu0
        %2243 = vdwg.mxu0
        %v2244 = vpack.c.bf16 %v2241, %v2241
        %2246 = vrot.lane.b32.xlu0 %v2244, 20
        %v2247 = vpop.permute.xlu0 %2246
        %2249 = vst.msk [vmem:[#allocation2 + $0x4] sm:$0xf] %vm1493, %v2247
        %2250 = vrot.lane.b32.xlu0 %v1687, 104
        %v2251 = vpop.permute.xlu0 %2250
        %v2253 = vsel %vm903, %v2251, 0
        %2255 = vmatpush.bf16.msra.mxu0 0
        %2256 = vmatpush.bf16.msra.mxu0 0
        %2257 = vmatpush.bf16.msra.mxu0 0
        %2258 = vmatpush.bf16.msra.mxu0 0
        %2259 = vmatpush.bf16.msra.mxu0 0
        %2260 = vmatpush.bf16.msra.mxu0 0
        %2261 = vmatpush.bf16.msra.mxu0 0
        %2262 = vmatpush.bf16.msra.mxu0 %v909
        %2263 = vmatmul.bf16.gmra.mxu0 %v2253
        %v2264 = vpop.f32.mrf.mxu0
        %v2265 = vadd.f32 0.0, %v2264
        %v2266 = vpop.f32.mrf.mxu0
        %2267 = vdwg.mxu0
        %2269 = vrot.lane.b32.xlu0 %v2265, 127
        %v2270 = vpop.permute.xlu0 %2269
        %v2272 = vsel %vm928, %v2270, 0.0
        %v2273 = vsel %vm933, %v2272, %v2265
        %2275 = vrot.lane.b32.xlu0 %v2273, 126
        %v2276 = vpop.permute.xlu0 %2275
        %v2278 = vsel %vm939, %v2276, 0.0
        %v2279 = vsel %vm945, %v2278, %v2273
        %2281 = vrot.lane.b32.xlu0 %v2279, 124
        %v2282 = vpop.permute.xlu0 %2281
        %v2284 = vsel %vm951, %v2282, 0.0
        %v2285 = vsel %vm957, %v2284, %v2279
        %2286 = vrot.lane.b32.xlu0 %v1687, 72
        %v2287 = vpop.permute.xlu0 %2286
        %v2289 = vsel %vm903, %v2287, 0
        %2291 = vmatpush.bf16.xpose.msra.mxu0 0
        %2292 = vmatpush.bf16.xpose.msra.mxu0 0
        %2293 = vmatpush.bf16.xpose.msra.mxu0 0
        %2294 = vmatpush.bf16.xpose.msra.mxu0 0
        %2295 = vmatpush.bf16.xpose.msra.mxu0 0
        %2296 = vmatpush.bf16.xpose.msra.mxu0 0
        %2297 = vmatpush.bf16.xpose.msra.mxu0 0
        %2298 = vmatpush.bf16.xpose.msra.mxu0 %v2289
        %2299 = vmatmul.bf16.gmra.mxu0 %v2253
        %v2300 = vpop.f32.mrf.mxu0
        %v2301 = vadd.f32 %v2285, %v2300
        %v2302 = vpop.f32.mrf.mxu0
        %2303 = vdwg.mxu0
        %v2304 = vadd.f32 %v2301, %v1742
        %v2305 = vsel %vm982, %v2304, -inf
        %2306 = vmax.xlane.f32.xlu0 %v2305
        %v2307 = vpop.xlane.xlu0 %2306
        %v2308 = vsub.f32 %v2304, %v2307
        %v2309 = vmul.f32 %v2308, 1.442695
        %v2310 = vpow.pop %v2309
        %v2311 = vsel %vm982, %v2310, 0.0
        %2312 = vadd.xlane.f32.xlu0 %v2311
        %v2313 = vpop.xlane.xlu0 %2312
        %v2314 = vrcp.pop %v2313
        %v2315 = vmul.f32 %v2310, %v2314
        %v2316 = vpack.c.bf16 %v2315, %v2315
        %2317 = vrot.lane.b32.xlu0 %v1687, 40
        %v2318 = vpop.permute.xlu0 %2317
        %v2320 = vsel %vm982, %v2316, 0
        %v2323 = vsel %vm1000, %v2318, 0
        %2325 = vmatpush.bf16.msra.mxu0 0
        %2326 = vmatpush.bf16.msra.mxu0 0
        %2327 = vmatpush.bf16.msra.mxu0 0
        %2328 = vmatpush.bf16.msra.mxu0 0
        %2329 = vmatpush.bf16.msra.mxu0 0
        %2330 = vmatpush.bf16.msra.mxu0 0
        %2331 = vmatpush.bf16.msra.mxu0 0
        %2332 = vmatpush.bf16.msra.mxu0 %v2323
        %2333 = vmatmul.bf16.gmra.mxu0 %v2320
        %v2334 = vpop.f32.mrf.mxu0
        %v2335 = vadd.f32 0.0, %v2334
        %v2336 = vpop.f32.mrf.mxu0
        %2337 = vdwg.mxu0
        %v2338 = vpack.c.bf16 %v2335, %v2335
        %2340 = vrot.lane.b32.xlu0 %v2338, 24
        %v2341 = vpop.permute.xlu0 %2340
        %2343 = vst.msk [vmem:[#allocation2 + $0x4] sm:$0xf] %vm1588, %v2341
        %2344 = vrot.lane.b32.xlu0 %v1687, 100
        %v2345 = vpop.permute.xlu0 %2344
        %v2347 = vsel %vm903, %v2345, 0
        %2349 = vmatpush.bf16.msra.mxu0 0
        %2350 = vmatpush.bf16.msra.mxu0 0
        %2351 = vmatpush.bf16.msra.mxu0 0
        %2352 = vmatpush.bf16.msra.mxu0 0
        %2353 = vmatpush.bf16.msra.mxu0 0
        %2354 = vmatpush.bf16.msra.mxu0 0
        %2355 = vmatpush.bf16.msra.mxu0 0
        %2356 = vmatpush.bf16.msra.mxu0 %v909
        %2357 = vmatmul.bf16.gmra.mxu0 %v2347
        %v2358 = vpop.f32.mrf.mxu0
        %v2359 = vadd.f32 0.0, %v2358
        %v2360 = vpop.f32.mrf.mxu0
        %2361 = vdwg.mxu0
        %2363 = vrot.lane.b32.xlu0 %v2359, 127
        %v2364 = vpop.permute.xlu0 %2363
        %v2366 = vsel %vm928, %v2364, 0.0
        %v2367 = vsel %vm933, %v2366, %v2359
        %2369 = vrot.lane.b32.xlu0 %v2367, 126
        %v2370 = vpop.permute.xlu0 %2369
        %v2372 = vsel %vm939, %v2370, 0.0
        %v2373 = vsel %vm945, %v2372, %v2367
        %2375 = vrot.lane.b32.xlu0 %v2373, 124
        %v2376 = vpop.permute.xlu0 %2375
        %v2378 = vsel %vm951, %v2376, 0.0
        %v2379 = vsel %vm957, %v2378, %v2373
        %2380 = vrot.lane.b32.xlu0 %v1687, 68
        %v2381 = vpop.permute.xlu0 %2380
        %v2383 = vsel %vm903, %v2381, 0
        %2385 = vmatpush.bf16.xpose.msra.mxu0 0
        %2386 = vmatpush.bf16.xpose.msra.mxu0 0
        %2387 = vmatpush.bf16.xpose.msra.mxu0 0
        %2388 = vmatpush.bf16.xpose.msra.mxu0 0
        %2389 = vmatpush.bf16.xpose.msra.mxu0 0
        %2390 = vmatpush.bf16.xpose.msra.mxu0 0
        %2391 = vmatpush.bf16.xpose.msra.mxu0 0
        %2392 = vmatpush.bf16.xpose.msra.mxu0 %v2383
        %2393 = vmatmul.bf16.gmra.mxu0 %v2347
        %v2394 = vpop.f32.mrf.mxu0
        %v2395 = vadd.f32 %v2379, %v2394
        %v2396 = vpop.f32.mrf.mxu0
        %2397 = vdwg.mxu0
        %v2398 = vadd.f32 %v2395, %v1742
        %v2399 = vsel %vm982, %v2398, -inf
        %2400 = vmax.xlane.f32.xlu0 %v2399
        %v2401 = vpop.xlane.xlu0 %2400
        %v2402 = vsub.f32 %v2398, %v2401
        %v2403 = vmul.f32 %v2402, 1.442695
        %v2404 = vpow.pop %v2403
        %v2405 = vsel %vm982, %v2404, 0.0
        %2406 = vadd.xlane.f32.xlu0 %v2405
        %v2407 = vpop.xlane.xlu0 %2406
        %v2408 = vrcp.pop %v2407
        %v2409 = vmul.f32 %v2404, %v2408
        %v2410 = vpack.c.bf16 %v2409, %v2409
        %2411 = vrot.lane.b32.xlu0 %v1687, 36
        %v2412 = vpop.permute.xlu0 %2411
        %v2414 = vsel %vm982, %v2410, 0
        %v2417 = vsel %vm1000, %v2412, 0
        %2419 = vmatpush.bf16.msra.mxu0 0
        %2420 = vmatpush.bf16.msra.mxu0 0
        %2421 = vmatpush.bf16.msra.mxu0 0
        %2422 = vmatpush.bf16.msra.mxu0 0
        %2423 = vmatpush.bf16.msra.mxu0 0
        %2424 = vmatpush.bf16.msra.mxu0 0
        %2425 = vmatpush.bf16.msra.mxu0 0
        %2426 = vmatpush.bf16.msra.mxu0 %v2417
        %2427 = vmatmul.bf16.gmra.mxu0 %v2414
        %v2428 = vpop.f32.mrf.mxu0
        %v2429 = vadd.f32 0.0, %v2428
        %v2430 = vpop.f32.mrf.mxu0
        %2431 = vdwg.mxu0
        %v2432 = vpack.c.bf16 %v2429, %v2429
        %2434 = vrot.lane.b32.xlu0 %v2432, 28
        %v2435 = vpop.permute.xlu0 %2434
        %2437 = vst.msk [vmem:[#allocation2 + $0x4] sm:$0xf] %vm1683, %v2435
        %v2438 = vld [vmem:[#allocation2] sm:$0xf]
        %v2439 = vld [vmem:[#allocation2 + $0x4] sm:$0xf]
        %v2440 = vld [vmem:[%s756] sm:$0xf]
        %v2441 = vld [vmem:[%s756 + $0x4] sm:$0xf]
        %v2442 = vld [vmem:[%s756 + $0x8] sm:$0xf]
        %v2443 = vld [vmem:[%s756 + $0xc] sm:$0xf]
        %v2444 = vld [vmem:[%s759] sm:$0x1]
        %v2446 = vperm.slane %v2444, 0
        %v2450 = vunpack.c.l.b16 %v2438
        %v2451 = vunpack.c.l.b16 %v2439
        %v2452 = vpack.c.b16 %v2451, %v2450
        %v2457 = vunpack.c.l.b16 %v2440
        %v2458 = vunpack.c.l.b16 %v2441
        %v2459 = vunpack.c.l.b16 %v2442
        %v2460 = vunpack.c.l.b16 %v2443
        %v2461 = vpack.c.b16 %v2458, %v2457
        %v2462 = vpack.c.b16 %v2460, %v2459
        %v2466 = vsel %vm797, %v2452, 0
        %2468 = vmatpush.bf16.msra.mxu0 0
        %2469 = vmatpush.bf16.msra.mxu0 0
        %2470 = vmatpush.bf16.msra.mxu0 0
        %2471 = vmatpush.bf16.msra.mxu0 0
        %2472 = vmatpush.bf16.msra.mxu0 0
        %2473 = vmatpush.bf16.msra.mxu0 0
        %2474 = vmatpush.bf16.msra.mxu0 %v2462
        %2475 = vmatpush.bf16.msra.mxu0 %v2461
        %2476 = vmatmul.bf16.gmra.mxu0 %v2466
        %v2477 = vpop.f32.mrf.mxu0
        %v2478 = vadd.f32 %v2446, %v2477
        %v2479 = vpop.f32.mrf.mxu0
        %v2480 = vadd.f32 %v2446, %v2479
        %2481 = vdwg.mxu0
        %v2482 = vadd.f32 %v2478, %v793
        %v2483 = vadd.f32 %v2480, %v794
        %v2484 = vld [vmem:[%s762] sm:$0x1]
        %v2485 = vld [vmem:[%s765] sm:$0x1]
        %v2486 = vsel %vm797, %v2482, 0.0
        %2487 = vadd.xlane.f32.xlu0 %v2486
        %v2488 = vpop.xlane.xlu0 %2487
        %v2489 = vsel %vm797, %v2483, 0.0
        %2490 = vadd.xlane.f32.xlu0 %v2489
        %v2491 = vpop.xlane.xlu0 %2490
        %v2492 = vmul.f32 %v2488, %v810
        %v2493 = vmul.f32 %v2491, %v810
        %v2494 = vsub.f32 %v2482, %v2492
        %v2495 = vsub.f32 %v2483, %v2493
        %v2496 = vmul.f32 %v2494, %v2494
        %v2497 = vmul.f32 %v2495, %v2495
        %v2498 = vsel %vm797, %v2496, 0.0
        %2499 = vadd.xlane.f32.xlu0 %v2498
        %v2500 = vpop.xlane.xlu0 %2499
        %v2501 = vsel %vm797, %v2497, 0.0
        %2502 = vadd.xlane.f32.xlu0 %v2501
        %v2503 = vpop.xlane.xlu0 %2502
        %v2504 = vmul.f32 %v2500, %v810
        %v2505 = vmul.f32 %v2503, %v810
        %v2506 = vadd.f32 %v2504, 1e-05
        %v2507 = vadd.f32 %v2505, 1e-05
        %v2508 = vrsqrt.pop %v2506
        %v2509 = vmul.f32 %v2508, %v2506
        %v2510 = vmul.f32 %v2509, %v2508
        %v2511 = vmul.f32 0.5, %v2510
        %v2512 = vsub.f32 1.5, %v2511
        %v2513 = vmul.f32 %v2508, %v2512
        %vm2514 = vweird.f32 %v2506
        %vm2515 = vweird.f32 %v2508
        %vm2516 = vmor %vm2514, %vm2515
        %v2517 = vsel %vm2516, %v2508, %v2513
        %v2518 = vrsqrt.pop %v2507
        %v2519 = vmul.f32 %v2518, %v2507
        %v2520 = vmul.f32 %v2519, %v2518
        %v2521 = vmul.f32 0.5, %v2520
        %v2522 = vsub.f32 1.5, %v2521
        %v2523 = vmul.f32 %v2518, %v2522
        %vm2524 = vweird.f32 %v2507
        %vm2525 = vweird.f32 %v2518
        %vm2526 = vmor %vm2524, %vm2525
        %v2527 = vsel %vm2526, %v2518, %v2523
        %v2528 = vmul.f32 %v2494, %v2517
        %v2529 = vmul.f32 %v2495, %v2527
        %v2531 = vperm.slane %v2484, 0
        %v2533 = vmul.f32 %v2528, %v2531
        %v2534 = vmul.f32 %v2529, %v2531
        %v2536 = vperm.slane %v2485, 0
        %v2538 = vadd.f32 %v2533, %v2536
        %v2539 = vadd.f32 %v2534, %v2536
        %v2540 = vpack.c.bf16 %v2539, %v2538
        %v2541 = vld [vmem:[%s770] sm:$0xf]
        %v2542 = vld [vmem:[%s770 + $0x4] sm:$0xf]
        %v2543 = vld [vmem:[%s770 + $0x8] sm:$0xf]
        %v2544 = vld [vmem:[%s770 + $0xc] sm:$0xf]
        %v2545 = vld [vmem:[%s773] sm:$0x1]
        %v2547 = vperm.slane %v2545, 0
        %v2553 = vunpack.c.l.b16 %v2541
        %v2554 = vunpack.c.l.b16 %v2542
        %v2555 = vunpack.c.l.b16 %v2543
        %v2556 = vunpack.c.l.b16 %v2544
        %v2557 = vpack.c.b16 %v2554, %v2553
        %v2558 = vpack.c.b16 %v2556, %v2555
        %v2562 = vsel %vm797, %v2540, 0
        %2564 = vmatpush.bf16.msra.mxu0 0
        %2565 = vmatpush.bf16.msra.mxu0 0
        %2566 = vmatpush.bf16.msra.mxu0 0
        %2567 = vmatpush.bf16.msra.mxu0 0
        %2568 = vmatpush.bf16.msra.mxu0 0
        %2569 = vmatpush.bf16.msra.mxu0 0
        %2570 = vmatpush.bf16.msra.mxu0 %v2558
        %2571 = vmatpush.bf16.msra.mxu0 %v2557
        %2572 = vmatmul.bf16.gmra.mxu0 %v2562
        %v2573 = vpop.f32.mrf.mxu0
        %v2574 = vadd.f32 %v2547, %v2573
        %v2575 = vpop.f32.mrf.mxu0
        %v2576 = vadd.f32 %v2547, %v2575
        %2577 = vdwg.mxu0
        %v2578 = vmax.f32 %v2574, 0.0
        %v2579 = vmax.f32 %v2576, 0.0
        %v2580 = vpack.c.bf16 %v2579, %v2578
        %v2581 = vld [vmem:[%s778] sm:$0xf]
        %v2582 = vld [vmem:[%s778 + $0x4] sm:$0xf]
        %v2583 = vld [vmem:[%s778 + $0x8] sm:$0xf]
        %v2584 = vld [vmem:[%s778 + $0xc] sm:$0xf]
        %v2585 = vld [vmem:[%s778 + $0x10] sm:$0xf]
        %v2586 = vld [vmem:[%s778 + $0x14] sm:$0xf]
        %v2587 = vld [vmem:[%s778 + $0x18] sm:$0xf]
        %v2588 = vld [vmem:[%s778 + $0x1c] sm:$0xf]
        %v2589 = vld [vmem:[%s778 + $0x20] sm:$0xf]
        %v2590 = vld [vmem:[%s778 + $0x24] sm:$0xf]
        %v2591 = vld [vmem:[%s778 + $0x28] sm:$0xf]
        %v2592 = vld [vmem:[%s778 + $0x2c] sm:$0xf]
        %v2593 = vld [vmem:[%s778 + $0x30] sm:$0xf]
        %v2594 = vld [vmem:[%s778 + $0x34] sm:$0xf]
        %v2595 = vld [vmem:[%s778 + $0x38] sm:$0xf]
        %v2596 = vld [vmem:[%s778 + $0x3c] sm:$0xf]
        %v2597 = vld [vmem:[%s781] sm:$0x1]
        %v2599 = vperm.slane %v2597, 0
        %v2617 = vunpack.c.l.b16 %v2581
        %v2618 = vunpack.c.l.b16 %v2582
        %v2619 = vunpack.c.l.b16 %v2583
        %v2620 = vunpack.c.l.b16 %v2584
        %v2621 = vunpack.c.l.b16 %v2585
        %v2622 = vunpack.c.l.b16 %v2586
        %v2623 = vunpack.c.l.b16 %v2587
        %v2624 = vunpack.c.l.b16 %v2588
        %v2625 = vunpack.c.l.b16 %v2589
        %v2626 = vunpack.c.l.b16 %v2590
        %v2627 = vunpack.c.l.b16 %v2591
        %v2628 = vunpack.c.l.b16 %v2592
        %v2629 = vunpack.c.l.b16 %v2593
        %v2630 = vunpack.c.l.b16 %v2594
        %v2631 = vunpack.c.l.b16 %v2595
        %v2632 = vunpack.c.l.b16 %v2596
        %v2633 = vpack.c.b16 %v2618, %v2617
        %v2634 = vpack.c.b16 %v2620, %v2619
        %v2635 = vpack.c.b16 %v2622, %v2621
        %v2636 = vpack.c.b16 %v2624, %v2623
        %v2637 = vpack.c.b16 %v2626, %v2625
        %v2638 = vpack.c.b16 %v2628, %v2627
        %v2639 = vpack.c.b16 %v2630, %v2629
        %v2640 = vpack.c.b16 %v2632, %v2631
        %2649 = vmatpush.bf16.msra.mxu0 %v2640
        %2650 = vmatpush.bf16.msra.mxu0 %v2639
        %2651 = vmatpush.bf16.msra.mxu0 %v2638
        %2652 = vmatpush.bf16.msra.mxu0 %v2637
        %2653 = vmatpush.bf16.msra.mxu0 %v2636
        %2654 = vmatpush.bf16.msra.mxu0 %v2635
        %2655 = vmatpush.bf16.msra.mxu0 %v2634
        %2656 = vmatpush.bf16.msra.mxu0 %v2633
        %2657 = vmatmul.bf16.gmra.mxu0 %v2580
        %v2658 = vpop.f32.mrf.mxu0
        %v2659 = vadd.f32 %v2599, %v2658
        %v2660 = vpop.f32.mrf.mxu0
        %v2661 = vadd.f32 %v2599, %v2660
        %2662 = vdwg.mxu0
        %v2663 = vadd.f32 %v2659, %v2482
        %v2664 = vadd.f32 %v2661, %v2483
        %p2665 = scmp.lt.s32.totalorder %s34, 1
        // Predicated region
        $region93: #{transformer_encoder_forward.1} parent=87 // pred_check
          %p2666 = pneg %p2665
        $region94: #{transformer_encoder_forward.1} parent=87 // pred_check_branch
          %2668 = sbr.rel (%p2666) target = $region96
        $region95: #{transformer_encoder_forward.1} parent=87 // pred_region
          %2669 = vst.msk [vmem:[#allocation3] sm:$0xff] %vm797, %v2663
          %2670 = vst.msk [vmem:[#allocation3 + $0x8] sm:$0xff] %vm797, %v2664
        $region96: #{transformer_encoder_forward.1} parent=87 // pred_fallthru
          _
        %p2671 = scmp.eq.s32.totalorder %s34, 1
        // Predicated region
        $region97: #{transformer_encoder_forward.1} parent=87 // pred_check
          %p2672 = pneg %p2671
        $region98: #{transformer_encoder_forward.1} parent=87 // pred_check_branch
          %2674 = sbr.rel (%p2672) target = $region100
        $region99: #{transformer_encoder_forward.1} parent=87 // pred_region
          %v2675 = vld [vmem:[%s15] sm:$0x1]
          %v2676 = vld [vmem:[%s16] sm:$0x1]
          %v2677 = vsel %vm797, %v2663, 0.0
          %2678 = vadd.xlane.f32.xlu0 %v2677
          %v2679 = vpop.xlane.xlu0 %2678
          %v2680 = vsel %vm797, %v2664, 0.0
          %2681 = vadd.xlane.f32.xlu0 %v2680
          %v2682 = vpop.xlane.xlu0 %2681
          %v2683 = vmul.f32 %v2679, %v810
          %v2684 = vmul.f32 %v2682, %v810
          %v2685 = vsub.f32 %v2663, %v2683
          %v2686 = vsub.f32 %v2664, %v2684
          %v2687 = vmul.f32 %v2685, %v2685
          %v2688 = vmul.f32 %v2686, %v2686
          %v2689 = vsel %vm797, %v2687, 0.0
          %2690 = vadd.xlane.f32.xlu0 %v2689
          %v2691 = vpop.xlane.xlu0 %2690
          %v2692 = vsel %vm797, %v2688, 0.0
          %2693 = vadd.xlane.f32.xlu0 %v2692
          %v2694 = vpop.xlane.xlu0 %2693
          %v2695 = vmul.f32 %v2691, %v810
          %v2696 = vmul.f32 %v2694, %v810
          %v2697 = vadd.f32 %v2695, 1e-05
          %v2698 = vadd.f32 %v2696, 1e-05
          %v2699 = vrsqrt.pop %v2697
          %v2700 = vmul.f32 %v2699, %v2697
          %v2701 = vmul.f32 %v2700, %v2699
          %v2702 = vmul.f32 0.5, %v2701
          %v2703 = vsub.f32 1.5, %v2702
          %v2704 = vmul.f32 %v2699, %v2703
          %vm2705 = vweird.f32 %v2697
          %vm2706 = vweird.f32 %v2699
          %vm2707 = vmor %vm2705, %vm2706
          %v2708 = vsel %vm2707, %v2699, %v2704
          %v2709 = vrsqrt.pop %v2698
          %v2710 = vmul.f32 %v2709, %v2698
          %v2711 = vmul.f32 %v2710, %v2709
          %v2712 = vmul.f32 0.5, %v2711
          %v2713 = vsub.f32 1.5, %v2712
          %v2714 = vmul.f32 %v2709, %v2713
          %vm2715 = vweird.f32 %v2698
          %vm2716 = vweird.f32 %v2709
          %vm2717 = vmor %vm2715, %vm2716
          %v2718 = vsel %vm2717, %v2709, %v2714
          %v2719 = vmul.f32 %v2685, %v2708
          %v2720 = vmul.f32 %v2686, %v2718
          %v2722 = vperm.slane %v2675, 0
          %v2724 = vmul.f32 %v2719, %v2722
          %v2725 = vmul.f32 %v2720, %v2722
          %v2727 = vperm.slane %v2676, 0
          %v2729 = vadd.f32 %v2724, %v2727
          %v2730 = vadd.f32 %v2725, %v2727
          %2731 = vst.msk [vmem:[#allocation3] sm:$0xff] %vm797, %v2729
          %2732 = vst.msk [vmem:[#allocation3 + $0x8] sm:$0xff] %vm797, %v2730
        $region100: #{transformer_encoder_forward.1} parent=87 // pred_fallthru
          _
        // Predicated region
        $region101: #{transformer_encoder_forward.1} parent=87 // pred_check
          %p2733 = pneg %p491
        $region102: #{transformer_encoder_forward.1} parent=87 // pred_check_branch
          %2735 = sbr.rel (%p2733) target = $region104
        $region103: #{transformer_encoder_forward.1} parent=87 // pred_region
          %s2736 = smul.u32 2, %s33
          %2738 = vsyncadd [#allocation4], 0
          %s2739 = smul.addr %s2736, 8
          %s2740 = scalar_lea.hbm %s17, %s2739
          %s2741 = sshll.u32 [#allocation3], 4
          %s2742 = int_to_ptr.vmem [resolvable:$true] %s2741
          %s2743 = sshll.u32 %s2740, 4
          %s2744 = int_to_ptr.hbm [resolvable:$true] %s2743
          %2749 = dma.vmem_to_hbm [thread:$0]  %s2742, 256, %s2744, [#allocation4], 128, 128, 8
        $region104: #{transformer_encoder_forward.1} parent=87 // pred_fallthru
          _
        // Predicated region
        $region105: #{transformer_encoder_forward.1} parent=87 // pred_check
          %p2750 = pneg %p491
        $region106: #{transformer_encoder_forward.1} parent=87 // pred_check_branch
          %2752 = sbr.rel (%p2750) target = $region108
        $region107: #{transformer_encoder_forward.1} parent=87 // pred_region
          %2754 = dma.done [#allocation4], 256
        $region108: #{transformer_encoder_forward.1} parent=87 // pred_fallthru
          _
      $region88: #{transformer_encoder_forward.1} parent=5 // pred_fallthru
        _
      %p2755 = scmp.le.s32.totalorder 2, %s24
      // Predicated region
      $region109: #{transformer_encoder_forward.1} parent=5 // pred_check
        %p2756 = pneg %p2755
      $region110: #{transformer_encoder_forward.1} parent=5 // pred_check_branch
        %2758 = sbr.rel (%p2756) target = $region112
      $region111: #{transformer_encoder_forward.1} parent=5 // pred_region
        %s2759 = ssub.s32 %s24, 2
      $region112: #{transformer_encoder_forward.1} parent=5 // pred_fallthru
        _
    $region6: #{transformer_encoder_forward.1} parent=1 // loop_footer
      %s28 = sadd.s32 1, %s24
    $region7: #{transformer_encoder_forward.1} parent=1 // loop_footer_branch
      %23 = sbr.rel target = $region3
    $region8: #{transformer_encoder_forward.1} parent=1 // loop_exit
      _
    %2760 = vsyncpa [#allocation4], 1
    %s2761 = scalar_lea.sflag [#allocation4], 1
    %2762 = vsyncpa %s2761, 1

</llo_original>
